<compile_context>
chip_gen: v7x
topology: tpu7x:2x2x1
jax: 0.10.0
libtpu: 0.0.40
codegen_flags: <defaults>
</compile_context>

<pallas_src>
import numpy as np
import jax
import jax.numpy as jnp
from jax.experimental import pallas as pl
from jax.experimental.pallas import tpu as pltpu

TILE = 256            # destination-row tile
NUM_CLASSES = 2
SAGE_OUT = 128
HEAD_LANES = 128      # padded lane width of the MLP head (kept full for the MXU)


def _round_up(x, m):
    return -(-x // m) * m


def _edge_chunk_for_device():
    """MXU contraction depth for the sel@xm matmul: 128 on v5e, 256 otherwise."""
    try:
        kind = jax.devices()[0].device_kind.lower()
    except Exception:
        return 256
    if "v5 lite" in kind or "v5e" in kind or "v5litepod" in kind:
        return 128
    return 256


def _build_chunk_table(dst_sorted_padded, num_row_tiles, chunk):
    """Per destination-row tile: list of sorted-edge chunks that touch it."""
    C = dst_sorted_padded.shape[0] // chunk
    per_tile = [[] for _ in range(num_row_tiles)]
    for k in range(C):
        seg = dst_sorted_padded[k * chunk:(k + 1) * chunk]
        seg = seg[seg >= 0]                      # drop -1 padding
        if seg.size == 0:
            continue
        for t in np.unique(seg // TILE):
            t = int(t)
            if t < num_row_tiles:
                per_tile[t].append(k)
    max_chunks = max(1, max(len(lst) for lst in per_tile))
    tbl = np.zeros((num_row_tiles, max_chunks), np.int32)
    cnt = np.zeros((num_row_tiles,), np.int32)
    for i, lst in enumerate(per_tile):
        cnt[i] = len(lst)
        if lst:
            tbl[i, :len(lst)] = lst
            tbl[i, len(lst):] = lst[-1]          # repeat last -> padded steps reuse the DMA'd block
    return tbl.reshape(-1), cnt, max_chunks


def hogn_pallas(xe, xm, dst, tbl, cnt, padded_params, *, chunk, max_chunks):
    E_rows, F = xe.shape
    F_w = xm.shape[1]                            # F + 1 (trailing ones column)
    R = E_rows // TILE
    wl, bl, wr, w1, b1, w2, b2, w3, b3 = padded_params

    def kernel(tbl_ref, cnt_ref,                                  # SMEM prefetch
               xe_ref, xm_ref, dst_ref,
               wl_ref, bl_ref, wr_ref,
               w1_ref, b1_ref, w2_ref, b2_ref, w3_ref, b3_ref,
               out_ref, acc_ref):
        i = pl.program_id(0)            # destination-row tile (parallel)
        j = pl.program_id(1)            # active-chunk slot (arbitrary, last axis)
        nj = pl.num_programs(1)
        row0 = i * TILE

        @pl.when(j == 0)
        def _():
            acc_ref[...] = jnp.zeros_like(acc_ref)

        # ---- segment-sum of messages (degree rides in the ones column) ----
        @pl.when(j < cnt_ref[i])
        def _():
            d = dst_ref[...] - row0                                   # [1, CHUNK] int32
            rows = jax.lax.broadcasted_iota(jnp.int32, (TILE, chunk), 0)
            sel = (rows == d).astype(jnp.bfloat16)                    # [TILE, CHUNK]
            acc_ref[...] += jnp.dot(sel, xm_ref[...],
                                    preferred_element_type=jnp.float32)

        # ---- finalize: SAGE linears + MLP head + log_softmax ---------------
        @pl.when(j == nj - 1)
        def _():
            acc = acc_ref[...]                                        # [TILE, F+1] f32
            deg = acc[:, -1:]                                         # in-degree
            inv = 1.0 / jnp.maximum(deg, 1.0)                         # exact reciprocal
            agg = (acc * inv).astype(jnp.bfloat16)                    # ones col hits a zero wl row

            h = jnp.dot(agg, wl_ref[...], preferred_element_type=jnp.float32)
            h = h + bl_ref[...]
            h = h + jnp.dot(xe_ref[...], wr_ref[...],
                            preferred_element_type=jnp.float32)
            h = jnp.maximum(h, 0.0)
            h = jnp.maximum(
                jnp.dot(h.astype(jnp.bfloat16), w1_ref[...],
                        preferred_element_type=jnp.float32) + b1_ref[...], 0.0)
            h = jnp.maximum(
                jnp.dot(h.astype(jnp.bfloat16), w2_ref[...],
                        preferred_element_type=jnp.float32) + b2_ref[...], 0.0)
            logits = jnp.dot(h.astype(jnp.bfloat16), w3_ref[...],
                             preferred_element_type=jnp.float32) + b3_ref[...]  # [TILE, 128]

            # log_softmax over the real NUM_CLASSES lanes only (rest is padding).
            lane = jax.lax.broadcasted_iota(jnp.int32, logits.shape, 1)
            valid = lane < NUM_CLASSES
            masked = jnp.where(valid, logits, -1e30)
            mx = jnp.max(masked, axis=-1, keepdims=True)
            p = jnp.where(valid, jnp.exp(masked - mx), 0.0)
            lse = mx + jnp.log(jnp.sum(p, axis=-1, keepdims=True))
            out_ref[...] = (masked - lse)[:, :NUM_CLASSES]            # narrow f32 store

    full = lambda i, j, tref, cref: (0, 0)       # resident weight/bias blocks
    in_specs = [
        pl.BlockSpec((TILE, F), lambda i, j, tref, cref: (i, 0)),          # xe (dest rows)
        pl.BlockSpec((chunk, F_w),
                     lambda i, j, tref, cref: (tref[i * max_chunks + j], 0)),   # xm chunk
        pl.BlockSpec((1, chunk),
                     lambda i, j, tref, cref: (0, tref[i * max_chunks + j])),   # dst chunk
        pl.BlockSpec(wl.shape, full), pl.BlockSpec(bl.shape, full),
        pl.BlockSpec(wr.shape, full),
        pl.BlockSpec(w1.shape, full), pl.BlockSpec(b1.shape, full),
        pl.BlockSpec(w2.shape, full), pl.BlockSpec(b2.shape, full),
        pl.BlockSpec(w3.shape, full), pl.BlockSpec(b3.shape, full),
    ]

    grid_spec = pltpu.PrefetchScalarGridSpec(
        num_scalar_prefetch=2,
        grid=(R, max_chunks),
        in_specs=in_specs,
        out_specs=pl.BlockSpec((TILE, NUM_CLASSES), lambda i, j, tref, cref: (i, 0)),
        scratch_shapes=[pltpu.VMEM((TILE, F_w), jnp.float32)],   # segment-sum (+degree) acc
    )

    return pl.pallas_call(
        kernel,
        out_shape=jax.ShapeDtypeStruct((E_rows, NUM_CLASSES), jnp.float32),
        grid_spec=grid_spec,
        compiler_params=pltpu.CompilerParams(
            dimension_semantics=("parallel", "arbitrary"),
            vmem_limit_bytes=32 * 1024 * 1024),
    )(tbl, cnt, xe, xm, dst, wl, bl, wr, w1, b1, w2, b2, w3, b3)


def init_params(key, feature_dim):
    ks = jax.random.split(key, 5)

    def lin(k, fi, fo, scale=0.1):
        return scale * jax.random.normal(k, (fi, fo), jnp.float32)

    return dict(
        # SAGEConv(feature_dim, 128): lin_l (with bias), lin_r (no bias)
        wl=lin(ks[0], feature_dim, SAGE_OUT),
        bl=0.01 * jnp.ones((1, SAGE_OUT), jnp.float32),
        wr=lin(ks[1], feature_dim, SAGE_OUT),
        # lin1/lin2/lin3
        w1=lin(ks[2], 128, 64), b1=0.01 * jnp.ones((1, 64), jnp.float32),
        w2=lin(ks[3], 64, 32), b2=0.01 * jnp.ones((1, 32), jnp.float32),
        w3=lin(ks[4], 32, 2),  b3=jnp.zeros((1, 2), jnp.float32),
    )


def _pad_params(params, feature_dim):
    """bf16 MXU operands, f32 biases; zero padding is exact."""
    def pad_w(w, rows, cols):
        return jnp.pad(w, ((0, rows - w.shape[0]), (0, cols - w.shape[1]))
                       ).astype(jnp.bfloat16)

    def pad_b(b, cols):
        return jnp.pad(b, ((0, 0), (0, cols - b.shape[1]))).astype(jnp.float32)

    # wl gets one extra zero row so the appended ones column of xm (which
    # carries the in-degree) contributes nothing to the SAGE linear.
    wl = pad_w(params["wl"], feature_dim + 1, SAGE_OUT)
    bl = params["bl"].astype(jnp.float32)
    wr = params["wr"].astype(jnp.bfloat16)
    w1 = pad_w(params["w1"], SAGE_OUT, HEAD_LANES);    b1 = pad_b(params["b1"], HEAD_LANES)
    w2 = pad_w(params["w2"], HEAD_LANES, HEAD_LANES);  b2 = pad_b(params["b2"], HEAD_LANES)
    w3 = pad_w(params["w3"], HEAD_LANES, HEAD_LANES);  b3 = pad_b(params["b3"], HEAD_LANES)
    return (wl, bl, wr, w1, b1, w2, b2, w3, b3)


def _build_edge_index(all_edges, opt, key):
    # every other edge (i % 2 == 0), transposed -> [2, E_pos]
    edges_np = np.array([list(all_edges[i]) for i in range(len(all_edges)) if i % 2 == 0],
                        dtype=np.int64).T
    edges = jnp.asarray(edges_np, dtype=jnp.int32)
    e_pos = edges.shape[1]
    num_nodes = opt["number_rna"] + opt["number_protein"]

    # TODO(synk): torch_geometric.utils.negative_sampling rejects existing edges
    # and enforces force_undirected; here we do deterministic uniform pair sampling.
    k1, k2 = jax.random.split(key)
    neg_edges = jnp.stack([
        jax.random.randint(k1, (e_pos,), 0, num_nodes, dtype=jnp.int32),
        jax.random.randint(k2, (e_pos,), 0, num_nodes, dtype=jnp.int32)])
    return jnp.concatenate([edges, neg_edges], axis=-1), e_pos


def hogn_forward(params, rna_f, protein_f, all_edges, opt, key):
    n_fea = jnp.concatenate([rna_f, protein_f], axis=0)
    edge_index, e_pos = _build_edge_index(all_edges, opt, key)
    E = edge_index.shape[1]
    F = n_fea.shape[1]
    src, dst = edge_index[0], edge_index[1]

    # Per-edge pair features and SAGE "message" rows (data-dependent gathers
    # stay as wrapper glue; all dense math runs in the kernel).
    x = jnp.take(n_fea, src, axis=0) * jnp.take(n_fea, dst, axis=0)   # [E, F] f32
    xm = jnp.take(x, src, axis=0)     # x[src[e]]: SAGEConv treats x's E rows as nodes

    # Sort messages by destination (host side) and build the per-tile table of
    # chunks that can actually touch each destination-row tile.
    dst_np = np.asarray(jax.device_get(dst))
    order_np = np.argsort(dst_np, kind="stable")
    dst_s_np = dst_np[order_np].astype(np.int32)
    xm_s = jnp.take(xm, jnp.asarray(order_np, dtype=jnp.int32), axis=0)

    chunk = _edge_chunk_for_device()
    E_rows = _round_up(E, TILE)       # destination rows / output padding
    E_msg = _round_up(E, chunk)       # sorted-message padding

    xe_p = jnp.pad(x, ((0, E_rows - E), (0, 0))).astype(jnp.bfloat16)
    # Append a ones column so sel @ xm yields the in-degree as its last column.
    xm_aug = jnp.concatenate([xm_s, jnp.ones((E, 1), xm_s.dtype)], axis=1)
    xm_p = jnp.pad(xm_aug, ((0, E_msg - E), (0, 0))).astype(jnp.bfloat16)
    dst_p_np = np.full((E_msg,), -1, np.int32)    # -1 never matches a real row
    dst_p_np[:E] = dst_s_np

    tbl_np, cnt_np, max_chunks = _build_chunk_table(dst_p_np, E_rows // TILE, chunk)

    out = hogn_pallas(
        xe_p, xm_p, jnp.asarray(dst_p_np).reshape(1, E_msg),
        jnp.asarray(tbl_np), jnp.asarray(cnt_np),
        _pad_params(params, F), chunk=chunk, max_chunks=max_chunks)
    prob = out[:E]

    # get_link_labels
    labels = jnp.concatenate([jnp.ones((e_pos,), jnp.float32),
                              jnp.zeros((E - e_pos,), jnp.float32)])
    return prob, labels.astype(jnp.int32)


def hogn_reference(params, rna_f, protein_f, edge_index):
    """Pure-JAX f32 reference of the same forward (for correctness check)."""
    n_fea = jnp.concatenate([rna_f, protein_f], axis=0)
    src, dst = edge_index[0], edge_index[1]
    E = src.shape[0]
    x = n_fea[src] * n_fea[dst]
    xm = x[src]
    agg = jnp.zeros_like(x).at[dst].add(xm)
    cnt = jnp.zeros((E, 1), jnp.float32).at[dst].add(1.0)
    agg = agg / jnp.maximum(cnt, 1.0)
    h = agg @ params["wl"] + params["bl"] + x @ params["wr"]
    h = jnp.maximum(h, 0.0)
    h = jnp.maximum(h @ params["w1"] + params["b1"], 0.0)
    h = jnp.maximum(h @ params["w2"] + params["b2"], 0.0)
    logits = h @ params["w3"] + params["b3"]
    return jax.nn.log_softmax(logits, axis=-1)


if __name__ == "__main__":
    opt = {"feature_dim": 32, "number_rna": 16, "number_protein": 16}

    key = jax.random.PRNGKey(0)
    kr, kp, kparam, kneg = jax.random.split(key, 4)

    rna_f = jax.random.normal(kr, (opt["number_rna"], opt["feature_dim"]), jnp.float32)
    protein_f = jax.random.normal(kp, (opt["number_protein"], opt["feature_dim"]), jnp.float32)

    # 512 (rna, protein) node-index pairs; the model keeps even indices ->
    # 256 positive + 256 negative edges = 512 edges (2 row tiles).
    all_edges = [(i % opt["number_rna"],
                  opt["number_rna"] + ((i * 7 + 3) % opt["number_protein"]))
                 for i in range(512)]

    params = init_params(kparam, opt["feature_dim"])

    prob, labels = hogn_forward(params, rna_f, protein_f, all_edges, opt, kneg)
    jax.block_until_ready((prob, labels))

    E = 2 * (len(all_edges) // 2)
    assert prob.shape == (E, 2), prob.shape
    assert labels.shape == (E,), labels.shape
    assert bool(jnp.all(jnp.isfinite(prob)))
    # rows of log_softmax must exponentiate-sum to ~1
    assert bool(jnp.allclose(jnp.sum(jnp.exp(prob), axis=-1), 1.0, atol=1e-4))

    # compare against a pure-JAX f32 reference (kernel uses bf16 MXU operands)
    edge_index, _ = _build_edge_index(all_edges, opt, kneg)
    ref = hogn_reference(params, rna_f, protein_f, edge_index)
    assert bool(jnp.allclose(prob, ref, atol=7e-2, rtol=7e-2)), \
        float(jnp.max(jnp.abs(prob - ref)))

    print("KERNEL_OK")
</pallas_src>

<mosaic_0001>
module attributes {stable_mosaic.version = 11 : i64} {
  func.func @kernel(%arg0: i32, %arg1: i32, %arg2: memref<4xi32, #tpu.memory_space<smem>>, %arg3: memref<2xi32, #tpu.memory_space<smem>>, %arg4: memref<256x32xbf16, #tpu.memory_space<vmem>>, %arg5: memref<256x33xbf16, #tpu.memory_space<vmem>>, %arg6: memref<1x256xi32, #tpu.memory_space<vmem>>, %arg7: memref<33x128xbf16, #tpu.memory_space<vmem>>, %arg8: memref<1x128xf32, #tpu.memory_space<vmem>>, %arg9: memref<32x128xbf16, #tpu.memory_space<vmem>>, %arg10: memref<128x128xbf16, #tpu.memory_space<vmem>>, %arg11: memref<1x128xf32, #tpu.memory_space<vmem>>, %arg12: memref<128x128xbf16, #tpu.memory_space<vmem>>, %arg13: memref<1x128xf32, #tpu.memory_space<vmem>>, %arg14: memref<128x128xbf16, #tpu.memory_space<vmem>>, %arg15: memref<1x128xf32, #tpu.memory_space<vmem>>, %arg16: memref<256x2xf32, #tpu.memory_space<vmem>>, %arg17: memref<256x33xf32, #tpu.memory_space<vmem>>) attributes {dimension_semantics = [#tpu.dimension_semantics<parallel>, #tpu.dimension_semantics<arbitrary>], iteration_bounds = array<i64: 2, 2>, scalar_prefetch = 2 : i64, scratch_operands = 1 : i64, tpu.core_type = #tpu.core_type<tc>, window_params = [{transform_indices = @transform_0, window_bounds = array<i64: 256, 32>}, {transform_indices = @transform_1, window_bounds = array<i64: 256, 33>}, {transform_indices = @transform_2, window_bounds = array<i64: 1, 256>}, {pipeline_mode = #tpu.pipeline_mode<synchronous>, transform_indices = @transform_3, window_bounds = array<i64: 33, 128>}, {pipeline_mode = #tpu.pipeline_mode<synchronous>, transform_indices = @transform_4, window_bounds = array<i64: 1, 128>}, {pipeline_mode = #tpu.pipeline_mode<synchronous>, transform_indices = @transform_5, window_bounds = array<i64: 32, 128>}, {pipeline_mode = #tpu.pipeline_mode<synchronous>, transform_indices = @transform_6, window_bounds = array<i64: 128, 128>}, {pipeline_mode = #tpu.pipeline_mode<synchronous>, transform_indices = @transform_7, window_bounds = array<i64: 1, 128>}, {pipeline_mode = #tpu.pipeline_mode<synchronous>, transform_indices = @transform_8, window_bounds = array<i64: 128, 128>}, {pipeline_mode = #tpu.pipeline_mode<synchronous>, transform_indices = @transform_9, window_bounds = array<i64: 1, 128>}, {pipeline_mode = #tpu.pipeline_mode<synchronous>, transform_indices = @transform_10, window_bounds = array<i64: 128, 128>}, {pipeline_mode = #tpu.pipeline_mode<synchronous>, transform_indices = @transform_11, window_bounds = array<i64: 1, 128>}, {transform_indices = @transform_12, window_bounds = array<i64: 256, 2>}]} {
    %c256_i32 = arith.constant 256 : i32
    %0 = arith.muli %arg0, %c256_i32 : i32
    %c0_i32 = arith.constant 0 : i32
    %1 = arith.cmpi eq, %arg1, %c0_i32 : i32
    %2 = arith.extui %1 : i1 to i32
    %c0_i32_0 = arith.constant 0 : i32
    %3 = arith.cmpi ne, %2, %c0_i32_0 : i32
    scf.if %3 {
      %cst = arith.constant 0.000000e+00 : f32
      %12 = vector.broadcast %cst : f32 to vector<256x33xf32>
      %c0 = arith.constant 0 : index
      %c0_3 = arith.constant 0 : index
      %13 = vector.load %arg17[%c0, %c0_3] : memref<256x33xf32, #tpu.memory_space<vmem>>, vector<256x33xf32>
      tpu.vector_store %arg17[%c0, %c0_3], %12 {strides = array<i32>} : memref<256x33xf32, #tpu.memory_space<vmem>>, vector<256x33xf32>,
    } else {
    }
    %4 = arith.index_cast %arg0 : i32 to index
    %5 = memref.load %arg3[%4] : memref<2xi32, #tpu.memory_space<smem>>
    %6 = arith.cmpi slt, %arg1, %5 : i32
    %7 = arith.extui %6 : i1 to i32
    %c0_i32_1 = arith.constant 0 : i32
    %8 = arith.cmpi ne, %7, %c0_i32_1 : i32
    scf.if %8 {
      %c0 = arith.constant 0 : index
      %c0_3 = arith.constant 0 : index
      %12 = vector.load %arg6[%c0, %c0_3] : memref<1x256xi32, #tpu.memory_space<vmem>>, vector<1x256xi32>
      %13 = vector.broadcast %0 : i32 to vector<1x256xi32>
      %14 = arith.subi %12, %13 : vector<1x256xi32>
      %15 = tpu.iota {dimensions = array<i32: 0>} : vector<256x256xi32>
      %16 = vector.broadcast %14 : vector<1x256xi32> to vector<256x256xi32>
      %17 = arith.cmpi eq, %15, %16 : vector<256x256xi32>
      %18 = arith.extui %17 : vector<256x256xi1> to vector<256x256xi32>
      %19 = arith.sitofp %18 : vector<256x256xi32> to vector<256x256xf32>
      %20 = arith.truncf %19 : vector<256x256xf32> to vector<256x256xbf16>
      %c0_4 = arith.constant 0 : index
      %c0_5 = arith.constant 0 : index
      %21 = vector.load %arg17[%c0_4, %c0_5] : memref<256x33xf32, #tpu.memory_space<vmem>>, vector<256x33xf32>
      %c0_6 = arith.constant 0 : index
      %c0_7 = arith.constant 0 : index
      %22 = vector.load %arg5[%c0_6, %c0_7] : memref<256x33xbf16, #tpu.memory_space<vmem>>, vector<256x33xbf16>
      %cst = arith.constant dense<0.000000e+00> : vector<256x33xf32>
      %23 = tpu.matmul %20, %22, %cst {dimension_numbers = #tpu.dot_dimension_numbers<[1], [0], [0], [1], [0, 0, 1, 1], [], []>} : vector<256x256xbf16>, vector<256x33xbf16>, vector<256x33xf32> -> vector<256x33xf32>
      %24 = arith.addf %21, %23 : vector<256x33xf32>
      %c0_8 = arith.constant 0 : index
      %c0_9 = arith.constant 0 : index
      %25 = vector.load %arg17[%c0_8, %c0_9] : memref<256x33xf32, #tpu.memory_space<vmem>>, vector<256x33xf32>
      tpu.vector_store %arg17[%c0_8, %c0_9], %24 {strides = array<i32>} : memref<256x33xf32, #tpu.memory_space<vmem>>, vector<256x33xf32>,
    } else {
    }
    %c1_i32 = arith.constant 1 : i32
    %9 = arith.cmpi eq, %arg1, %c1_i32 : i32
    %10 = arith.extui %9 : i1 to i32
    %c0_i32_2 = arith.constant 0 : i32
    %11 = arith.cmpi ne, %10, %c0_i32_2 : i32
    scf.if %11 {
      %c0 = arith.constant 0 : index
      %c0_3 = arith.constant 0 : index
      %12 = vector.load %arg17[%c0, %c0_3] : memref<256x33xf32, #tpu.memory_space<vmem>>, vector<256x33xf32>
      %13 = vector.extract_strided_slice %12 {offsets = [0, 32], sizes = [256, 1], strides = [1, 1]} : vector<256x33xf32> to vector<256x1xf32>
      %cst = arith.constant 1.000000e+00 : f32
      %14 = vector.broadcast %cst : f32 to vector<256x1xf32>
      %15 = arith.maximumf %13, %14 : vector<256x1xf32>
      %cst_4 = arith.constant 1.000000e+00 : f32
      %16 = vector.broadcast %cst_4 : f32 to vector<256x1xf32>
      %17 = arith.divf %16, %15 : vector<256x1xf32>
      %18 = vector.broadcast %17 : vector<256x1xf32> to vector<256x33xf32>
      %19 = arith.mulf %12, %18 : vector<256x33xf32>
      %20 = arith.truncf %19 : vector<256x33xf32> to vector<256x33xbf16>
      %c0_5 = arith.constant 0 : index
      %c0_6 = arith.constant 0 : index
      %21 = vector.load %arg7[%c0_5, %c0_6] : memref<33x128xbf16, #tpu.memory_space<vmem>>, vector<33x128xbf16>
      %cst_7 = arith.constant dense<0.000000e+00> : vector<256x128xf32>
      %22 = tpu.matmul %20, %21, %cst_7 {dimension_numbers = #tpu.dot_dimension_numbers<[1], [0], [0], [1], [0, 0, 1, 1], [], []>} : vector<256x33xbf16>, vector<33x128xbf16>, vector<256x128xf32> -> vector<256x128xf32>
      %c0_8 = arith.constant 0 : index
      %c0_9 = arith.constant 0 : index
      %23 = vector.load %arg8[%c0_8, %c0_9] : memref<1x128xf32, #tpu.memory_space<vmem>>, vector<1x128xf32>
      %24 = vector.broadcast %23 : vector<1x128xf32> to vector<256x128xf32>
      %25 = arith.addf %22, %24 : vector<256x128xf32>
      %c0_10 = arith.constant 0 : index
      %c0_11 = arith.constant 0 : index
      %26 = vector.load %arg4[%c0_10, %c0_11] : memref<256x32xbf16, #tpu.memory_space<vmem>>, vector<256x32xbf16>
      %c0_12 = arith.constant 0 : index
      %c0_13 = arith.constant 0 : index
      %27 = vector.load %arg9[%c0_12, %c0_13] : memref<32x128xbf16, #tpu.memory_space<vmem>>, vector<32x128xbf16>
      %cst_14 = arith.constant dense<0.000000e+00> : vector<256x128xf32>
      %28 = tpu.matmul %26, %27, %cst_14 {dimension_numbers = #tpu.dot_dimension_numbers<[1], [0], [0], [1], [0, 0, 1, 1], [], []>} : vector<256x32xbf16>, vector<32x128xbf16>, vector<256x128xf32> -> vector<256x128xf32>
      %29 = arith.addf %25, %28 : vector<256x128xf32>
      %cst_15 = arith.constant 0.000000e+00 : f32
      %30 = vector.broadcast %cst_15 : f32 to vector<256x128xf32>
      %31 = arith.maximumf %29, %30 : vector<256x128xf32>
      %32 = arith.truncf %31 : vector<256x128xf32> to vector<256x128xbf16>
      %c0_16 = arith.constant 0 : index
      %c0_17 = arith.constant 0 : index
      %33 = vector.load %arg10[%c0_16, %c0_17] : memref<128x128xbf16, #tpu.memory_space<vmem>>, vector<128x128xbf16>
      %cst_18 = arith.constant dense<0.000000e+00> : vector<256x128xf32>
      %34 = tpu.matmul %32, %33, %cst_18 {dimension_numbers = #tpu.dot_dimension_numbers<[1], [0], [0], [1], [0, 0, 1, 1], [], []>} : vector<256x128xbf16>, vector<128x128xbf16>, vector<256x128xf32> -> vector<256x128xf32>
      %c0_19 = arith.constant 0 : index
      %c0_20 = arith.constant 0 : index
      %35 = vector.load %arg11[%c0_19, %c0_20] : memref<1x128xf32, #tpu.memory_space<vmem>>, vector<1x128xf32>
      %36 = vector.broadcast %35 : vector<1x128xf32> to vector<256x128xf32>
      %37 = arith.addf %34, %36 : vector<256x128xf32>
      %cst_21 = arith.constant 0.000000e+00 : f32
      %38 = vector.broadcast %cst_21 : f32 to vector<256x128xf32>
      %39 = arith.maximumf %37, %38 : vector<256x128xf32>
      %40 = arith.truncf %39 : vector<256x128xf32> to vector<256x128xbf16>
      %c0_22 = arith.constant 0 : index
      %c0_23 = arith.constant 0 : index
      %41 = vector.load %arg12[%c0_22, %c0_23] : memref<128x128xbf16, #tpu.memory_space<vmem>>, vector<128x128xbf16>
      %cst_24 = arith.constant dense<0.000000e+00> : vector<256x128xf32>
      %42 = tpu.matmul %40, %41, %cst_24 {dimension_numbers = #tpu.dot_dimension_numbers<[1], [0], [0], [1], [0, 0, 1, 1], [], []>} : vector<256x128xbf16>, vector<128x128xbf16>, vector<256x128xf32> -> vector<256x128xf32>
      %c0_25 = arith.constant 0 : index
      %c0_26 = arith.constant 0 : index
      %43 = vector.load %arg13[%c0_25, %c0_26] : memref<1x128xf32, #tpu.memory_space<vmem>>, vector<1x128xf32>
      %44 = vector.broadcast %43 : vector<1x128xf32> to vector<256x128xf32>
      %45 = arith.addf %42, %44 : vector<256x128xf32>
      %cst_27 = arith.constant 0.000000e+00 : f32
      %46 = vector.broadcast %cst_27 : f32 to vector<256x128xf32>
      %47 = arith.maximumf %45, %46 : vector<256x128xf32>
      %48 = arith.truncf %47 : vector<256x128xf32> to vector<256x128xbf16>
      %c0_28 = arith.constant 0 : index
      %c0_29 = arith.constant 0 : index
      %49 = vector.load %arg14[%c0_28, %c0_29] : memref<128x128xbf16, #tpu.memory_space<vmem>>, vector<128x128xbf16>
      %cst_30 = arith.constant dense<0.000000e+00> : vector<256x128xf32>
      %50 = tpu.matmul %48, %49, %cst_30 {dimension_numbers = #tpu.dot_dimension_numbers<[1], [0], [0], [1], [0, 0, 1, 1], [], []>} : vector<256x128xbf16>, vector<128x128xbf16>, vector<256x128xf32> -> vector<256x128xf32>
      %c0_31 = arith.constant 0 : index
      %c0_32 = arith.constant 0 : index
      %51 = vector.load %arg15[%c0_31, %c0_32] : memref<1x128xf32, #tpu.memory_space<vmem>>, vector<1x128xf32>
      %52 = vector.broadcast %51 : vector<1x128xf32> to vector<256x128xf32>
      %53 = arith.addf %50, %52 : vector<256x128xf32>
      %54 = tpu.iota {dimensions = array<i32: 1>} : vector<256x128xi32>
      %c2_i32 = arith.constant 2 : i32
      %55 = vector.broadcast %c2_i32 : i32 to vector<256x128xi32>
      %56 = arith.cmpi slt, %54, %55 : vector<256x128xi32>
      %cst_33 = arith.constant -1.000000e+30 : f32
      %57 = vector.broadcast %cst_33 : f32 to vector<256x128xf32>
      %58 = arith.select %56, %53, %57 : vector<256x128xi1>, vector<256x128xf32>
      %cst_34 = arith.constant dense<0xFF800000> : vector<256xf32>
      %59 = vector.multi_reduction <maximumf>, %58, %cst_34 [1] : vector<256x128xf32> to vector<256xf32>
      %60 = vector.shape_cast %59 : vector<256xf32> to vector<256x1xf32>
      %61 = vector.broadcast %60 : vector<256x1xf32> to vector<256x128xf32>
      %62 = arith.subf %58, %61 : vector<256x128xf32>
      %63 = math.exp %62 : vector<256x128xf32>
      %cst_35 = arith.constant 0.000000e+00 : f32
      %64 = vector.broadcast %cst_35 : f32 to vector<256x128xf32>
      %65 = arith.select %56, %63, %64 : vector<256x128xi1>, vector<256x128xf32>
      %cst_36 = arith.constant dense<0.000000e+00> : vector<256xf32>
      %66 = vector.multi_reduction <add>, %65, %cst_36 [1] : vector<256x128xf32> to vector<256xf32>
      %67 = vector.shape_cast %66 : vector<256xf32> to vector<256x1xf32>
      %68 = math.log %67 : vector<256x1xf32>
      %69 = arith.addf %60, %68 : vector<256x1xf32>
      %70 = vector.broadcast %69 : vector<256x1xf32> to vector<256x128xf32>
      %71 = arith.subf %58, %70 : vector<256x128xf32>
      %72 = vector.extract_strided_slice %71 {offsets = [0, 0], sizes = [256, 2], strides = [1, 1]} : vector<256x128xf32> to vector<256x2xf32>
      %c0_37 = arith.constant 0 : index
      %c0_38 = arith.constant 0 : index
      %73 = vector.load %arg16[%c0_37, %c0_38] : memref<256x2xf32, #tpu.memory_space<vmem>>, vector<256x2xf32>
      tpu.vector_store %arg16[%c0_37, %c0_38], %72 {strides = array<i32>} : memref<256x2xf32, #tpu.memory_space<vmem>>, vector<256x2xf32>,
    } else {
    }
    return
  }
  func.func @transform_0(%arg0: i32, %arg1: i32, %arg2: memref<4xi32, #tpu.memory_space<smem>>, %arg3: memref<2xi32, #tpu.memory_space<smem>>) -> (i32, i32) {
    %c0_i32 = arith.constant 0 : i32
    %c0_i32_0 = arith.constant 0 : i32
    return %arg0, %c0_i32 : i32, i32
  }
  func.func @transform_1(%arg0: i32, %arg1: i32, %arg2: memref<4xi32, #tpu.memory_space<smem>>, %arg3: memref<2xi32, #tpu.memory_space<smem>>) -> (i32, i32) {
    %c2_i32 = arith.constant 2 : i32
    %0 = arith.muli %arg0, %c2_i32 : i32
    %1 = arith.addi %0, %arg1 : i32
    %2 = arith.index_cast %1 : i32 to index
    %3 = memref.load %arg2[%2] : memref<4xi32, #tpu.memory_space<smem>>
    %c0_i32 = arith.constant 0 : i32
    %c0_i32_0 = arith.constant 0 : i32
    return %3, %c0_i32 : i32, i32
  }
  func.func @transform_2(%arg0: i32, %arg1: i32, %arg2: memref<4xi32, #tpu.memory_space<smem>>, %arg3: memref<2xi32, #tpu.memory_space<smem>>) -> (i32, i32) {
    %c2_i32 = arith.constant 2 : i32
    %0 = arith.muli %arg0, %c2_i32 : i32
    %1 = arith.addi %0, %arg1 : i32
    %2 = arith.index_cast %1 : i32 to index
    %3 = memref.load %arg2[%2] : memref<4xi32, #tpu.memory_space<smem>>
    %c0_i32 = arith.constant 0 : i32
    %c0_i32_0 = arith.constant 0 : i32
    return %c0_i32, %3 : i32, i32
  }
  func.func @transform_3(%arg0: i32, %arg1: i32, %arg2: memref<4xi32, #tpu.memory_space<smem>>, %arg3: memref<2xi32, #tpu.memory_space<smem>>) -> (i32, i32) {
    %c0_i32 = arith.constant 0 : i32
    %c0_i32_0 = arith.constant 0 : i32
    %c0_i32_1 = arith.constant 0 : i32
    return %c0_i32, %c0_i32_0 : i32, i32
  }
  func.func @transform_4(%arg0: i32, %arg1: i32, %arg2: memref<4xi32, #tpu.memory_space<smem>>, %arg3: memref<2xi32, #tpu.memory_space<smem>>) -> (i32, i32) {
    %c0_i32 = arith.constant 0 : i32
    %c0_i32_0 = arith.constant 0 : i32
    %c0_i32_1 = arith.constant 0 : i32
    return %c0_i32, %c0_i32_0 : i32, i32
  }
  func.func @transform_5(%arg0: i32, %arg1: i32, %arg2: memref<4xi32, #tpu.memory_space<smem>>, %arg3: memref<2xi32, #tpu.memory_space<smem>>) -> (i32, i32) {
    %c0_i32 = arith.constant 0 : i32
    %c0_i32_0 = arith.constant 0 : i32
    %c0_i32_1 = arith.constant 0 : i32
    return %c0_i32, %c0_i32_0 : i32, i32
  }
  func.func @transform_6(%arg0: i32, %arg1: i32, %arg2: memref<4xi32, #tpu.memory_space<smem>>, %arg3: memref<2xi32, #tpu.memory_space<smem>>) -> (i32, i32) {
    %c0_i32 = arith.constant 0 : i32
    %c0_i32_0 = arith.constant 0 : i32
    %c0_i32_1 = arith.constant 0 : i32
    return %c0_i32, %c0_i32_0 : i32, i32
  }
  func.func @transform_7(%arg0: i32, %arg1: i32, %arg2: memref<4xi32, #tpu.memory_space<smem>>, %arg3: memref<2xi32, #tpu.memory_space<smem>>) -> (i32, i32) {
    %c0_i32 = arith.constant 0 : i32
    %c0_i32_0 = arith.constant 0 : i32
    %c0_i32_1 = arith.constant 0 : i32
    return %c0_i32, %c0_i32_0 : i32, i32
  }
  func.func @transform_8(%arg0: i32, %arg1: i32, %arg2: memref<4xi32, #tpu.memory_space<smem>>, %arg3: memref<2xi32, #tpu.memory_space<smem>>) -> (i32, i32) {
    %c0_i32 = arith.constant 0 : i32
    %c0_i32_0 = arith.constant 0 : i32
    %c0_i32_1 = arith.constant 0 : i32
    return %c0_i32, %c0_i32_0 : i32, i32
  }
  func.func @transform_9(%arg0: i32, %arg1: i32, %arg2: memref<4xi32, #tpu.memory_space<smem>>, %arg3: memref<2xi32, #tpu.memory_space<smem>>) -> (i32, i32) {
    %c0_i32 = arith.constant 0 : i32
    %c0_i32_0 = arith.constant 0 : i32
    %c0_i32_1 = arith.constant 0 : i32
    return %c0_i32, %c0_i32_0 : i32, i32
  }
  func.func @transform_10(%arg0: i32, %arg1: i32, %arg2: memref<4xi32, #tpu.memory_space<smem>>, %arg3: memref<2xi32, #tpu.memory_space<smem>>) -> (i32, i32) {
    %c0_i32 = arith.constant 0 : i32
    %c0_i32_0 = arith.constant 0 : i32
    %c0_i32_1 = arith.constant 0 : i32
    return %c0_i32, %c0_i32_0 : i32, i32
  }
  func.func @transform_11(%arg0: i32, %arg1: i32, %arg2: memref<4xi32, #tpu.memory_space<smem>>, %arg3: memref<2xi32, #tpu.memory_space<smem>>) -> (i32, i32) {
    %c0_i32 = arith.constant 0 : i32
    %c0_i32_0 = arith.constant 0 : i32
    %c0_i32_1 = arith.constant 0 : i32
    return %c0_i32, %c0_i32_0 : i32, i32
  }
  func.func @transform_12(%arg0: i32, %arg1: i32, %arg2: memref<4xi32, #tpu.memory_space<smem>>, %arg3: memref<2xi32, #tpu.memory_space<smem>>) -> (i32, i32) {
    %c0_i32 = arith.constant 0 : i32
    %c0_i32_0 = arith.constant 0 : i32
    return %arg0, %c0_i32 : i32, i32
  }
}

</mosaic_0001>

<llo_original>
// kernel: tpu_custom_call.1
$region0: #{tpu_custom_call.1}
  #allocation0 [shape = 'u32[]', space=smem, size = 0x4, offset = 0x4, fixed_abs, tag = 'smem constant byte address 0x4 - core index']
  #allocation1 [shape = 'u32[144,128]{1,0:T(1,128)}', space=vmem, size = 0x12000, scoped, tag = 'internal scratch']
  #allocation2 [shape = 'f32[256,33]{1,0:T(8,128)}', space=vmem, size = 0x20000, scoped, tag = 'scratch operand']
  #allocation3 [shape = 's32[1]{0}', space=sflag, size = 0x4, scoped, tag = 'scoped memory for tpu_custom_call.1']
  #allocation4 [shape = 'u8[512]{0}', space=smem, size = 0x200, scoped, tag = 'prefetched SMEM operand 0']
  #allocation5 [shape = 'u8[512]{0}', space=smem, size = 0x200, scoped, tag = 'prefetched SMEM operand 1']
  %s0 = inlined_call_operand.vmem [shape: s32[4], index: 0, kind: input, shape index: {}]
  %s1 = inlined_call_operand.vmem [shape: s32[2], index: 1, kind: input, shape index: {}]
  %s2 = inlined_call_operand.vmem [shape: bf16[512,32], index: 2, kind: input, shape index: {}]
  %s3 = inlined_call_operand.vmem [shape: bf16[512,33], index: 3, kind: input, shape index: {}]
  %s4 = inlined_call_operand.vmem [shape: s32[1,512], index: 4, kind: input, shape index: {}]
  %s5 = inlined_call_operand.vmem [shape: bf16[33,128], index: 5, kind: input, shape index: {}]
  %s6 = inlined_call_operand.vmem [shape: f32[1,128], index: 6, kind: input, shape index: {}]
  %s7 = inlined_call_operand.vmem [shape: bf16[32,128], index: 7, kind: input, shape index: {}]
  %s8 = inlined_call_operand.vmem [shape: bf16[128,128], index: 8, kind: input, shape index: {}]
  %s9 = inlined_call_operand.vmem [shape: f32[1,128], index: 9, kind: input, shape index: {}]
  %s10 = inlined_call_operand.vmem [shape: bf16[128,128], index: 10, kind: input, shape index: {}]
  %s11 = inlined_call_operand.vmem [shape: f32[1,128], index: 11, kind: input, shape index: {}]
  %s12 = inlined_call_operand.vmem [shape: bf16[128,128], index: 12, kind: input, shape index: {}]
  %s13 = inlined_call_operand.vmem [shape: f32[1,128], index: 13, kind: input, shape index: {}]
  %s14 = inlined_call_operand.vmem [shape: f32[512,2], index: 14, kind: output, shape index: {}]
  %s15 = sld [smem:[#allocation0]]
  $region93: #{tpu_custom_call.1} parent=0
    _
  %s17 = ssub.s32 1, %s15
  %s18 = scalar_select 0, %s17, %s15
  %s19 = sshll.u32 %s0, 4
  %s20 = int_to_ptr.vmem [resolvable:$true] %s19
  %22 = dma.vmem_to_smem %s20, 16, [#allocation4], [#allocation3]
  %s23 = sshll.u32 %s1, 4
  %s24 = int_to_ptr.vmem [resolvable:$true] %s23
  %26 = dma.vmem_to_smem %s24, 16, [#allocation5], [#allocation3]
  %27 = dma.done [#allocation3], 32
  %28 = sfence
  loop: start=0, step=1, limit=6
  $region2: #{tpu_custom_call.1} parent=0 // loop_pre_header
    _
  $region3: #{tpu_custom_call.1} parent=0 // loop_header
    %s30 = sphi 0, %s34
    %p31 = scmp.ge.s32.totalorder %s30, 6
    %s37 = sphi 0, %s49
    %s38 = sphi 0, %s45
    %s39 = sphi 0, %s37
    %s40 = sphi 0, %s38
    %s41 = sphi 0, %s39
    %s42 = sphi 0, %s40
    %s52 = sphi 0, %s54
    %s55 = sphi 0, %s52
    %s56 = sphi 0, %s55
    %s72 = sphi 0, %s56
    %s84 = sphi 0, %s86
    %s87 = sphi 0, %s84
    %s88 = sphi 0, %s87
    %s104 = sphi 0, %s88
    %s116 = sphi 0, %s118
    %s119 = sphi 0, %s116
    %s120 = sphi 0, %s119
    %s136 = sphi 0, %s120
    %s140 = sphi 0, %s140
    %s142 = sphi 0, %s140
    %s143 = sphi 0, %s142
    %s157 = sphi 0, %s143
    %s161 = sphi 0, %s161
    %s163 = sphi 0, %s161
    %s164 = sphi 0, %s163
    %s178 = sphi 0, %s164
    %s182 = sphi 0, %s182
    %s184 = sphi 0, %s182
    %s185 = sphi 0, %s184
    %s199 = sphi 0, %s185
    %s203 = sphi 0, %s203
    %s205 = sphi 0, %s203
    %s206 = sphi 0, %s205
    %s220 = sphi 0, %s206
    %s224 = sphi 0, %s224
    %s226 = sphi 0, %s224
    %s227 = sphi 0, %s226
    %s241 = sphi 0, %s227
    %s245 = sphi 0, %s245
    %s247 = sphi 0, %s245
    %s248 = sphi 0, %s247
    %s262 = sphi 0, %s248
    %s266 = sphi 0, %s266
    %s268 = sphi 0, %s266
    %s269 = sphi 0, %s268
    %s283 = sphi 0, %s269
    %s287 = sphi 0, %s287
    %s289 = sphi 0, %s287
    %s290 = sphi 0, %s289
    %s304 = sphi 0, %s290
    %s308 = sphi 0, %s308
    %s310 = sphi 0, %s308
    %s311 = sphi 0, %s310
    %s325 = sphi 0, %s311
    %s331 = sphi 0, %s333
    %s334 = sphi 0, %s331
    %s335 = sphi 0, %s334
    %s351 = sphi 0, %s335
  $region4: #{tpu_custom_call.1} parent=0 // loop_header_branch
    %33 = sbr.rel (%p31) target = $region8
  $region5: #{tpu_custom_call.1} parent=0 // loop_body
    %s35 = ssub.s32 %s30, 1
    %s36 = ssub.s32 %s30, 2
    %s43 = sadd.s32 1, %s38
    %p44 = scmp.ge.s32.totalorder %s43, 2
    %s45 = scalar_select %p44, 0, %s43
    %s46 = sadd.s32 1, %s37
    %s47 = scalar_select %p44, %s46, %s37
    %p48 = scmp.ge.s32.totalorder %s47, 2
    %s49 = scalar_select %p48, 0, %s47
    %s50 = ssub.s32 %s37, %s49
    %p51 = scmp.eq.s32.totalorder %s50, 0
    %s53 = sadd.s32 %s52, 1
    %s54 = scalar_select %p51, %s52, %s53
    %p57 = pneg %p51
    %p58 = scmp.eq.s32.totalorder %s30, 3
    %p59 = por %p57, %p58
    %p60 = scmp.ne.s32.totalorder %s52, %s55
    %p61 = scmp.eq.s32.totalorder %s30, 0
    %p62 = por %p60, %p61
    %p63 = scmp.ne.s32.totalorder %s52, %s55
    %p64 = scmp.eq.s32.totalorder %s35, 3
    %p65 = por %p63, %p64
    %p66 = scmp.ne.s32.totalorder %s55, %s56
    %p67 = scmp.eq.s32.totalorder %s35, 0
    %p68 = por %p66, %p67
    %p69 = scmp.ne.s32.totalorder %s55, %s56
    %p70 = scmp.eq.s32.totalorder %s36, 3
    %p71 = por %p69, %p70
    %p73 = scmp.ne.s32.totalorder %s56, %s72
    %p74 = scmp.eq.s32.totalorder %s36, 0
    %p75 = por %p73, %p74
    %s76 = smul.u32 %s37, 2
    %s77 = sadd.s32 %s76, %s38
    %s78 = sld [smem:[#allocation4 + %s77]]
    %s79 = smul.u32 %s49, 2
    %s80 = sadd.s32 %s79, %s45
    %s81 = sld [smem:[#allocation4 + %s80]]
    %s82 = ssub.s32 %s78, %s81
    %p83 = scmp.eq.s32.totalorder %s82, 0
    %s85 = sadd.s32 %s84, 1
    %s86 = scalar_select %p83, %s84, %s85
    %p89 = pneg %p83
    %p90 = scmp.eq.s32.totalorder %s30, 3
    %p91 = por %p89, %p90
    %p92 = scmp.ne.s32.totalorder %s84, %s87
    %p93 = scmp.eq.s32.totalorder %s30, 0
    %p94 = por %p92, %p93
    %p95 = scmp.ne.s32.totalorder %s84, %s87
    %p96 = scmp.eq.s32.totalorder %s35, 3
    %p97 = por %p95, %p96
    %p98 = scmp.ne.s32.totalorder %s87, %s88
    %p99 = scmp.eq.s32.totalorder %s35, 0
    %p100 = por %p98, %p99
    %p101 = scmp.ne.s32.totalorder %s87, %s88
    %p102 = scmp.eq.s32.totalorder %s36, 3
    %p103 = por %p101, %p102
    %p105 = scmp.ne.s32.totalorder %s88, %s104
    %p106 = scmp.eq.s32.totalorder %s36, 0
    %p107 = por %p105, %p106
    %s108 = smul.u32 %s37, 2
    %s109 = sadd.s32 %s108, %s38
    %s110 = sld [smem:[#allocation4 + %s109]]
    %s111 = smul.u32 %s49, 2
    %s112 = sadd.s32 %s111, %s45
    %s113 = sld [smem:[#allocation4 + %s112]]
    %s114 = ssub.s32 %s110, %s113
    %p115 = scmp.eq.s32.totalorder %s114, 0
    %s117 = sadd.s32 %s116, 1
    %s118 = scalar_select %p115, %s116, %s117
    %p121 = pneg %p115
    %p122 = scmp.eq.s32.totalorder %s30, 3
    %p123 = por %p121, %p122
    %p124 = scmp.ne.s32.totalorder %s116, %s119
    %p125 = scmp.eq.s32.totalorder %s30, 0
    %p126 = por %p124, %p125
    %p127 = scmp.ne.s32.totalorder %s116, %s119
    %p128 = scmp.eq.s32.totalorder %s35, 3
    %p129 = por %p127, %p128
    %p130 = scmp.ne.s32.totalorder %s119, %s120
    %p131 = scmp.eq.s32.totalorder %s35, 0
    %p132 = por %p130, %p131
    %p133 = scmp.ne.s32.totalorder %s119, %s120
    %p134 = scmp.eq.s32.totalorder %s36, 3
    %p135 = por %p133, %p134
    %p137 = scmp.ne.s32.totalorder %s120, %s136
    %p138 = scmp.eq.s32.totalorder %s36, 0
    %p139 = por %p137, %p138
    %s141 = sadd.s32 %s140, 1
    %p144 = scmp.eq.s32.totalorder %s30, 3
    %p145 = scmp.ne.s32.totalorder %s140, %s142
    %p146 = scmp.eq.s32.totalorder %s30, 0
    %p147 = por %p145, %p146
    %p148 = scmp.ne.s32.totalorder %s140, %s142
    %p149 = scmp.eq.s32.totalorder %s35, 3
    %p150 = por %p148, %p149
    %p151 = scmp.ne.s32.totalorder %s142, %s143
    %p152 = scmp.eq.s32.totalorder %s35, 0
    %p153 = por %p151, %p152
    %p154 = scmp.ne.s32.totalorder %s142, %s143
    %p155 = scmp.eq.s32.totalorder %s36, 3
    %p156 = por %p154, %p155
    %p158 = scmp.ne.s32.totalorder %s143, %s157
    %p159 = scmp.eq.s32.totalorder %s36, 0
    %p160 = por %p158, %p159
    %s162 = sadd.s32 %s161, 1
    %p165 = scmp.eq.s32.totalorder %s30, 3
    %p166 = scmp.ne.s32.totalorder %s161, %s163
    %p167 = scmp.eq.s32.totalorder %s30, 0
    %p168 = por %p166, %p167
    %p169 = scmp.ne.s32.totalorder %s161, %s163
    %p170 = scmp.eq.s32.totalorder %s35, 3
    %p171 = por %p169, %p170
    %p172 = scmp.ne.s32.totalorder %s163, %s164
    %p173 = scmp.eq.s32.totalorder %s35, 0
    %p174 = por %p172, %p173
    %p175 = scmp.ne.s32.totalorder %s163, %s164
    %p176 = scmp.eq.s32.totalorder %s36, 3
    %p177 = por %p175, %p176
    %p179 = scmp.ne.s32.totalorder %s164, %s178
    %p180 = scmp.eq.s32.totalorder %s36, 0
    %p181 = por %p179, %p180
    %s183 = sadd.s32 %s182, 1
    %p186 = scmp.eq.s32.totalorder %s30, 3
    %p187 = scmp.ne.s32.totalorder %s182, %s184
    %p188 = scmp.eq.s32.totalorder %s30, 0
    %p189 = por %p187, %p188
    %p190 = scmp.ne.s32.totalorder %s182, %s184
    %p191 = scmp.eq.s32.totalorder %s35, 3
    %p192 = por %p190, %p191
    %p193 = scmp.ne.s32.totalorder %s184, %s185
    %p194 = scmp.eq.s32.totalorder %s35, 0
    %p195 = por %p193, %p194
    %p196 = scmp.ne.s32.totalorder %s184, %s185
    %p197 = scmp.eq.s32.totalorder %s36, 3
    %p198 = por %p196, %p197
    %p200 = scmp.ne.s32.totalorder %s185, %s199
    %p201 = scmp.eq.s32.totalorder %s36, 0
    %p202 = por %p200, %p201
    %s204 = sadd.s32 %s203, 1
    %p207 = scmp.eq.s32.totalorder %s30, 3
    %p208 = scmp.ne.s32.totalorder %s203, %s205
    %p209 = scmp.eq.s32.totalorder %s30, 0
    %p210 = por %p208, %p209
    %p211 = scmp.ne.s32.totalorder %s203, %s205
    %p212 = scmp.eq.s32.totalorder %s35, 3
    %p213 = por %p211, %p212
    %p214 = scmp.ne.s32.totalorder %s205, %s206
    %p215 = scmp.eq.s32.totalorder %s35, 0
    %p216 = por %p214, %p215
    %p217 = scmp.ne.s32.totalorder %s205, %s206
    %p218 = scmp.eq.s32.totalorder %s36, 3
    %p219 = por %p217, %p218
    %p221 = scmp.ne.s32.totalorder %s206, %s220
    %p222 = scmp.eq.s32.totalorder %s36, 0
    %p223 = por %p221, %p222
    %s225 = sadd.s32 %s224, 1
    %p228 = scmp.eq.s32.totalorder %s30, 3
    %p229 = scmp.ne.s32.totalorder %s224, %s226
    %p230 = scmp.eq.s32.totalorder %s30, 0
    %p231 = por %p229, %p230
    %p232 = scmp.ne.s32.totalorder %s224, %s226
    %p233 = scmp.eq.s32.totalorder %s35, 3
    %p234 = por %p232, %p233
    %p235 = scmp.ne.s32.totalorder %s226, %s227
    %p236 = scmp.eq.s32.totalorder %s35, 0
    %p237 = por %p235, %p236
    %p238 = scmp.ne.s32.totalorder %s226, %s227
    %p239 = scmp.eq.s32.totalorder %s36, 3
    %p240 = por %p238, %p239
    %p242 = scmp.ne.s32.totalorder %s227, %s241
    %p243 = scmp.eq.s32.totalorder %s36, 0
    %p244 = por %p242, %p243
    %s246 = sadd.s32 %s245, 1
    %p249 = scmp.eq.s32.totalorder %s30, 3
    %p250 = scmp.ne.s32.totalorder %s245, %s247
    %p251 = scmp.eq.s32.totalorder %s30, 0
    %p252 = por %p250, %p251
    %p253 = scmp.ne.s32.totalorder %s245, %s247
    %p254 = scmp.eq.s32.totalorder %s35, 3
    %p255 = por %p253, %p254
    %p256 = scmp.ne.s32.totalorder %s247, %s248
    %p257 = scmp.eq.s32.totalorder %s35, 0
    %p258 = por %p256, %p257
    %p259 = scmp.ne.s32.totalorder %s247, %s248
    %p260 = scmp.eq.s32.totalorder %s36, 3
    %p261 = por %p259, %p260
    %p263 = scmp.ne.s32.totalorder %s248, %s262
    %p264 = scmp.eq.s32.totalorder %s36, 0
    %p265 = por %p263, %p264
    %s267 = sadd.s32 %s266, 1
    %p270 = scmp.eq.s32.totalorder %s30, 3
    %p271 = scmp.ne.s32.totalorder %s266, %s268
    %p272 = scmp.eq.s32.totalorder %s30, 0
    %p273 = por %p271, %p272
    %p274 = scmp.ne.s32.totalorder %s266, %s268
    %p275 = scmp.eq.s32.totalorder %s35, 3
    %p276 = por %p274, %p275
    %p277 = scmp.ne.s32.totalorder %s268, %s269
    %p278 = scmp.eq.s32.totalorder %s35, 0
    %p279 = por %p277, %p278
    %p280 = scmp.ne.s32.totalorder %s268, %s269
    %p281 = scmp.eq.s32.totalorder %s36, 3
    %p282 = por %p280, %p281
    %p284 = scmp.ne.s32.totalorder %s269, %s283
    %p285 = scmp.eq.s32.totalorder %s36, 0
    %p286 = por %p284, %p285
    %s288 = sadd.s32 %s287, 1
    %p291 = scmp.eq.s32.totalorder %s30, 3
    %p292 = scmp.ne.s32.totalorder %s287, %s289
    %p293 = scmp.eq.s32.totalorder %s30, 0
    %p294 = por %p292, %p293
    %p295 = scmp.ne.s32.totalorder %s287, %s289
    %p296 = scmp.eq.s32.totalorder %s35, 3
    %p297 = por %p295, %p296
    %p298 = scmp.ne.s32.totalorder %s289, %s290
    %p299 = scmp.eq.s32.totalorder %s35, 0
    %p300 = por %p298, %p299
    %p301 = scmp.ne.s32.totalorder %s289, %s290
    %p302 = scmp.eq.s32.totalorder %s36, 3
    %p303 = por %p301, %p302
    %p305 = scmp.ne.s32.totalorder %s290, %s304
    %p306 = scmp.eq.s32.totalorder %s36, 0
    %p307 = por %p305, %p306
    %s309 = sadd.s32 %s308, 1
    %p312 = scmp.eq.s32.totalorder %s30, 3
    %p313 = scmp.ne.s32.totalorder %s308, %s310
    %p314 = scmp.eq.s32.totalorder %s30, 0
    %p315 = por %p313, %p314
    %p316 = scmp.ne.s32.totalorder %s308, %s310
    %p317 = scmp.eq.s32.totalorder %s35, 3
    %p318 = por %p316, %p317
    %p319 = scmp.ne.s32.totalorder %s310, %s311
    %p320 = scmp.eq.s32.totalorder %s35, 0
    %p321 = por %p319, %p320
    %p322 = scmp.ne.s32.totalorder %s310, %s311
    %p323 = scmp.eq.s32.totalorder %s36, 3
    %p324 = por %p322, %p323
    %p326 = scmp.ne.s32.totalorder %s311, %s325
    %p327 = scmp.eq.s32.totalorder %s36, 0
    %p328 = por %p326, %p327
    %s329 = ssub.s32 %s37, %s49
    %p330 = scmp.eq.s32.totalorder %s329, 0
    %s332 = sadd.s32 %s331, 1
    %s333 = scalar_select %p330, %s331, %s332
    %p336 = pneg %p330
    %p337 = scmp.eq.s32.totalorder %s30, 3
    %p338 = por %p336, %p337
    %p339 = scmp.ne.s32.totalorder %s331, %s334
    %p340 = scmp.eq.s32.totalorder %s30, 0
    %p341 = por %p339, %p340
    %p342 = scmp.ne.s32.totalorder %s331, %s334
    %p343 = scmp.eq.s32.totalorder %s35, 3
    %p344 = por %p342, %p343
    %p345 = scmp.ne.s32.totalorder %s334, %s335
    %p346 = scmp.eq.s32.totalorder %s35, 0
    %p347 = por %p345, %p346
    %p348 = scmp.ne.s32.totalorder %s334, %s335
    %p349 = scmp.eq.s32.totalorder %s36, 3
    %p350 = por %p348, %p349
    %p352 = scmp.ne.s32.totalorder %s335, %s351
    %p353 = scmp.eq.s32.totalorder %s36, 0
    %p354 = por %p352, %p353
    %p355 = scmp.le.s32.totalorder 1, %s30
    %p356 = scmp.lt.s32.totalorder %s30, 5
    %p357 = pnand %p355, %p356
    %p358 = pneg %p357
    // Predicated region
    $region9: #{tpu_custom_call.1} parent=5 // pred_check
      _
    $region10: #{tpu_custom_call.1} parent=5 // pred_check_branch
      %360 = sbr.rel (%p357) target = $region12
    $region11: #{tpu_custom_call.1} parent=5 // pred_region
      %s361 = ssub.s32 %s30, 1
      // Predicated region
      $region13: #{tpu_custom_call.1} parent=11 // pred_check
        %p362 = pneg %p153
      $region14: #{tpu_custom_call.1} parent=11 // pred_check_branch
        %364 = sbr.rel (%p362) target = $region16
      $region15: #{tpu_custom_call.1} parent=11 // pred_region
        _
      $region16: #{tpu_custom_call.1} parent=11 // pred_fallthru
        _
      // Predicated region
      $region17: #{tpu_custom_call.1} parent=11 // pred_check
        %p365 = pneg %p174
      $region18: #{tpu_custom_call.1} parent=11 // pred_check_branch
        %367 = sbr.rel (%p365) target = $region20
      $region19: #{tpu_custom_call.1} parent=11 // pred_region
        _
      $region20: #{tpu_custom_call.1} parent=11 // pred_fallthru
        _
      // Predicated region
      $region21: #{tpu_custom_call.1} parent=11 // pred_check
        %p368 = pneg %p195
      $region22: #{tpu_custom_call.1} parent=11 // pred_check_branch
        %370 = sbr.rel (%p368) target = $region24
      $region23: #{tpu_custom_call.1} parent=11 // pred_region
        _
      $region24: #{tpu_custom_call.1} parent=11 // pred_fallthru
        _
      // Predicated region
      $region25: #{tpu_custom_call.1} parent=11 // pred_check
        %p371 = pneg %p216
      $region26: #{tpu_custom_call.1} parent=11 // pred_check_branch
        %373 = sbr.rel (%p371) target = $region28
      $region27: #{tpu_custom_call.1} parent=11 // pred_region
        _
      $region28: #{tpu_custom_call.1} parent=11 // pred_fallthru
        _
      // Predicated region
      $region29: #{tpu_custom_call.1} parent=11 // pred_check
        %p374 = pneg %p237
      $region30: #{tpu_custom_call.1} parent=11 // pred_check_branch
        %376 = sbr.rel (%p374) target = $region32
      $region31: #{tpu_custom_call.1} parent=11 // pred_region
        _
      $region32: #{tpu_custom_call.1} parent=11 // pred_fallthru
        _
      // Predicated region
      $region33: #{tpu_custom_call.1} parent=11 // pred_check
        %p377 = pneg %p258
      $region34: #{tpu_custom_call.1} parent=11 // pred_check_branch
        %379 = sbr.rel (%p377) target = $region36
      $region35: #{tpu_custom_call.1} parent=11 // pred_region
        _
      $region36: #{tpu_custom_call.1} parent=11 // pred_fallthru
        _
      // Predicated region
      $region37: #{tpu_custom_call.1} parent=11 // pred_check
        %p380 = pneg %p279
      $region38: #{tpu_custom_call.1} parent=11 // pred_check_branch
        %382 = sbr.rel (%p380) target = $region40
      $region39: #{tpu_custom_call.1} parent=11 // pred_region
        _
      $region40: #{tpu_custom_call.1} parent=11 // pred_fallthru
        _
      // Predicated region
      $region41: #{tpu_custom_call.1} parent=11 // pred_check
        %p383 = pneg %p300
      $region42: #{tpu_custom_call.1} parent=11 // pred_check_branch
        %385 = sbr.rel (%p383) target = $region44
      $region43: #{tpu_custom_call.1} parent=11 // pred_region
        _
      $region44: #{tpu_custom_call.1} parent=11 // pred_fallthru
        _
      // Predicated region
      $region45: #{tpu_custom_call.1} parent=11 // pred_check
        %p386 = pneg %p321
      $region46: #{tpu_custom_call.1} parent=11 // pred_check_branch
        %388 = sbr.rel (%p386) target = $region48
      $region47: #{tpu_custom_call.1} parent=11 // pred_region
        _
      $region48: #{tpu_custom_call.1} parent=11 // pred_fallthru
        _
    $region12: #{tpu_custom_call.1} parent=5 // pred_fallthru
      _
    %p389 = scmp.lt.s32.totalorder %s30, 4
    // Predicated region
    $region49: #{tpu_custom_call.1} parent=5 // pred_check
      %p390 = pneg %p389
    $region50: #{tpu_custom_call.1} parent=5 // pred_check_branch
      %392 = sbr.rel (%p390) target = $region52
    $region51: #{tpu_custom_call.1} parent=5 // pred_region
      // Predicated region
      $region53: #{tpu_custom_call.1} parent=51 // pred_check
        %p393 = pneg %p62
      $region54: #{tpu_custom_call.1} parent=51 // pred_check_branch
        %395 = sbr.rel (%p393) target = $region56
      $region55: #{tpu_custom_call.1} parent=51 // pred_region
        %s396 = smul.u32 32, %s37
        %p397 = scmp.lt.s32.totalorder %s396, 63
        %s398 = scalar_select %p397, %s396, 63
        %s399 = smul.addr %s398, 4
        %s400 = scalar_lea.vmem %s2, %s399
        %s401 = smul.u32 32, %s37
      $region56: #{tpu_custom_call.1} parent=51 // pred_fallthru
        _
      // Predicated region
      $region57: #{tpu_custom_call.1} parent=51 // pred_check
        %p402 = pneg %p94
      $region58: #{tpu_custom_call.1} parent=51 // pred_check_branch
        %404 = sbr.rel (%p402) target = $region60
      $region59: #{tpu_custom_call.1} parent=51 // pred_region
        %s405 = smul.u32 %s37, 2
        %s406 = sadd.s32 %s405, %s38
        %s407 = sld [smem:[#allocation4 + %s406]]
        %s408 = smul.u32 32, %s407
        %p409 = scmp.lt.s32.totalorder %s408, 63
        %s410 = scalar_select %p409, %s408, 63
        %s411 = smul.addr %s410, 4
        %s412 = scalar_lea.vmem %s3, %s411
        %s413 = smul.u32 %s37, 2
        %s414 = sadd.s32 %s413, %s38
        %s415 = sld [smem:[#allocation4 + %s414]]
        %s416 = smul.u32 32, %s415
      $region60: #{tpu_custom_call.1} parent=51 // pred_fallthru
        _
      // Predicated region
      $region61: #{tpu_custom_call.1} parent=51 // pred_check
        %p417 = pneg %p126
      $region62: #{tpu_custom_call.1} parent=51 // pred_check_branch
        %419 = sbr.rel (%p417) target = $region64
      $region63: #{tpu_custom_call.1} parent=51 // pred_region
        %s420 = smul.u32 %s37, 2
        %s421 = sadd.s32 %s420, %s38
        %s422 = sld [smem:[#allocation4 + %s421]]
        %s423 = smul.u32 2, %s422
        %p424 = scmp.lt.s32.totalorder %s423, 3
        %s425 = scalar_select %p424, %s423, 3
        %s426 = scalar_lea.vmem %s4, %s425
        %s427 = smul.u32 %s37, 2
        %s428 = sadd.s32 %s427, %s38
        %s429 = sld [smem:[#allocation4 + %s428]]
        %s430 = smul.u32 2, %s429
      $region64: #{tpu_custom_call.1} parent=51 // pred_fallthru
        _
    $region52: #{tpu_custom_call.1} parent=5 // pred_fallthru
      _
    %p431 = scmp.le.s32.totalorder 1, %s30
    %p432 = scmp.lt.s32.totalorder %s30, 5
    %p433 = pnand %p431, %p432
    %p434 = pneg %p433
    // Predicated region
    $region65: #{tpu_custom_call.1} parent=5 // pred_check
      _
    $region66: #{tpu_custom_call.1} parent=5 // pred_check_branch
      %436 = sbr.rel (%p433) target = $region68
    $region67: #{tpu_custom_call.1} parent=5 // pred_region
      %s437 = ssub.s32 %s30, 1
      %s438 = smul.u32 32, %s39
      %p439 = scmp.lt.s32.totalorder %s438, 63
      %s440 = scalar_select %p439, %s438, 63
      %s441 = smul.addr %s440, 4
      %s442 = scalar_lea.vmem %s2, %s441
      %p443 = pneg %p68
      %p444 = pneg %p65
      %s445 = smul.u32 %s39, 2
      %s446 = sadd.s32 %s445, %s40
      %s447 = sld [smem:[#allocation4 + %s446]]
      %s448 = smul.u32 32, %s447
      %p449 = scmp.lt.s32.totalorder %s448, 63
      %s450 = scalar_select %p449, %s448, 63
      %s451 = smul.addr %s450, 4
      %s452 = scalar_lea.vmem %s3, %s451
      %p453 = pneg %p100
      %p454 = pneg %p97
      %s455 = smul.u32 %s39, 2
      %s456 = sadd.s32 %s455, %s40
      %s457 = sld [smem:[#allocation4 + %s456]]
      %s458 = smul.u32 2, %s457
      %p459 = scmp.lt.s32.totalorder %s458, 3
      %s460 = scalar_select %p459, %s458, 3
      %s461 = scalar_lea.vmem %s4, %s460
      %p462 = pneg %p132
      %p463 = pneg %p129
      %p464 = pneg %p153
      %p465 = pneg %p150
      %p466 = pneg %p174
      %p467 = pneg %p171
      %p468 = pneg %p195
      %p469 = pneg %p192
      %p470 = pneg %p216
      %p471 = pneg %p213
      %p472 = pneg %p237
      %p473 = pneg %p234
      %p474 = pneg %p258
      %p475 = pneg %p255
      %p476 = pneg %p279
      %p477 = pneg %p276
      %p478 = pneg %p300
      %p479 = pneg %p297
      %p480 = pneg %p321
      %p481 = pneg %p318
      %p482 = pneg %p347
      %p483 = pneg %p344
      %s484 = smul.u32 32, %s39
      %p485 = scmp.lt.s32.totalorder %s484, 63
      %s486 = scalar_select %p485, %s484, 63
      %s487 = smul.addr %s486, 8
      %s488 = scalar_lea.vmem %s14, %s487
      %s489 = smul.u32 32, %s39
      %p490 = scmp.lt.s32.totalorder %s489, 63
      %s491 = scalar_select %p490, %s489, 63
      %s492 = smul.addr %s491, 4
      %s493 = scalar_lea.vmem %s2, %s492
      %s494 = smul.u32 32, %s39
      %s495 = smul.u32 %s39, 2
      %s496 = sadd.s32 %s495, %s40
      %s497 = sld [smem:[#allocation4 + %s496]]
      %s498 = smul.u32 32, %s497
      %p499 = scmp.lt.s32.totalorder %s498, 63
      %s500 = scalar_select %p499, %s498, 63
      %s501 = smul.addr %s500, 4
      %s502 = scalar_lea.vmem %s3, %s501
      %s503 = smul.u32 %s39, 2
      %s504 = sadd.s32 %s503, %s40
      %s505 = sld [smem:[#allocation4 + %s504]]
      %s506 = smul.u32 32, %s505
      %s507 = smul.u32 %s39, 2
      %s508 = sadd.s32 %s507, %s40
      %s509 = sld [smem:[#allocation4 + %s508]]
      %s510 = smul.u32 2, %s509
      %p511 = scmp.lt.s32.totalorder %s510, 3
      %s512 = scalar_select %p511, %s510, 3
      %s513 = scalar_lea.vmem %s4, %s512
      %s514 = smul.u32 %s39, 2
      %s515 = sadd.s32 %s514, %s40
      %s516 = sld [smem:[#allocation4 + %s515]]
      %s517 = smul.u32 2, %s516
      %s518 = smul.u32 32, %s39
      %p519 = scmp.lt.s32.totalorder %s518, 63
      %s520 = scalar_select %p519, %s518, 63
      %s521 = smul.addr %s520, 8
      %s522 = scalar_lea.vmem %s14, %s521
      %s523 = smul.u32 32, %s39
      %s525 = smul.u32 %s39, 256
      %p526 = scmp.eq.s32.totalorder %s40, 0
      // Predicated region
      $region69: #{tpu_custom_call.1} parent=67 // pred_check
        %p527 = pneg %p526
      $region70: #{tpu_custom_call.1} parent=67 // pred_check_branch
        %529 = sbr.rel (%p527) target = $region72
      $region71: #{tpu_custom_call.1} parent=67 // pred_region
        %vm530 = vcmask 269312
        %531 = vst.msk [vmem:[#allocation2] sm:$0xff] %vm530, 0.0
        %532 = vst.msk [vmem:[#allocation2 + $0x8] sm:$0xff] %vm530, 0.0
        %533 = vst.msk [vmem:[#allocation2 + $0x10] sm:$0xff] %vm530, 0.0
        %534 = vst.msk [vmem:[#allocation2 + $0x18] sm:$0xff] %vm530, 0.0
        %535 = vst.msk [vmem:[#allocation2 + $0x20] sm:$0xff] %vm530, 0.0
        %536 = vst.msk [vmem:[#allocation2 + $0x28] sm:$0xff] %vm530, 0.0
        %537 = vst.msk [vmem:[#allocation2 + $0x30] sm:$0xff] %vm530, 0.0
        %538 = vst.msk [vmem:[#allocation2 + $0x38] sm:$0xff] %vm530, 0.0
        %539 = vst.msk [vmem:[#allocation2 + $0x40] sm:$0xff] %vm530, 0.0
        %540 = vst.msk [vmem:[#allocation2 + $0x48] sm:$0xff] %vm530, 0.0
        %541 = vst.msk [vmem:[#allocation2 + $0x50] sm:$0xff] %vm530, 0.0
        %542 = vst.msk [vmem:[#allocation2 + $0x58] sm:$0xff] %vm530, 0.0
        %543 = vst.msk [vmem:[#allocation2 + $0x60] sm:$0xff] %vm530, 0.0
        %544 = vst.msk [vmem:[#allocation2 + $0x68] sm:$0xff] %vm530, 0.0
        %545 = vst.msk [vmem:[#allocation2 + $0x70] sm:$0xff] %vm530, 0.0
        %546 = vst.msk [vmem:[#allocation2 + $0x78] sm:$0xff] %vm530, 0.0
        %547 = vst.msk [vmem:[#allocation2 + $0x80] sm:$0xff] %vm530, 0.0
        %548 = vst.msk [vmem:[#allocation2 + $0x88] sm:$0xff] %vm530, 0.0
        %549 = vst.msk [vmem:[#allocation2 + $0x90] sm:$0xff] %vm530, 0.0
        %550 = vst.msk [vmem:[#allocation2 + $0x98] sm:$0xff] %vm530, 0.0
        %551 = vst.msk [vmem:[#allocation2 + $0xa0] sm:$0xff] %vm530, 0.0
        %552 = vst.msk [vmem:[#allocation2 + $0xa8] sm:$0xff] %vm530, 0.0
        %553 = vst.msk [vmem:[#allocation2 + $0xb0] sm:$0xff] %vm530, 0.0
        %554 = vst.msk [vmem:[#allocation2 + $0xb8] sm:$0xff] %vm530, 0.0
        %555 = vst.msk [vmem:[#allocation2 + $0xc0] sm:$0xff] %vm530, 0.0
        %556 = vst.msk [vmem:[#allocation2 + $0xc8] sm:$0xff] %vm530, 0.0
        %557 = vst.msk [vmem:[#allocation2 + $0xd0] sm:$0xff] %vm530, 0.0
        %558 = vst.msk [vmem:[#allocation2 + $0xd8] sm:$0xff] %vm530, 0.0
        %559 = vst.msk [vmem:[#allocation2 + $0xe0] sm:$0xff] %vm530, 0.0
        %560 = vst.msk [vmem:[#allocation2 + $0xe8] sm:$0xff] %vm530, 0.0
        %561 = vst.msk [vmem:[#allocation2 + $0xf0] sm:$0xff] %vm530, 0.0
        %562 = vst.msk [vmem:[#allocation2 + $0xf8] sm:$0xff] %vm530, 0.0
      $region72: #{tpu_custom_call.1} parent=67 // pred_fallthru
        _
      %s563 = sld [smem:[#allocation5 + %s39]]
      %p564 = scmp.lt.s32.totalorder %s40, %s563
      // Predicated region
      $region73: #{tpu_custom_call.1} parent=67 // pred_check
        %p565 = pneg %p564
      $region74: #{tpu_custom_call.1} parent=67 // pred_check_branch
        %567 = sbr.rel (%p565) target = $region76
      $region75: #{tpu_custom_call.1} parent=67 // pred_region
        %v568 = vld [vmem:[%s513] sm:$0x3]
        %v569 = vstv %s525
        %v570 = vsub.s32 %v568, %v569
        %v571 = vlaneseq
        %v572 = vshrl.u32 %v571, 7
        %v573 = vadd.s32 %v572, 8
        %v574 = vadd.s32 %v572, 16
        %v575 = vadd.s32 %v572, 24
        %v576 = vadd.s32 %v572, 32
        %v577 = vadd.s32 %v572, 40
        %v578 = vadd.s32 %v572, 48
        %v579 = vadd.s32 %v572, 56
        %v580 = vadd.s32 %v572, 64
        %v581 = vadd.s32 %v572, 72
        %v582 = vadd.s32 %v572, 80
        %v583 = vadd.s32 %v572, 88
        %v584 = vadd.s32 %v572, 96
        %v585 = vadd.s32 %v572, 104
        %v586 = vadd.s32 %v572, 112
        %v587 = vadd.s32 %v572, 120
        %v588 = vadd.s32 %v572, 128
        %v589 = vadd.s32 %v572, 136
        %v590 = vadd.s32 %v572, 144
        %v591 = vadd.s32 %v572, 152
        %v592 = vadd.s32 %v572, 160
        %v593 = vadd.s32 %v572, 168
        %v594 = vadd.s32 %v572, 176
        %v595 = vadd.s32 %v572, 184
        %v596 = vadd.s32 %v572, 192
        %v597 = vadd.s32 %v572, 200
        %v598 = vadd.s32 %v572, 208
        %v599 = vadd.s32 %v572, 216
        %v600 = vadd.s32 %v572, 224
        %v601 = vadd.s32 %v572, 232
        %v602 = vadd.s32 %v572, 240
        %v603 = vadd.s32 %v572, 248
        %v604 = vlaneseq
        %v605 = vshrl.u32 %v604, 7
        %v606 = vsub.s32 0, %v605
        %v607 = vrot.slane %v570, %v606
        %v608 = vlaneseq
        %v609 = vshrl.u32 %v608, 7
        %v610 = vsub.s32 1, %v609
        %v611 = vrot.slane %v570, %v610
        %vm612 = vcmp.eq.s32.totalorder %v572, %v607
        %vm613 = vcmp.eq.s32.totalorder %v572, %v611
        %vm614 = vcmp.eq.s32.totalorder %v573, %v607
        %vm615 = vcmp.eq.s32.totalorder %v573, %v611
        %vm616 = vcmp.eq.s32.totalorder %v574, %v607
        %vm617 = vcmp.eq.s32.totalorder %v574, %v611
        %vm618 = vcmp.eq.s32.totalorder %v575, %v607
        %vm619 = vcmp.eq.s32.totalorder %v575, %v611
        %vm620 = vcmp.eq.s32.totalorder %v576, %v607
        %vm621 = vcmp.eq.s32.totalorder %v576, %v611
        %vm622 = vcmp.eq.s32.totalorder %v577, %v607
        %vm623 = vcmp.eq.s32.totalorder %v577, %v611
        %vm624 = vcmp.eq.s32.totalorder %v578, %v607
        %vm625 = vcmp.eq.s32.totalorder %v578, %v611
        %vm626 = vcmp.eq.s32.totalorder %v579, %v607
        %vm627 = vcmp.eq.s32.totalorder %v579, %v611
        %vm628 = vcmp.eq.s32.totalorder %v580, %v607
        %vm629 = vcmp.eq.s32.totalorder %v580, %v611
        %vm630 = vcmp.eq.s32.totalorder %v581, %v607
        %vm631 = vcmp.eq.s32.totalorder %v581, %v611
        %vm632 = vcmp.eq.s32.totalorder %v582, %v607
        %vm633 = vcmp.eq.s32.totalorder %v582, %v611
        %vm634 = vcmp.eq.s32.totalorder %v583, %v607
        %vm635 = vcmp.eq.s32.totalorder %v583, %v611
        %vm636 = vcmp.eq.s32.totalorder %v584, %v607
        %vm637 = vcmp.eq.s32.totalorder %v584, %v611
        %vm638 = vcmp.eq.s32.totalorder %v585, %v607
        %vm639 = vcmp.eq.s32.totalorder %v585, %v611
        %vm640 = vcmp.eq.s32.totalorder %v586, %v607
        %vm641 = vcmp.eq.s32.totalorder %v586, %v611
        %vm642 = vcmp.eq.s32.totalorder %v587, %v607
        %vm643 = vcmp.eq.s32.totalorder %v587, %v611
        %vm644 = vcmp.eq.s32.totalorder %v588, %v607
        %vm645 = vcmp.eq.s32.totalorder %v588, %v611
        %vm646 = vcmp.eq.s32.totalorder %v589, %v607
        %vm647 = vcmp.eq.s32.totalorder %v589, %v611
        %vm648 = vcmp.eq.s32.totalorder %v590, %v607
        %vm649 = vcmp.eq.s32.totalorder %v590, %v611
        %vm650 = vcmp.eq.s32.totalorder %v591, %v607
        %vm651 = vcmp.eq.s32.totalorder %v591, %v611
        %vm652 = vcmp.eq.s32.totalorder %v592, %v607
        %vm653 = vcmp.eq.s32.totalorder %v592, %v611
        %vm654 = vcmp.eq.s32.totalorder %v593, %v607
        %vm655 = vcmp.eq.s32.totalorder %v593, %v611
        %vm656 = vcmp.eq.s32.totalorder %v594, %v607
        %vm657 = vcmp.eq.s32.totalorder %v594, %v611
        %vm658 = vcmp.eq.s32.totalorder %v595, %v607
        %vm659 = vcmp.eq.s32.totalorder %v595, %v611
        %vm660 = vcmp.eq.s32.totalorder %v596, %v607
        %vm661 = vcmp.eq.s32.totalorder %v596, %v611
        %vm662 = vcmp.eq.s32.totalorder %v597, %v607
        %vm663 = vcmp.eq.s32.totalorder %v597, %v611
        %vm664 = vcmp.eq.s32.totalorder %v598, %v607
        %vm665 = vcmp.eq.s32.totalorder %v598, %v611
        %vm666 = vcmp.eq.s32.totalorder %v599, %v607
        %vm667 = vcmp.eq.s32.totalorder %v599, %v611
        %vm668 = vcmp.eq.s32.totalorder %v600, %v607
        %vm669 = vcmp.eq.s32.totalorder %v600, %v611
        %vm670 = vcmp.eq.s32.totalorder %v601, %v607
        %vm671 = vcmp.eq.s32.totalorder %v601, %v611
        %vm672 = vcmp.eq.s32.totalorder %v602, %v607
        %vm673 = vcmp.eq.s32.totalorder %v602, %v611
        %vm674 = vcmp.eq.s32.totalorder %v603, %v607
        %vm675 = vcmp.eq.s32.totalorder %v603, %v611
        %v676 = vsel %vm612, 1, 0
        %v677 = vsel %vm613, 1, 0
        %v678 = vsel %vm614, 1, 0
        %v679 = vsel %vm615, 1, 0
        %v680 = vsel %vm616, 1, 0
        %v681 = vsel %vm617, 1, 0
        %v682 = vsel %vm618, 1, 0
        %v683 = vsel %vm619, 1, 0
        %v684 = vsel %vm620, 1, 0
        %v685 = vsel %vm621, 1, 0
        %v686 = vsel %vm622, 1, 0
        %v687 = vsel %vm623, 1, 0
        %v688 = vsel %vm624, 1, 0
        %v689 = vsel %vm625, 1, 0
        %v690 = vsel %vm626, 1, 0
        %v691 = vsel %vm627, 1, 0
        %v692 = vsel %vm628, 1, 0
        %v693 = vsel %vm629, 1, 0
        %v694 = vsel %vm630, 1, 0
        %v695 = vsel %vm631, 1, 0
        %v696 = vsel %vm632, 1, 0
        %v697 = vsel %vm633, 1, 0
        %v698 = vsel %vm634, 1, 0
        %v699 = vsel %vm635, 1, 0
        %v700 = vsel %vm636, 1, 0
        %v701 = vsel %vm637, 1, 0
        %v702 = vsel %vm638, 1, 0
        %v703 = vsel %vm639, 1, 0
        %v704 = vsel %vm640, 1, 0
        %v705 = vsel %vm641, 1, 0
        %v706 = vsel %vm642, 1, 0
        %v707 = vsel %vm643, 1, 0
        %v708 = vsel %vm644, 1, 0
        %v709 = vsel %vm645, 1, 0
        %v710 = vsel %vm646, 1, 0
        %v711 = vsel %vm647, 1, 0
        %v712 = vsel %vm648, 1, 0
        %v713 = vsel %vm649, 1, 0
        %v714 = vsel %vm650, 1, 0
        %v715 = vsel %vm651, 1, 0
        %v716 = vsel %vm652, 1, 0
        %v717 = vsel %vm653, 1, 0
        %v718 = vsel %vm654, 1, 0
        %v719 = vsel %vm655, 1, 0
        %v720 = vsel %vm656, 1, 0
        %v721 = vsel %vm657, 1, 0
        %v722 = vsel %vm658, 1, 0
        %v723 = vsel %vm659, 1, 0
        %v724 = vsel %vm660, 1, 0
        %v725 = vsel %vm661, 1, 0
        %v726 = vsel %vm662, 1, 0
        %v727 = vsel %vm663, 1, 0
        %v728 = vsel %vm664, 1, 0
        %v729 = vsel %vm665, 1, 0
        %v730 = vsel %vm666, 1, 0
        %v731 = vsel %vm667, 1, 0
        %v732 = vsel %vm668, 1, 0
        %v733 = vsel %vm669, 1, 0
        %v734 = vsel %vm670, 1, 0
        %v735 = vsel %vm671, 1, 0
        %v736 = vsel %vm672, 1, 0
        %v737 = vsel %vm673, 1, 0
        %v738 = vsel %vm674, 1, 0
        %v739 = vsel %vm675, 1, 0
        %v740 = vcvt.s32.f32 %v676
        %v741 = vcvt.s32.f32 %v677
        %v742 = vcvt.s32.f32 %v678
        %v743 = vcvt.s32.f32 %v679
        %v744 = vcvt.s32.f32 %v680
        %v745 = vcvt.s32.f32 %v681
        %v746 = vcvt.s32.f32 %v682
        %v747 = vcvt.s32.f32 %v683
        %v748 = vcvt.s32.f32 %v684
        %v749 = vcvt.s32.f32 %v685
        %v750 = vcvt.s32.f32 %v686
        %v751 = vcvt.s32.f32 %v687
        %v752 = vcvt.s32.f32 %v688
        %v753 = vcvt.s32.f32 %v689
        %v754 = vcvt.s32.f32 %v690
        %v755 = vcvt.s32.f32 %v691
        %v756 = vcvt.s32.f32 %v692
        %v757 = vcvt.s32.f32 %v693
        %v758 = vcvt.s32.f32 %v694
        %v759 = vcvt.s32.f32 %v695
        %v760 = vcvt.s32.f32 %v696
        %v761 = vcvt.s32.f32 %v697
        %v762 = vcvt.s32.f32 %v698
        %v763 = vcvt.s32.f32 %v699
        %v764 = vcvt.s32.f32 %v700
        %v765 = vcvt.s32.f32 %v701
        %v766 = vcvt.s32.f32 %v702
        %v767 = vcvt.s32.f32 %v703
        %v768 = vcvt.s32.f32 %v704
        %v769 = vcvt.s32.f32 %v705
        %v770 = vcvt.s32.f32 %v706
        %v771 = vcvt.s32.f32 %v707
        %v772 = vcvt.s32.f32 %v708
        %v773 = vcvt.s32.f32 %v709
        %v774 = vcvt.s32.f32 %v710
        %v775 = vcvt.s32.f32 %v711
        %v776 = vcvt.s32.f32 %v712
        %v777 = vcvt.s32.f32 %v713
        %v778 = vcvt.s32.f32 %v714
        %v779 = vcvt.s32.f32 %v715
        %v780 = vcvt.s32.f32 %v716
        %v781 = vcvt.s32.f32 %v717
        %v782 = vcvt.s32.f32 %v718
        %v783 = vcvt.s32.f32 %v719
        %v784 = vcvt.s32.f32 %v720
        %v785 = vcvt.s32.f32 %v721
        %v786 = vcvt.s32.f32 %v722
        %v787 = vcvt.s32.f32 %v723
        %v788 = vcvt.s32.f32 %v724
        %v789 = vcvt.s32.f32 %v725
        %v790 = vcvt.s32.f32 %v726
        %v791 = vcvt.s32.f32 %v727
        %v792 = vcvt.s32.f32 %v728
        %v793 = vcvt.s32.f32 %v729
        %v794 = vcvt.s32.f32 %v730
        %v795 = vcvt.s32.f32 %v731
        %v796 = vcvt.s32.f32 %v732
        %v797 = vcvt.s32.f32 %v733
        %v798 = vcvt.s32.f32 %v734
        %v799 = vcvt.s32.f32 %v735
        %v800 = vcvt.s32.f32 %v736
        %v801 = vcvt.s32.f32 %v737
        %v802 = vcvt.s32.f32 %v738
        %v803 = vcvt.s32.f32 %v739
        %v804 = vpack.c.bf16 %v742, %v740
        %v805 = vpack.c.bf16 %v743, %v741
        %v806 = vpack.c.bf16 %v746, %v744
        %v807 = vpack.c.bf16 %v747, %v745
        %v808 = vpack.c.bf16 %v750, %v748
        %v809 = vpack.c.bf16 %v751, %v749
        %v810 = vpack.c.bf16 %v754, %v752
        %v811 = vpack.c.bf16 %v755, %v753
        %v812 = vpack.c.bf16 %v758, %v756
        %v813 = vpack.c.bf16 %v759, %v757
        %v814 = vpack.c.bf16 %v762, %v760
        %v815 = vpack.c.bf16 %v763, %v761
        %v816 = vpack.c.bf16 %v766, %v764
        %v817 = vpack.c.bf16 %v767, %v765
        %v818 = vpack.c.bf16 %v770, %v768
        %v819 = vpack.c.bf16 %v771, %v769
        %v820 = vpack.c.bf16 %v774, %v772
        %v821 = vpack.c.bf16 %v775, %v773
        %v822 = vpack.c.bf16 %v778, %v776
        %v823 = vpack.c.bf16 %v779, %v777
        %v824 = vpack.c.bf16 %v782, %v780
        %v825 = vpack.c.bf16 %v783, %v781
        %v826 = vpack.c.bf16 %v786, %v784
        %v827 = vpack.c.bf16 %v787, %v785
        %v828 = vpack.c.bf16 %v790, %v788
        %v829 = vpack.c.bf16 %v791, %v789
        %v830 = vpack.c.bf16 %v794, %v792
        %v831 = vpack.c.bf16 %v795, %v793
        %v832 = vpack.c.bf16 %v798, %v796
        %v833 = vpack.c.bf16 %v799, %v797
        %v834 = vpack.c.bf16 %v802, %v800
        %v835 = vpack.c.bf16 %v803, %v801
        %v836 = vld [vmem:[#allocation2] sm:$0xff]
        %v837 = vld [vmem:[#allocation2 + $0x8] sm:$0xff]
        %v838 = vld [vmem:[#allocation2 + $0x10] sm:$0xff]
        %v839 = vld [vmem:[#allocation2 + $0x18] sm:$0xff]
        %v840 = vld [vmem:[#allocation2 + $0x20] sm:$0xff]
        %v841 = vld [vmem:[#allocation2 + $0x28] sm:$0xff]
        %v842 = vld [vmem:[#allocation2 + $0x30] sm:$0xff]
        %v843 = vld [vmem:[#allocation2 + $0x38] sm:$0xff]
        %v844 = vld [vmem:[#allocation2 + $0x40] sm:$0xff]
        %v845 = vld [vmem:[#allocation2 + $0x48] sm:$0xff]
        %v846 = vld [vmem:[#allocation2 + $0x50] sm:$0xff]
        %v847 = vld [vmem:[#allocation2 + $0x58] sm:$0xff]
        %v848 = vld [vmem:[#allocation2 + $0x60] sm:$0xff]
        %v849 = vld [vmem:[#allocation2 + $0x68] sm:$0xff]
        %v850 = vld [vmem:[#allocation2 + $0x70] sm:$0xff]
        %v851 = vld [vmem:[#allocation2 + $0x78] sm:$0xff]
        %v852 = vld [vmem:[#allocation2 + $0x80] sm:$0xff]
        %v853 = vld [vmem:[#allocation2 + $0x88] sm:$0xff]
        %v854 = vld [vmem:[#allocation2 + $0x90] sm:$0xff]
        %v855 = vld [vmem:[#allocation2 + $0x98] sm:$0xff]
        %v856 = vld [vmem:[#allocation2 + $0xa0] sm:$0xff]
        %v857 = vld [vmem:[#allocation2 + $0xa8] sm:$0xff]
        %v858 = vld [vmem:[#allocation2 + $0xb0] sm:$0xff]
        %v859 = vld [vmem:[#allocation2 + $0xb8] sm:$0xff]
        %v860 = vld [vmem:[#allocation2 + $0xc0] sm:$0xff]
        %v861 = vld [vmem:[#allocation2 + $0xc8] sm:$0xff]
        %v862 = vld [vmem:[#allocation2 + $0xd0] sm:$0xff]
        %v863 = vld [vmem:[#allocation2 + $0xd8] sm:$0xff]
        %v864 = vld [vmem:[#allocation2 + $0xe0] sm:$0xff]
        %v865 = vld [vmem:[#allocation2 + $0xe8] sm:$0xff]
        %v866 = vld [vmem:[#allocation2 + $0xf0] sm:$0xff]
        %v867 = vld [vmem:[#allocation2 + $0xf8] sm:$0xff]
        %v868 = vld [vmem:[%s502] sm:$0xf]
        %v869 = vld [vmem:[%s502 + $0x4] sm:$0xf]
        %v870 = vld [vmem:[%s502 + $0x8] sm:$0xf]
        %v871 = vld [vmem:[%s502 + $0xc] sm:$0xf]
        %v872 = vld [vmem:[%s502 + $0x10] sm:$0xf]
        %v873 = vld [vmem:[%s502 + $0x14] sm:$0xf]
        %v874 = vld [vmem:[%s502 + $0x18] sm:$0xf]
        %v875 = vld [vmem:[%s502 + $0x1c] sm:$0xf]
        %v876 = vld [vmem:[%s502 + $0x20] sm:$0xf]
        %v877 = vld [vmem:[%s502 + $0x24] sm:$0xf]
        %v878 = vld [vmem:[%s502 + $0x28] sm:$0xf]
        %v879 = vld [vmem:[%s502 + $0x2c] sm:$0xf]
        %v880 = vld [vmem:[%s502 + $0x30] sm:$0xf]
        %v881 = vld [vmem:[%s502 + $0x34] sm:$0xf]
        %v882 = vld [vmem:[%s502 + $0x38] sm:$0xf]
        %v883 = vld [vmem:[%s502 + $0x3c] sm:$0xf]
        %v884 = vld [vmem:[%s502 + $0x40] sm:$0xf]
        %v885 = vld [vmem:[%s502 + $0x44] sm:$0xf]
        %v886 = vld [vmem:[%s502 + $0x48] sm:$0xf]
        %v887 = vld [vmem:[%s502 + $0x4c] sm:$0xf]
        %v888 = vld [vmem:[%s502 + $0x50] sm:$0xf]
        %v889 = vld [vmem:[%s502 + $0x54] sm:$0xf]
        %v890 = vld [vmem:[%s502 + $0x58] sm:$0xf]
        %v891 = vld [vmem:[%s502 + $0x5c] sm:$0xf]
        %v892 = vld [vmem:[%s502 + $0x60] sm:$0xf]
        %v893 = vld [vmem:[%s502 + $0x64] sm:$0xf]
        %v894 = vld [vmem:[%s502 + $0x68] sm:$0xf]
        %v895 = vld [vmem:[%s502 + $0x6c] sm:$0xf]
        %v896 = vld [vmem:[%s502 + $0x70] sm:$0xf]
        %v897 = vld [vmem:[%s502 + $0x74] sm:$0xf]
        %v898 = vld [vmem:[%s502 + $0x78] sm:$0xf]
        %v899 = vld [vmem:[%s502 + $0x7c] sm:$0xf]
        %v932 = vunpack.c.l.b16 %v868
        %v933 = vunpack.c.l.b16 %v869
        %v934 = vunpack.c.l.b16 %v870
        %v935 = vunpack.c.l.b16 %v871
        %v936 = vunpack.c.l.b16 %v872
        %v937 = vunpack.c.l.b16 %v873
        %v938 = vunpack.c.l.b16 %v874
        %v939 = vunpack.c.l.b16 %v875
        %v940 = vunpack.c.l.b16 %v876
        %v941 = vunpack.c.l.b16 %v877
        %v942 = vunpack.c.l.b16 %v878
        %v943 = vunpack.c.l.b16 %v879
        %v944 = vunpack.c.l.b16 %v880
        %v945 = vunpack.c.l.b16 %v881
        %v946 = vunpack.c.l.b16 %v882
        %v947 = vunpack.c.l.b16 %v883
        %v948 = vunpack.c.l.b16 %v884
        %v949 = vunpack.c.l.b16 %v885
        %v950 = vunpack.c.l.b16 %v886
        %v951 = vunpack.c.l.b16 %v887
        %v952 = vunpack.c.l.b16 %v888
        %v953 = vunpack.c.l.b16 %v889
        %v954 = vunpack.c.l.b16 %v890
        %v955 = vunpack.c.l.b16 %v891
        %v956 = vunpack.c.l.b16 %v892
        %v957 = vunpack.c.l.b16 %v893
        %v958 = vunpack.c.l.b16 %v894
        %v959 = vunpack.c.l.b16 %v895
        %v960 = vunpack.c.l.b16 %v896
        %v961 = vunpack.c.l.b16 %v897
        %v962 = vunpack.c.l.b16 %v898
        %v963 = vunpack.c.l.b16 %v899
        %v964 = vpack.c.b16 %v933, %v932
        %v965 = vpack.c.b16 %v935, %v934
        %v966 = vpack.c.b16 %v937, %v936
        %v967 = vpack.c.b16 %v939, %v938
        %v968 = vpack.c.b16 %v941, %v940
        %v969 = vpack.c.b16 %v943, %v942
        %v970 = vpack.c.b16 %v945, %v944
        %v971 = vpack.c.b16 %v947, %v946
        %v972 = vpack.c.b16 %v949, %v948
        %v973 = vpack.c.b16 %v951, %v950
        %v974 = vpack.c.b16 %v953, %v952
        %v975 = vpack.c.b16 %v955, %v954
        %v976 = vpack.c.b16 %v957, %v956
        %v977 = vpack.c.b16 %v959, %v958
        %v978 = vpack.c.b16 %v961, %v960
        %v979 = vpack.c.b16 %v963, %v962
        %996 = vmatprep.subr.bf16.mxu0 0
        %997 = vmatpush1.bf16.msra.mxu0 %v964
        %998 = vmatprep.subr.bf16.mxu0 0
        %999 = vmatpush1.bf16.msra.mxu0 %v965
        %1000 = vmatprep.subr.bf16.mxu0 0
        %1001 = vmatpush1.bf16.msra.mxu0 %v966
        %1002 = vmatprep.subr.bf16.mxu0 0
        %1003 = vmatpush1.bf16.msra.mxu0 %v967
        %1004 = vmatprep.subr.bf16.mxu0 0
        %1005 = vmatpush1.bf16.msra.mxu0 %v968
        %1006 = vmatprep.subr.bf16.mxu0 0
        %1007 = vmatpush1.bf16.msra.mxu0 %v969
        %1008 = vmatprep.subr.bf16.mxu0 0
        %1009 = vmatpush1.bf16.msra.mxu0 %v970
        %1010 = vmatprep.subr.bf16.mxu0 0
        %1011 = vmatpush1.bf16.msra.mxu0 %v971
        %1012 = vmatprep.subr.bf16.mxu0 0
        %1013 = vmatpush1.bf16.msra.mxu0 %v972
        %1014 = vmatprep.subr.bf16.mxu0 0
        %1015 = vmatpush1.bf16.msra.mxu0 %v973
        %1016 = vmatprep.subr.bf16.mxu0 0
        %1017 = vmatpush1.bf16.msra.mxu0 %v974
        %1018 = vmatprep.subr.bf16.mxu0 0
        %1019 = vmatpush1.bf16.msra.mxu0 %v975
        %1020 = vmatprep.subr.bf16.mxu0 0
        %1021 = vmatpush1.bf16.msra.mxu0 %v976
        %1022 = vmatprep.subr.bf16.mxu0 0
        %1023 = vmatpush1.bf16.msra.mxu0 %v977
        %1024 = vmatprep.subr.bf16.mxu0 0
        %1025 = vmatpush1.bf16.msra.mxu0 %v978
        %1026 = vmatprep.subr.bf16.mxu0 0
        %1027 = vmatpush1.bf16.msra.mxu0 %v979
        %1028 = vmatprep.mubr.bf16.mxu0 %v805
        %1029 = vmatmul.mubr.bf16.gmra.mrb[0].mxu0 %v804
        %v1030 = vpop.f32.mrb[0].mxu0
        %v1031 = vadd.f32 0.0, %v1030
        %v1032 = vpop.f32.mrb[0].mxu0
        %v1033 = vpop.f32.mrb[0].mxu0
        %v1034 = vadd.f32 0.0, %v1033
        %v1035 = vpop.f32.mrb[0].mxu0
        %1036 = vmatprep.mubr.bf16.mxu0 %v807
        %1037 = vmatmul.mubr.bf16.gmra.mrb[0].mxu0 %v806
        %v1038 = vpop.f32.mrb[0].mxu0
        %v1039 = vadd.f32 0.0, %v1038
        %v1040 = vpop.f32.mrb[0].mxu0
        %v1041 = vpop.f32.mrb[0].mxu0
        %v1042 = vadd.f32 0.0, %v1041
        %v1043 = vpop.f32.mrb[0].mxu0
        %1044 = vmatprep.mubr.bf16.mxu0 %v809
        %1045 = vmatmul.mubr.bf16.gmra.mrb[0].mxu0 %v808
        %v1046 = vpop.f32.mrb[0].mxu0
        %v1047 = vadd.f32 0.0, %v1046
        %v1048 = vpop.f32.mrb[0].mxu0
        %v1049 = vpop.f32.mrb[0].mxu0
        %v1050 = vadd.f32 0.0, %v1049
        %v1051 = vpop.f32.mrb[0].mxu0
        %1052 = vmatprep.mubr.bf16.mxu0 %v811
        %1053 = vmatmul.mubr.bf16.gmra.mrb[0].mxu0 %v810
        %v1054 = vpop.f32.mrb[0].mxu0
        %v1055 = vadd.f32 0.0, %v1054
        %v1056 = vpop.f32.mrb[0].mxu0
        %v1057 = vpop.f32.mrb[0].mxu0
        %v1058 = vadd.f32 0.0, %v1057
        %v1059 = vpop.f32.mrb[0].mxu0
        %1060 = vmatprep.mubr.bf16.mxu0 %v813
        %1061 = vmatmul.mubr.bf16.gmra.mrb[0].mxu0 %v812
        %v1062 = vpop.f32.mrb[0].mxu0
        %v1063 = vadd.f32 0.0, %v1062
        %v1064 = vpop.f32.mrb[0].mxu0
        %v1065 = vpop.f32.mrb[0].mxu0
        %v1066 = vadd.f32 0.0, %v1065
        %v1067 = vpop.f32.mrb[0].mxu0
        %1068 = vmatprep.mubr.bf16.mxu0 %v815
        %1069 = vmatmul.mubr.bf16.gmra.mrb[0].mxu0 %v814
        %v1070 = vpop.f32.mrb[0].mxu0
        %v1071 = vadd.f32 0.0, %v1070
        %v1072 = vpop.f32.mrb[0].mxu0
        %v1073 = vpop.f32.mrb[0].mxu0
        %v1074 = vadd.f32 0.0, %v1073
        %v1075 = vpop.f32.mrb[0].mxu0
        %1076 = vmatprep.mubr.bf16.mxu0 %v817
        %1077 = vmatmul.mubr.bf16.gmra.mrb[0].mxu0 %v816
        %v1078 = vpop.f32.mrb[0].mxu0
        %v1079 = vadd.f32 0.0, %v1078
        %v1080 = vpop.f32.mrb[0].mxu0
        %v1081 = vpop.f32.mrb[0].mxu0
        %v1082 = vadd.f32 0.0, %v1081
        %v1083 = vpop.f32.mrb[0].mxu0
        %1084 = vmatprep.mubr.bf16.mxu0 %v819
        %1085 = vmatmul.mubr.bf16.gmra.mrb[0].mxu0 %v818
        %v1086 = vpop.f32.mrb[0].mxu0
        %v1087 = vadd.f32 0.0, %v1086
        %v1088 = vpop.f32.mrb[0].mxu0
        %v1089 = vpop.f32.mrb[0].mxu0
        %v1090 = vadd.f32 0.0, %v1089
        %v1091 = vpop.f32.mrb[0].mxu0
        %1092 = vmatprep.mubr.bf16.mxu0 %v821
        %1093 = vmatmul.mubr.bf16.gmra.mrb[0].mxu0 %v820
        %v1094 = vpop.f32.mrb[0].mxu0
        %v1095 = vadd.f32 0.0, %v1094
        %v1096 = vpop.f32.mrb[0].mxu0
        %v1097 = vpop.f32.mrb[0].mxu0
        %v1098 = vadd.f32 0.0, %v1097
        %v1099 = vpop.f32.mrb[0].mxu0
        %1100 = vmatprep.mubr.bf16.mxu0 %v823
        %1101 = vmatmul.mubr.bf16.gmra.mrb[0].mxu0 %v822
        %v1102 = vpop.f32.mrb[0].mxu0
        %v1103 = vadd.f32 0.0, %v1102
        %v1104 = vpop.f32.mrb[0].mxu0
        %v1105 = vpop.f32.mrb[0].mxu0
        %v1106 = vadd.f32 0.0, %v1105
        %v1107 = vpop.f32.mrb[0].mxu0
        %1108 = vmatprep.mubr.bf16.mxu0 %v825
        %1109 = vmatmul.mubr.bf16.gmra.mrb[0].mxu0 %v824
        %v1110 = vpop.f32.mrb[0].mxu0
        %v1111 = vadd.f32 0.0, %v1110
        %v1112 = vpop.f32.mrb[0].mxu0
        %v1113 = vpop.f32.mrb[0].mxu0
        %v1114 = vadd.f32 0.0, %v1113
        %v1115 = vpop.f32.mrb[0].mxu0
        %1116 = vmatprep.mubr.bf16.mxu0 %v827
        %1117 = vmatmul.mubr.bf16.gmra.mrb[0].mxu0 %v826
        %v1118 = vpop.f32.mrb[0].mxu0
        %v1119 = vadd.f32 0.0, %v1118
        %v1120 = vpop.f32.mrb[0].mxu0
        %v1121 = vpop.f32.mrb[0].mxu0
        %v1122 = vadd.f32 0.0, %v1121
        %v1123 = vpop.f32.mrb[0].mxu0
        %1124 = vmatprep.mubr.bf16.mxu0 %v829
        %1125 = vmatmul.mubr.bf16.gmra.mrb[0].mxu0 %v828
        %v1126 = vpop.f32.mrb[0].mxu0
        %v1127 = vadd.f32 0.0, %v1126
        %v1128 = vpop.f32.mrb[0].mxu0
        %v1129 = vpop.f32.mrb[0].mxu0
        %v1130 = vadd.f32 0.0, %v1129
        %v1131 = vpop.f32.mrb[0].mxu0
        %1132 = vmatprep.mubr.bf16.mxu0 %v831
        %1133 = vmatmul.mubr.bf16.gmra.mrb[0].mxu0 %v830
        %v1134 = vpop.f32.mrb[0].mxu0
        %v1135 = vadd.f32 0.0, %v1134
        %v1136 = vpop.f32.mrb[0].mxu0
        %v1137 = vpop.f32.mrb[0].mxu0
        %v1138 = vadd.f32 0.0, %v1137
        %v1139 = vpop.f32.mrb[0].mxu0
        %1140 = vmatprep.mubr.bf16.mxu0 %v833
        %1141 = vmatmul.mubr.bf16.gmra.mrb[0].mxu0 %v832
        %v1142 = vpop.f32.mrb[0].mxu0
        %v1143 = vadd.f32 0.0, %v1142
        %v1144 = vpop.f32.mrb[0].mxu0
        %v1145 = vpop.f32.mrb[0].mxu0
        %v1146 = vadd.f32 0.0, %v1145
        %v1147 = vpop.f32.mrb[0].mxu0
        %1148 = vmatprep.mubr.bf16.mxu0 %v835
        %1149 = vmatmul.mubr.bf16.gmra.mrb[0].mxu0 %v834
        %v1150 = vpop.f32.mrb[0].mxu0
        %v1151 = vadd.f32 0.0, %v1150
        %v1152 = vpop.f32.mrb[0].mxu0
        %v1153 = vpop.f32.mrb[0].mxu0
        %v1154 = vadd.f32 0.0, %v1153
        %v1155 = vpop.f32.mrb[0].mxu0
        %1156 = vdwg.mxu0
        %v1157 = vadd.f32 %v836, %v1031
        %v1158 = vadd.f32 %v837, %v1034
        %v1159 = vadd.f32 %v838, %v1039
        %v1160 = vadd.f32 %v839, %v1042
        %v1161 = vadd.f32 %v840, %v1047
        %v1162 = vadd.f32 %v841, %v1050
        %v1163 = vadd.f32 %v842, %v1055
        %v1164 = vadd.f32 %v843, %v1058
        %v1165 = vadd.f32 %v844, %v1063
        %v1166 = vadd.f32 %v845, %v1066
        %v1167 = vadd.f32 %v846, %v1071
        %v1168 = vadd.f32 %v847, %v1074
        %v1169 = vadd.f32 %v848, %v1079
        %v1170 = vadd.f32 %v849, %v1082
        %v1171 = vadd.f32 %v850, %v1087
        %v1172 = vadd.f32 %v851, %v1090
        %v1173 = vadd.f32 %v852, %v1095
        %v1174 = vadd.f32 %v853, %v1098
        %v1175 = vadd.f32 %v854, %v1103
        %v1176 = vadd.f32 %v855, %v1106
        %v1177 = vadd.f32 %v856, %v1111
        %v1178 = vadd.f32 %v857, %v1114
        %v1179 = vadd.f32 %v858, %v1119
        %v1180 = vadd.f32 %v859, %v1122
        %v1181 = vadd.f32 %v860, %v1127
        %v1182 = vadd.f32 %v861, %v1130
        %v1183 = vadd.f32 %v862, %v1135
        %v1184 = vadd.f32 %v863, %v1138
        %v1185 = vadd.f32 %v864, %v1143
        %v1186 = vadd.f32 %v865, %v1146
        %v1187 = vadd.f32 %v866, %v1151
        %v1188 = vadd.f32 %v867, %v1154
        %vm1189 = vcmask 269312
        %1190 = vst.msk [vmem:[#allocation2] sm:$0xff] %vm1189, %v1157
        %1191 = vst.msk [vmem:[#allocation2 + $0x8] sm:$0xff] %vm1189, %v1158
        %1192 = vst.msk [vmem:[#allocation2 + $0x10] sm:$0xff] %vm1189, %v1159
        %1193 = vst.msk [vmem:[#allocation2 + $0x18] sm:$0xff] %vm1189, %v1160
        %1194 = vst.msk [vmem:[#allocation2 + $0x20] sm:$0xff] %vm1189, %v1161
        %1195 = vst.msk [vmem:[#allocation2 + $0x28] sm:$0xff] %vm1189, %v1162
        %1196 = vst.msk [vmem:[#allocation2 + $0x30] sm:$0xff] %vm1189, %v1163
        %1197 = vst.msk [vmem:[#allocation2 + $0x38] sm:$0xff] %vm1189, %v1164
        %1198 = vst.msk [vmem:[#allocation2 + $0x40] sm:$0xff] %vm1189, %v1165
        %1199 = vst.msk [vmem:[#allocation2 + $0x48] sm:$0xff] %vm1189, %v1166
        %1200 = vst.msk [vmem:[#allocation2 + $0x50] sm:$0xff] %vm1189, %v1167
        %1201 = vst.msk [vmem:[#allocation2 + $0x58] sm:$0xff] %vm1189, %v1168
        %1202 = vst.msk [vmem:[#allocation2 + $0x60] sm:$0xff] %vm1189, %v1169
        %1203 = vst.msk [vmem:[#allocation2 + $0x68] sm:$0xff] %vm1189, %v1170
        %1204 = vst.msk [vmem:[#allocation2 + $0x70] sm:$0xff] %vm1189, %v1171
        %1205 = vst.msk [vmem:[#allocation2 + $0x78] sm:$0xff] %vm1189, %v1172
        %1206 = vst.msk [vmem:[#allocation2 + $0x80] sm:$0xff] %vm1189, %v1173
        %1207 = vst.msk [vmem:[#allocation2 + $0x88] sm:$0xff] %vm1189, %v1174
        %1208 = vst.msk [vmem:[#allocation2 + $0x90] sm:$0xff] %vm1189, %v1175
        %1209 = vst.msk [vmem:[#allocation2 + $0x98] sm:$0xff] %vm1189, %v1176
        %1210 = vst.msk [vmem:[#allocation2 + $0xa0] sm:$0xff] %vm1189, %v1177
        %1211 = vst.msk [vmem:[#allocation2 + $0xa8] sm:$0xff] %vm1189, %v1178
        %1212 = vst.msk [vmem:[#allocation2 + $0xb0] sm:$0xff] %vm1189, %v1179
        %1213 = vst.msk [vmem:[#allocation2 + $0xb8] sm:$0xff] %vm1189, %v1180
        %1214 = vst.msk [vmem:[#allocation2 + $0xc0] sm:$0xff] %vm1189, %v1181
        %1215 = vst.msk [vmem:[#allocation2 + $0xc8] sm:$0xff] %vm1189, %v1182
        %1216 = vst.msk [vmem:[#allocation2 + $0xd0] sm:$0xff] %vm1189, %v1183
        %1217 = vst.msk [vmem:[#allocation2 + $0xd8] sm:$0xff] %vm1189, %v1184
        %1218 = vst.msk [vmem:[#allocation2 + $0xe0] sm:$0xff] %vm1189, %v1185
        %1219 = vst.msk [vmem:[#allocation2 + $0xe8] sm:$0xff] %vm1189, %v1186
        %1220 = vst.msk [vmem:[#allocation2 + $0xf0] sm:$0xff] %vm1189, %v1187
        %1221 = vst.msk [vmem:[#allocation2 + $0xf8] sm:$0xff] %vm1189, %v1188
      $region76: #{tpu_custom_call.1} parent=67 // pred_fallthru
        _
      %p1222 = scmp.eq.s32.totalorder %s40, 1
      // Predicated region
      $region77: #{tpu_custom_call.1} parent=67 // pred_check
        %p1223 = pneg %p1222
      $region78: #{tpu_custom_call.1} parent=67 // pred_check_branch
        %1225 = sbr.rel (%p1223) target = $region80
      $region79: #{tpu_custom_call.1} parent=67 // pred_region
        %v1226 = vld [vmem:[#allocation2] sm:$0xff]
        %v1227 = vld [vmem:[#allocation2 + $0x8] sm:$0xff]
        %v1228 = vld [vmem:[#allocation2 + $0x10] sm:$0xff]
        %v1229 = vld [vmem:[#allocation2 + $0x18] sm:$0xff]
        %v1230 = vld [vmem:[#allocation2 + $0x20] sm:$0xff]
        %v1231 = vld [vmem:[#allocation2 + $0x28] sm:$0xff]
        %v1232 = vld [vmem:[#allocation2 + $0x30] sm:$0xff]
        %v1233 = vld [vmem:[#allocation2 + $0x38] sm:$0xff]
        %v1234 = vld [vmem:[#allocation2 + $0x40] sm:$0xff]
        %v1235 = vld [vmem:[#allocation2 + $0x48] sm:$0xff]
        %v1236 = vld [vmem:[#allocation2 + $0x50] sm:$0xff]
        %v1237 = vld [vmem:[#allocation2 + $0x58] sm:$0xff]
        %v1238 = vld [vmem:[#allocation2 + $0x60] sm:$0xff]
        %v1239 = vld [vmem:[#allocation2 + $0x68] sm:$0xff]
        %v1240 = vld [vmem:[#allocation2 + $0x70] sm:$0xff]
        %v1241 = vld [vmem:[#allocation2 + $0x78] sm:$0xff]
        %v1242 = vld [vmem:[#allocation2 + $0x80] sm:$0xff]
        %v1243 = vld [vmem:[#allocation2 + $0x88] sm:$0xff]
        %v1244 = vld [vmem:[#allocation2 + $0x90] sm:$0xff]
        %v1245 = vld [vmem:[#allocation2 + $0x98] sm:$0xff]
        %v1246 = vld [vmem:[#allocation2 + $0xa0] sm:$0xff]
        %v1247 = vld [vmem:[#allocation2 + $0xa8] sm:$0xff]
        %v1248 = vld [vmem:[#allocation2 + $0xb0] sm:$0xff]
        %v1249 = vld [vmem:[#allocation2 + $0xb8] sm:$0xff]
        %v1250 = vld [vmem:[#allocation2 + $0xc0] sm:$0xff]
        %v1251 = vld [vmem:[#allocation2 + $0xc8] sm:$0xff]
        %v1252 = vld [vmem:[#allocation2 + $0xd0] sm:$0xff]
        %v1253 = vld [vmem:[#allocation2 + $0xd8] sm:$0xff]
        %v1254 = vld [vmem:[#allocation2 + $0xe0] sm:$0xff]
        %v1255 = vld [vmem:[#allocation2 + $0xe8] sm:$0xff]
        %v1256 = vld [vmem:[#allocation2 + $0xf0] sm:$0xff]
        %v1257 = vld [vmem:[#allocation2 + $0xf8] sm:$0xff]
        %v1258 = vmax.f32 %v1226, 1.0
        %v1259 = vmax.f32 %v1227, 1.0
        %v1260 = vmax.f32 %v1228, 1.0
        %v1261 = vmax.f32 %v1229, 1.0
        %v1262 = vmax.f32 %v1230, 1.0
        %v1263 = vmax.f32 %v1231, 1.0
        %v1264 = vmax.f32 %v1232, 1.0
        %v1265 = vmax.f32 %v1233, 1.0
        %v1266 = vmax.f32 %v1234, 1.0
        %v1267 = vmax.f32 %v1235, 1.0
        %v1268 = vmax.f32 %v1236, 1.0
        %v1269 = vmax.f32 %v1237, 1.0
        %v1270 = vmax.f32 %v1238, 1.0
        %v1271 = vmax.f32 %v1239, 1.0
        %v1272 = vmax.f32 %v1240, 1.0
        %v1273 = vmax.f32 %v1241, 1.0
        %v1274 = vmax.f32 %v1242, 1.0
        %v1275 = vmax.f32 %v1243, 1.0
        %v1276 = vmax.f32 %v1244, 1.0
        %v1277 = vmax.f32 %v1245, 1.0
        %v1278 = vmax.f32 %v1246, 1.0
        %v1279 = vmax.f32 %v1247, 1.0
        %v1280 = vmax.f32 %v1248, 1.0
        %v1281 = vmax.f32 %v1249, 1.0
        %v1282 = vmax.f32 %v1250, 1.0
        %v1283 = vmax.f32 %v1251, 1.0
        %v1284 = vmax.f32 %v1252, 1.0
        %v1285 = vmax.f32 %v1253, 1.0
        %v1286 = vmax.f32 %v1254, 1.0
        %v1287 = vmax.f32 %v1255, 1.0
        %v1288 = vmax.f32 %v1256, 1.0
        %v1289 = vmax.f32 %v1257, 1.0
        %v1290 = vrcp.pop %v1258
        %v1291 = vmul.f32 1.0, %v1290
        %v1292 = vrcp.pop %v1259
        %v1293 = vmul.f32 1.0, %v1292
        %v1294 = vrcp.pop %v1260
        %v1295 = vmul.f32 1.0, %v1294
        %v1296 = vrcp.pop %v1261
        %v1297 = vmul.f32 1.0, %v1296
        %v1298 = vrcp.pop %v1262
        %v1299 = vmul.f32 1.0, %v1298
        %v1300 = vrcp.pop %v1263
        %v1301 = vmul.f32 1.0, %v1300
        %v1302 = vrcp.pop %v1264
        %v1303 = vmul.f32 1.0, %v1302
        %v1304 = vrcp.pop %v1265
        %v1305 = vmul.f32 1.0, %v1304
        %v1306 = vrcp.pop %v1266
        %v1307 = vmul.f32 1.0, %v1306
        %v1308 = vrcp.pop %v1267
        %v1309 = vmul.f32 1.0, %v1308
        %v1310 = vrcp.pop %v1268
        %v1311 = vmul.f32 1.0, %v1310
        %v1312 = vrcp.pop %v1269
        %v1313 = vmul.f32 1.0, %v1312
        %v1314 = vrcp.pop %v1270
        %v1315 = vmul.f32 1.0, %v1314
        %v1316 = vrcp.pop %v1271
        %v1317 = vmul.f32 1.0, %v1316
        %v1318 = vrcp.pop %v1272
        %v1319 = vmul.f32 1.0, %v1318
        %v1320 = vrcp.pop %v1273
        %v1321 = vmul.f32 1.0, %v1320
        %v1322 = vrcp.pop %v1274
        %v1323 = vmul.f32 1.0, %v1322
        %v1324 = vrcp.pop %v1275
        %v1325 = vmul.f32 1.0, %v1324
        %v1326 = vrcp.pop %v1276
        %v1327 = vmul.f32 1.0, %v1326
        %v1328 = vrcp.pop %v1277
        %v1329 = vmul.f32 1.0, %v1328
        %v1330 = vrcp.pop %v1278
        %v1331 = vmul.f32 1.0, %v1330
        %v1332 = vrcp.pop %v1279
        %v1333 = vmul.f32 1.0, %v1332
        %v1334 = vrcp.pop %v1280
        %v1335 = vmul.f32 1.0, %v1334
        %v1336 = vrcp.pop %v1281
        %v1337 = vmul.f32 1.0, %v1336
        %v1338 = vrcp.pop %v1282
        %v1339 = vmul.f32 1.0, %v1338
        %v1340 = vrcp.pop %v1283
        %v1341 = vmul.f32 1.0, %v1340
        %v1342 = vrcp.pop %v1284
        %v1343 = vmul.f32 1.0, %v1342
        %v1344 = vrcp.pop %v1285
        %v1345 = vmul.f32 1.0, %v1344
        %v1346 = vrcp.pop %v1286
        %v1347 = vmul.f32 1.0, %v1346
        %v1348 = vrcp.pop %v1287
        %v1349 = vmul.f32 1.0, %v1348
        %v1350 = vrcp.pop %v1288
        %v1351 = vmul.f32 1.0, %v1350
        %v1352 = vrcp.pop %v1289
        %v1353 = vmul.f32 1.0, %v1352
        %1355 = vset.pattern.permute.xlu0 32
        %1356 = vperm.xlu0 %1355, %v1291
        %v1357 = vpop.permute.xlu0 %1356
        %1360 = vset.pattern.permute.xlu0 32
        %1361 = vperm.xlu0 %1360, %v1293
        %v1362 = vpop.permute.xlu0 %1361
        %1365 = vset.pattern.permute.xlu0 32
        %1366 = vperm.xlu0 %1365, %v1295
        %v1367 = vpop.permute.xlu0 %1366
        %1370 = vset.pattern.permute.xlu0 32
        %1371 = vperm.xlu0 %1370, %v1297
        %v1372 = vpop.permute.xlu0 %1371
        %1375 = vset.pattern.permute.xlu0 32
        %1376 = vperm.xlu0 %1375, %v1299
        %v1377 = vpop.permute.xlu0 %1376
        %1380 = vset.pattern.permute.xlu0 32
        %1381 = vperm.xlu0 %1380, %v1301
        %v1382 = vpop.permute.xlu0 %1381
        %1385 = vset.pattern.permute.xlu0 32
        %1386 = vperm.xlu0 %1385, %v1303
        %v1387 = vpop.permute.xlu0 %1386
        %1390 = vset.pattern.permute.xlu0 32
        %1391 = vperm.xlu0 %1390, %v1305
        %v1392 = vpop.permute.xlu0 %1391
        %1395 = vset.pattern.permute.xlu0 32
        %1396 = vperm.xlu0 %1395, %v1307
        %v1397 = vpop.permute.xlu0 %1396
        %1400 = vset.pattern.permute.xlu0 32
        %1401 = vperm.xlu0 %1400, %v1309
        %v1402 = vpop.permute.xlu0 %1401
        %1405 = vset.pattern.permute.xlu0 32
        %1406 = vperm.xlu0 %1405, %v1311
        %v1407 = vpop.permute.xlu0 %1406
        %1410 = vset.pattern.permute.xlu0 32
        %1411 = vperm.xlu0 %1410, %v1313
        %v1412 = vpop.permute.xlu0 %1411
        %1415 = vset.pattern.permute.xlu0 32
        %1416 = vperm.xlu0 %1415, %v1315
        %v1417 = vpop.permute.xlu0 %1416
        %1420 = vset.pattern.permute.xlu0 32
        %1421 = vperm.xlu0 %1420, %v1317
        %v1422 = vpop.permute.xlu0 %1421
        %1425 = vset.pattern.permute.xlu0 32
        %1426 = vperm.xlu0 %1425, %v1319
        %v1427 = vpop.permute.xlu0 %1426
        %1430 = vset.pattern.permute.xlu0 32
        %1431 = vperm.xlu0 %1430, %v1321
        %v1432 = vpop.permute.xlu0 %1431
        %1435 = vset.pattern.permute.xlu0 32
        %1436 = vperm.xlu0 %1435, %v1323
        %v1437 = vpop.permute.xlu0 %1436
        %1440 = vset.pattern.permute.xlu0 32
        %1441 = vperm.xlu0 %1440, %v1325
        %v1442 = vpop.permute.xlu0 %1441
        %1445 = vset.pattern.permute.xlu0 32
        %1446 = vperm.xlu0 %1445, %v1327
        %v1447 = vpop.permute.xlu0 %1446
        %1450 = vset.pattern.permute.xlu0 32
        %1451 = vperm.xlu0 %1450, %v1329
        %v1452 = vpop.permute.xlu0 %1451
        %1455 = vset.pattern.permute.xlu0 32
        %1456 = vperm.xlu0 %1455, %v1331
        %v1457 = vpop.permute.xlu0 %1456
        %1460 = vset.pattern.permute.xlu0 32
        %1461 = vperm.xlu0 %1460, %v1333
        %v1462 = vpop.permute.xlu0 %1461
        %1465 = vset.pattern.permute.xlu0 32
        %1466 = vperm.xlu0 %1465, %v1335
        %v1467 = vpop.permute.xlu0 %1466
        %1470 = vset.pattern.permute.xlu0 32
        %1471 = vperm.xlu0 %1470, %v1337
        %v1472 = vpop.permute.xlu0 %1471
        %1475 = vset.pattern.permute.xlu0 32
        %1476 = vperm.xlu0 %1475, %v1339
        %v1477 = vpop.permute.xlu0 %1476
        %1480 = vset.pattern.permute.xlu0 32
        %1481 = vperm.xlu0 %1480, %v1341
        %v1482 = vpop.permute.xlu0 %1481
        %1485 = vset.pattern.permute.xlu0 32
        %1486 = vperm.xlu0 %1485, %v1343
        %v1487 = vpop.permute.xlu0 %1486
        %1490 = vset.pattern.permute.xlu0 32
        %1491 = vperm.xlu0 %1490, %v1345
        %v1492 = vpop.permute.xlu0 %1491
        %1495 = vset.pattern.permute.xlu0 32
        %1496 = vperm.xlu0 %1495, %v1347
        %v1497 = vpop.permute.xlu0 %1496
        %1500 = vset.pattern.permute.xlu0 32
        %1501 = vperm.xlu0 %1500, %v1349
        %v1502 = vpop.permute.xlu0 %1501
        %1505 = vset.pattern.permute.xlu0 32
        %1506 = vperm.xlu0 %1505, %v1351
        %v1507 = vpop.permute.xlu0 %1506
        %1510 = vset.pattern.permute.xlu0 32
        %1511 = vperm.xlu0 %1510, %v1353
        %v1512 = vpop.permute.xlu0 %1511
        %v1514 = vmul.f32 %v1226, %v1357
        %v1515 = vmul.f32 %v1227, %v1362
        %v1516 = vmul.f32 %v1228, %v1367
        %v1517 = vmul.f32 %v1229, %v1372
        %v1518 = vmul.f32 %v1230, %v1377
        %v1519 = vmul.f32 %v1231, %v1382
        %v1520 = vmul.f32 %v1232, %v1387
        %v1521 = vmul.f32 %v1233, %v1392
        %v1522 = vmul.f32 %v1234, %v1397
        %v1523 = vmul.f32 %v1235, %v1402
        %v1524 = vmul.f32 %v1236, %v1407
        %v1525 = vmul.f32 %v1237, %v1412
        %v1526 = vmul.f32 %v1238, %v1417
        %v1527 = vmul.f32 %v1239, %v1422
        %v1528 = vmul.f32 %v1240, %v1427
        %v1529 = vmul.f32 %v1241, %v1432
        %v1530 = vmul.f32 %v1242, %v1437
        %v1531 = vmul.f32 %v1243, %v1442
        %v1532 = vmul.f32 %v1244, %v1447
        %v1533 = vmul.f32 %v1245, %v1452
        %v1534 = vmul.f32 %v1246, %v1457
        %v1535 = vmul.f32 %v1247, %v1462
        %v1536 = vmul.f32 %v1248, %v1467
        %v1537 = vmul.f32 %v1249, %v1472
        %v1538 = vmul.f32 %v1250, %v1477
        %v1539 = vmul.f32 %v1251, %v1482
        %v1540 = vmul.f32 %v1252, %v1487
        %v1541 = vmul.f32 %v1253, %v1492
        %v1542 = vmul.f32 %v1254, %v1497
        %v1543 = vmul.f32 %v1255, %v1502
        %v1544 = vmul.f32 %v1256, %v1507
        %v1545 = vmul.f32 %v1257, %v1512
        %v1546 = vpack.c.bf16 %v1515, %v1514
        %v1547 = vpack.c.bf16 %v1517, %v1516
        %v1548 = vpack.c.bf16 %v1519, %v1518
        %v1549 = vpack.c.bf16 %v1521, %v1520
        %v1550 = vpack.c.bf16 %v1523, %v1522
        %v1551 = vpack.c.bf16 %v1525, %v1524
        %v1552 = vpack.c.bf16 %v1527, %v1526
        %v1553 = vpack.c.bf16 %v1529, %v1528
        %v1554 = vpack.c.bf16 %v1531, %v1530
        %v1555 = vpack.c.bf16 %v1533, %v1532
        %v1556 = vpack.c.bf16 %v1535, %v1534
        %v1557 = vpack.c.bf16 %v1537, %v1536
        %v1558 = vpack.c.bf16 %v1539, %v1538
        %v1559 = vpack.c.bf16 %v1541, %v1540
        %v1560 = vpack.c.bf16 %v1543, %v1542
        %v1561 = vpack.c.bf16 %v1545, %v1544
        %v1562 = vld [vmem:[%s5] sm:$0xf]
        %v1563 = vld [vmem:[%s5 + $0x4] sm:$0xf]
        %v1564 = vld [vmem:[%s5 + $0x8] sm:$0xf]
        %v1565 = vld [vmem:[%s5 + $0xc] sm:$0xf]
        %v1566 = vld [vmem:[%s5 + $0x10] sm:$0x1]
        %v1567 = vld [vmem:[%s6] sm:$0x1]
        %v1569 = vlaneseq
        %v1570 = vshrl.u32 %v1569, 7
        %v1571 = vsub.s32 0, %v1570
        %v1572 = vrot.slane %v1567, %v1571
        %v1579 = vunpack.c.l.b16 %v1562
        %v1580 = vunpack.c.l.b16 %v1563
        %v1581 = vunpack.c.l.b16 %v1564
        %v1582 = vunpack.c.l.b16 %v1565
        %v1583 = vunpack.c.l.b16 %v1566
        %v1584 = vpack.c.b16 %v1580, %v1579
        %v1585 = vpack.c.b16 %v1582, %v1581
        %v1586 = vpack.c.b16 %v1583, %v1583
        %vm1589 = vcmask 269312
        %v1591 = vsel %vm1589, %v1546, 0
        %v1594 = vsel %vm1589, %v1547, 0
        %v1597 = vsel %vm1589, %v1548, 0
        %v1600 = vsel %vm1589, %v1549, 0
        %v1603 = vsel %vm1589, %v1550, 0
        %v1606 = vsel %vm1589, %v1551, 0
        %v1609 = vsel %vm1589, %v1552, 0
        %v1612 = vsel %vm1589, %v1553, 0
        %v1615 = vsel %vm1589, %v1554, 0
        %v1618 = vsel %vm1589, %v1555, 0
        %v1621 = vsel %vm1589, %v1556, 0
        %v1624 = vsel %vm1589, %v1557, 0
        %v1627 = vsel %vm1589, %v1558, 0
        %v1630 = vsel %vm1589, %v1559, 0
        %v1633 = vsel %vm1589, %v1560, 0
        %v1636 = vsel %vm1589, %v1561, 0
        %vm1638 = vcmask 1040384
        %v1639 = vsel 0, 4294967295, 65535
        %v1640 = vsel %vm1638, %v1639, 0
        %v1642 = vand.u32 %v1586, %v1640
        %1644 = vmatprep.subr.bf16.mxu0 0
        %1645 = vmatpush1.bf16.msra.mxu0 %v1584
        %1646 = vmatprep.subr.bf16.mxu0 0
        %1647 = vmatpush1.bf16.msra.mxu0 %v1585
        %1648 = vmatprep.subr.bf16.mxu0 0
        %1649 = vmatpush1.bf16.msra.mxu0 %v1642
        %1650 = vmatprep.subr.bf16.mxu0 0
        %1651 = vmatpush1.bf16.msra.mxu0 0
        %1652 = vmatprep.subr.bf16.mxu0 0
        %1653 = vmatpush1.bf16.msra.mxu0 0
        %1654 = vmatprep.subr.bf16.mxu0 0
        %1655 = vmatpush1.bf16.msra.mxu0 0
        %1656 = vmatprep.subr.bf16.mxu0 0
        %1657 = vmatpush1.bf16.msra.mxu0 0
        %1658 = vmatprep.subr.bf16.mxu0 0
        %1659 = vmatpush1.bf16.msra.mxu0 0
        %1660 = vmatprep.subr.bf16.mxu0 0
        %1661 = vmatpush1.bf16.msra.mxu0 0
        %1662 = vmatprep.subr.bf16.mxu0 0
        %1663 = vmatpush1.bf16.msra.mxu0 0
        %1664 = vmatprep.subr.bf16.mxu0 0
        %1665 = vmatpush1.bf16.msra.mxu0 0
        %1666 = vmatprep.subr.bf16.mxu0 0
        %1667 = vmatpush1.bf16.msra.mxu0 0
        %1668 = vmatprep.subr.bf16.mxu0 0
        %1669 = vmatpush1.bf16.msra.mxu0 0
        %1670 = vmatprep.subr.bf16.mxu0 0
        %1671 = vmatpush1.bf16.msra.mxu0 0
        %1672 = vmatprep.subr.bf16.mxu0 0
        %1673 = vmatpush1.bf16.msra.mxu0 0
        %1674 = vmatprep.subr.bf16.mxu0 0
        %1675 = vmatpush1.bf16.msra.mxu0 0
        %1676 = vmatprep.mubr.bf16.mxu0 0
        %1677 = vmatmul.mubr.bf16.gmra.mrb[0].mxu0 %v1591
        %v1678 = vpop.f32.mrb[0].mxu0
        %v1679 = vadd.f32 %v1572, %v1678
        %v1680 = vpop.f32.mrb[0].mxu0
        %v1681 = vpop.f32.mrb[0].mxu0
        %v1682 = vadd.f32 %v1572, %v1681
        %v1683 = vpop.f32.mrb[0].mxu0
        %1684 = vmatprep.mubr.bf16.mxu0 0
        %1685 = vmatmul.mubr.bf16.gmra.mrb[0].mxu0 %v1594
        %v1686 = vpop.f32.mrb[0].mxu0
        %v1687 = vadd.f32 %v1572, %v1686
        %v1688 = vpop.f32.mrb[0].mxu0
        %v1689 = vpop.f32.mrb[0].mxu0
        %v1690 = vadd.f32 %v1572, %v1689
        %v1691 = vpop.f32.mrb[0].mxu0
        %1692 = vmatprep.mubr.bf16.mxu0 0
        %1693 = vmatmul.mubr.bf16.gmra.mrb[0].mxu0 %v1597
        %v1694 = vpop.f32.mrb[0].mxu0
        %v1695 = vadd.f32 %v1572, %v1694
        %v1696 = vpop.f32.mrb[0].mxu0
        %v1697 = vpop.f32.mrb[0].mxu0
        %v1698 = vadd.f32 %v1572, %v1697
        %v1699 = vpop.f32.mrb[0].mxu0
        %1700 = vmatprep.mubr.bf16.mxu0 0
        %1701 = vmatmul.mubr.bf16.gmra.mrb[0].mxu0 %v1600
        %v1702 = vpop.f32.mrb[0].mxu0
        %v1703 = vadd.f32 %v1572, %v1702
        %v1704 = vpop.f32.mrb[0].mxu0
        %v1705 = vpop.f32.mrb[0].mxu0
        %v1706 = vadd.f32 %v1572, %v1705
        %v1707 = vpop.f32.mrb[0].mxu0
        %1708 = vmatprep.mubr.bf16.mxu0 0
        %1709 = vmatmul.mubr.bf16.gmra.mrb[0].mxu0 %v1603
        %v1710 = vpop.f32.mrb[0].mxu0
        %v1711 = vadd.f32 %v1572, %v1710
        %v1712 = vpop.f32.mrb[0].mxu0
        %v1713 = vpop.f32.mrb[0].mxu0
        %v1714 = vadd.f32 %v1572, %v1713
        %v1715 = vpop.f32.mrb[0].mxu0
        %1716 = vmatprep.mubr.bf16.mxu0 0
        %1717 = vmatmul.mubr.bf16.gmra.mrb[0].mxu0 %v1606
        %v1718 = vpop.f32.mrb[0].mxu0
        %v1719 = vadd.f32 %v1572, %v1718
        %v1720 = vpop.f32.mrb[0].mxu0
        %v1721 = vpop.f32.mrb[0].mxu0
        %v1722 = vadd.f32 %v1572, %v1721
        %v1723 = vpop.f32.mrb[0].mxu0
        %1724 = vmatprep.mubr.bf16.mxu0 0
        %1725 = vmatmul.mubr.bf16.gmra.mrb[0].mxu0 %v1609
        %v1726 = vpop.f32.mrb[0].mxu0
        %v1727 = vadd.f32 %v1572, %v1726
        %v1728 = vpop.f32.mrb[0].mxu0
        %v1729 = vpop.f32.mrb[0].mxu0
        %v1730 = vadd.f32 %v1572, %v1729
        %v1731 = vpop.f32.mrb[0].mxu0
        %1732 = vmatprep.mubr.bf16.mxu0 0
        %1733 = vmatmul.mubr.bf16.gmra.mrb[0].mxu0 %v1612
        %v1734 = vpop.f32.mrb[0].mxu0
        %v1735 = vadd.f32 %v1572, %v1734
        %v1736 = vpop.f32.mrb[0].mxu0
        %v1737 = vpop.f32.mrb[0].mxu0
        %v1738 = vadd.f32 %v1572, %v1737
        %v1739 = vpop.f32.mrb[0].mxu0
        %1740 = vmatprep.mubr.bf16.mxu0 0
        %1741 = vmatmul.mubr.bf16.gmra.mrb[0].mxu0 %v1615
        %v1742 = vpop.f32.mrb[0].mxu0
        %v1743 = vadd.f32 %v1572, %v1742
        %v1744 = vpop.f32.mrb[0].mxu0
        %v1745 = vpop.f32.mrb[0].mxu0
        %v1746 = vadd.f32 %v1572, %v1745
        %v1747 = vpop.f32.mrb[0].mxu0
        %1748 = vmatprep.mubr.bf16.mxu0 0
        %1749 = vmatmul.mubr.bf16.gmra.mrb[0].mxu0 %v1618
        %v1750 = vpop.f32.mrb[0].mxu0
        %v1751 = vadd.f32 %v1572, %v1750
        %v1752 = vpop.f32.mrb[0].mxu0
        %v1753 = vpop.f32.mrb[0].mxu0
        %v1754 = vadd.f32 %v1572, %v1753
        %v1755 = vpop.f32.mrb[0].mxu0
        %1756 = vmatprep.mubr.bf16.mxu0 0
        %1757 = vmatmul.mubr.bf16.gmra.mrb[0].mxu0 %v1621
        %v1758 = vpop.f32.mrb[0].mxu0
        %v1759 = vadd.f32 %v1572, %v1758
        %v1760 = vpop.f32.mrb[0].mxu0
        %v1761 = vpop.f32.mrb[0].mxu0
        %v1762 = vadd.f32 %v1572, %v1761
        %v1763 = vpop.f32.mrb[0].mxu0
        %1764 = vmatprep.mubr.bf16.mxu0 0
        %1765 = vmatmul.mubr.bf16.gmra.mrb[0].mxu0 %v1624
        %v1766 = vpop.f32.mrb[0].mxu0
        %v1767 = vadd.f32 %v1572, %v1766
        %v1768 = vpop.f32.mrb[0].mxu0
        %v1769 = vpop.f32.mrb[0].mxu0
        %v1770 = vadd.f32 %v1572, %v1769
        %v1771 = vpop.f32.mrb[0].mxu0
        %1772 = vmatprep.mubr.bf16.mxu0 0
        %1773 = vmatmul.mubr.bf16.gmra.mrb[0].mxu0 %v1627
        %v1774 = vpop.f32.mrb[0].mxu0
        %v1775 = vadd.f32 %v1572, %v1774
        %v1776 = vpop.f32.mrb[0].mxu0
        %v1777 = vpop.f32.mrb[0].mxu0
        %v1778 = vadd.f32 %v1572, %v1777
        %v1779 = vpop.f32.mrb[0].mxu0
        %1780 = vmatprep.mubr.bf16.mxu0 0
        %1781 = vmatmul.mubr.bf16.gmra.mrb[0].mxu0 %v1630
        %v1782 = vpop.f32.mrb[0].mxu0
        %v1783 = vadd.f32 %v1572, %v1782
        %v1784 = vpop.f32.mrb[0].mxu0
        %v1785 = vpop.f32.mrb[0].mxu0
        %v1786 = vadd.f32 %v1572, %v1785
        %v1787 = vpop.f32.mrb[0].mxu0
        %1788 = vmatprep.mubr.bf16.mxu0 0
        %1789 = vmatmul.mubr.bf16.gmra.mrb[0].mxu0 %v1633
        %v1790 = vpop.f32.mrb[0].mxu0
        %v1791 = vadd.f32 %v1572, %v1790
        %v1792 = vpop.f32.mrb[0].mxu0
        %v1793 = vpop.f32.mrb[0].mxu0
        %v1794 = vadd.f32 %v1572, %v1793
        %v1795 = vpop.f32.mrb[0].mxu0
        %1796 = vmatprep.mubr.bf16.mxu0 0
        %1797 = vmatmul.mubr.bf16.gmra.mrb[0].mxu0 %v1636
        %v1798 = vpop.f32.mrb[0].mxu0
        %v1799 = vadd.f32 %v1572, %v1798
        %v1800 = vpop.f32.mrb[0].mxu0
        %v1801 = vpop.f32.mrb[0].mxu0
        %v1802 = vadd.f32 %v1572, %v1801
        %v1803 = vpop.f32.mrb[0].mxu0
        %1804 = vdwg.mxu0
        %v1805 = vld [vmem:[%s493] sm:$0xf]
        %v1806 = vld [vmem:[%s493 + $0x4] sm:$0xf]
        %v1807 = vld [vmem:[%s493 + $0x8] sm:$0xf]
        %v1808 = vld [vmem:[%s493 + $0xc] sm:$0xf]
        %v1809 = vld [vmem:[%s493 + $0x10] sm:$0xf]
        %v1810 = vld [vmem:[%s493 + $0x14] sm:$0xf]
        %v1811 = vld [vmem:[%s493 + $0x18] sm:$0xf]
        %v1812 = vld [vmem:[%s493 + $0x1c] sm:$0xf]
        %v1813 = vld [vmem:[%s493 + $0x20] sm:$0xf]
        %v1814 = vld [vmem:[%s493 + $0x24] sm:$0xf]
        %v1815 = vld [vmem:[%s493 + $0x28] sm:$0xf]
        %v1816 = vld [vmem:[%s493 + $0x2c] sm:$0xf]
        %v1817 = vld [vmem:[%s493 + $0x30] sm:$0xf]
        %v1818 = vld [vmem:[%s493 + $0x34] sm:$0xf]
        %v1819 = vld [vmem:[%s493 + $0x38] sm:$0xf]
        %v1820 = vld [vmem:[%s493 + $0x3c] sm:$0xf]
        %v1821 = vld [vmem:[%s493 + $0x40] sm:$0xf]
        %v1822 = vld [vmem:[%s493 + $0x44] sm:$0xf]
        %v1823 = vld [vmem:[%s493 + $0x48] sm:$0xf]
        %v1824 = vld [vmem:[%s493 + $0x4c] sm:$0xf]
        %v1825 = vld [vmem:[%s493 + $0x50] sm:$0xf]
        %v1826 = vld [vmem:[%s493 + $0x54] sm:$0xf]
        %v1827 = vld [vmem:[%s493 + $0x58] sm:$0xf]
        %v1828 = vld [vmem:[%s493 + $0x5c] sm:$0xf]
        %v1829 = vld [vmem:[%s493 + $0x60] sm:$0xf]
        %v1830 = vld [vmem:[%s493 + $0x64] sm:$0xf]
        %v1831 = vld [vmem:[%s493 + $0x68] sm:$0xf]
        %v1832 = vld [vmem:[%s493 + $0x6c] sm:$0xf]
        %v1833 = vld [vmem:[%s493 + $0x70] sm:$0xf]
        %v1834 = vld [vmem:[%s493 + $0x74] sm:$0xf]
        %v1835 = vld [vmem:[%s493 + $0x78] sm:$0xf]
        %v1836 = vld [vmem:[%s493 + $0x7c] sm:$0xf]
        %v1837 = vld [vmem:[%s7] sm:$0xf]
        %v1838 = vld [vmem:[%s7 + $0x4] sm:$0xf]
        %v1839 = vld [vmem:[%s7 + $0x8] sm:$0xf]
        %v1840 = vld [vmem:[%s7 + $0xc] sm:$0xf]
        %v1873 = vunpack.c.l.b16 %v1805
        %v1874 = vunpack.c.l.b16 %v1806
        %v1875 = vunpack.c.l.b16 %v1807
        %v1876 = vunpack.c.l.b16 %v1808
        %v1877 = vunpack.c.l.b16 %v1809
        %v1878 = vunpack.c.l.b16 %v1810
        %v1879 = vunpack.c.l.b16 %v1811
        %v1880 = vunpack.c.l.b16 %v1812
        %v1881 = vunpack.c.l.b16 %v1813
        %v1882 = vunpack.c.l.b16 %v1814
        %v1883 = vunpack.c.l.b16 %v1815
        %v1884 = vunpack.c.l.b16 %v1816
        %v1885 = vunpack.c.l.b16 %v1817
        %v1886 = vunpack.c.l.b16 %v1818
        %v1887 = vunpack.c.l.b16 %v1819
        %v1888 = vunpack.c.l.b16 %v1820
        %v1889 = vunpack.c.l.b16 %v1821
        %v1890 = vunpack.c.l.b16 %v1822
        %v1891 = vunpack.c.l.b16 %v1823
        %v1892 = vunpack.c.l.b16 %v1824
        %v1893 = vunpack.c.l.b16 %v1825
        %v1894 = vunpack.c.l.b16 %v1826
        %v1895 = vunpack.c.l.b16 %v1827
        %v1896 = vunpack.c.l.b16 %v1828
        %v1897 = vunpack.c.l.b16 %v1829
        %v1898 = vunpack.c.l.b16 %v1830
        %v1899 = vunpack.c.l.b16 %v1831
        %v1900 = vunpack.c.l.b16 %v1832
        %v1901 = vunpack.c.l.b16 %v1833
        %v1902 = vunpack.c.l.b16 %v1834
        %v1903 = vunpack.c.l.b16 %v1835
        %v1904 = vunpack.c.l.b16 %v1836
        %v1905 = vpack.c.b16 %v1874, %v1873
        %v1906 = vpack.c.b16 %v1876, %v1875
        %v1907 = vpack.c.b16 %v1878, %v1877
        %v1908 = vpack.c.b16 %v1880, %v1879
        %v1909 = vpack.c.b16 %v1882, %v1881
        %v1910 = vpack.c.b16 %v1884, %v1883
        %v1911 = vpack.c.b16 %v1886, %v1885
        %v1912 = vpack.c.b16 %v1888, %v1887
        %v1913 = vpack.c.b16 %v1890, %v1889
        %v1914 = vpack.c.b16 %v1892, %v1891
        %v1915 = vpack.c.b16 %v1894, %v1893
        %v1916 = vpack.c.b16 %v1896, %v1895
        %v1917 = vpack.c.b16 %v1898, %v1897
        %v1918 = vpack.c.b16 %v1900, %v1899
        %v1919 = vpack.c.b16 %v1902, %v1901
        %v1920 = vpack.c.b16 %v1904, %v1903
        %v1925 = vunpack.c.l.b16 %v1837
        %v1926 = vunpack.c.l.b16 %v1838
        %v1927 = vunpack.c.l.b16 %v1839
        %v1928 = vunpack.c.l.b16 %v1840
        %v1929 = vpack.c.b16 %v1926, %v1925
        %v1930 = vpack.c.b16 %v1928, %v1927
        %vm1933 = vcmask 261120
        %v1935 = vsel %vm1933, %v1905, 0
        %v1938 = vsel %vm1933, %v1906, 0
        %v1941 = vsel %vm1933, %v1907, 0
        %v1944 = vsel %vm1933, %v1908, 0
        %v1947 = vsel %vm1933, %v1909, 0
        %v1950 = vsel %vm1933, %v1910, 0
        %v1953 = vsel %vm1933, %v1911, 0
        %v1956 = vsel %vm1933, %v1912, 0
        %v1959 = vsel %vm1933, %v1913, 0
        %v1962 = vsel %vm1933, %v1914, 0
        %v1965 = vsel %vm1933, %v1915, 0
        %v1968 = vsel %vm1933, %v1916, 0
        %v1971 = vsel %vm1933, %v1917, 0
        %v1974 = vsel %vm1933, %v1918, 0
        %v1977 = vsel %vm1933, %v1919, 0
        %v1980 = vsel %vm1933, %v1920, 0
        %1982 = vmatprep.subr.bf16.mxu0 0
        %1983 = vmatpush1.bf16.msra.mxu0 %v1929
        %1984 = vmatprep.subr.bf16.mxu0 0
        %1985 = vmatpush1.bf16.msra.mxu0 %v1930
        %1986 = vmatprep.subr.bf16.mxu0 0
        %1987 = vmatpush1.bf16.msra.mxu0 0
        %1988 = vmatprep.subr.bf16.mxu0 0
        %1989 = vmatpush1.bf16.msra.mxu0 0
        %1990 = vmatprep.subr.bf16.mxu0 0
        %1991 = vmatpush1.bf16.msra.mxu0 0
        %1992 = vmatprep.subr.bf16.mxu0 0
        %1993 = vmatpush1.bf16.msra.mxu0 0
        %1994 = vmatprep.subr.bf16.mxu0 0
        %1995 = vmatpush1.bf16.msra.mxu0 0
        %1996 = vmatprep.subr.bf16.mxu0 0
        %1997 = vmatpush1.bf16.msra.mxu0 0
        %1998 = vmatprep.subr.bf16.mxu0 0
        %1999 = vmatpush1.bf16.msra.mxu0 0
        %2000 = vmatprep.subr.bf16.mxu0 0
        %2001 = vmatpush1.bf16.msra.mxu0 0
        %2002 = vmatprep.subr.bf16.mxu0 0
        %2003 = vmatpush1.bf16.msra.mxu0 0
        %2004 = vmatprep.subr.bf16.mxu0 0
        %2005 = vmatpush1.bf16.msra.mxu0 0
        %2006 = vmatprep.subr.bf16.mxu0 0
        %2007 = vmatpush1.bf16.msra.mxu0 0
        %2008 = vmatprep.subr.bf16.mxu0 0
        %2009 = vmatpush1.bf16.msra.mxu0 0
        %2010 = vmatprep.subr.bf16.mxu0 0
        %2011 = vmatpush1.bf16.msra.mxu0 0
        %2012 = vmatprep.subr.bf16.mxu0 0
        %2013 = vmatpush1.bf16.msra.mxu0 0
        %2014 = vmatprep.mubr.bf16.mxu0 0
        %2015 = vmatmul.mubr.bf16.gmra.mrb[0].mxu0 %v1935
        %v2016 = vpop.f32.mrb[0].mxu0
        %v2017 = vadd.f32 0.0, %v2016
        %v2018 = vpop.f32.mrb[0].mxu0
        %v2019 = vpop.f32.mrb[0].mxu0
        %v2020 = vadd.f32 0.0, %v2019
        %v2021 = vpop.f32.mrb[0].mxu0
        %2022 = vmatprep.mubr.bf16.mxu0 0
        %2023 = vmatmul.mubr.bf16.gmra.mrb[0].mxu0 %v1938
        %v2024 = vpop.f32.mrb[0].mxu0
        %v2025 = vadd.f32 0.0, %v2024
        %v2026 = vpop.f32.mrb[0].mxu0
        %v2027 = vpop.f32.mrb[0].mxu0
        %v2028 = vadd.f32 0.0, %v2027
        %v2029 = vpop.f32.mrb[0].mxu0
        %2030 = vmatprep.mubr.bf16.mxu0 0
        %2031 = vmatmul.mubr.bf16.gmra.mrb[0].mxu0 %v1941
        %v2032 = vpop.f32.mrb[0].mxu0
        %v2033 = vadd.f32 0.0, %v2032
        %v2034 = vpop.f32.mrb[0].mxu0
        %v2035 = vpop.f32.mrb[0].mxu0
        %v2036 = vadd.f32 0.0, %v2035
        %v2037 = vpop.f32.mrb[0].mxu0
        %2038 = vmatprep.mubr.bf16.mxu0 0
        %2039 = vmatmul.mubr.bf16.gmra.mrb[0].mxu0 %v1944
        %v2040 = vpop.f32.mrb[0].mxu0
        %v2041 = vadd.f32 0.0, %v2040
        %v2042 = vpop.f32.mrb[0].mxu0
        %v2043 = vpop.f32.mrb[0].mxu0
        %v2044 = vadd.f32 0.0, %v2043
        %v2045 = vpop.f32.mrb[0].mxu0
        %2046 = vmatprep.mubr.bf16.mxu0 0
        %2047 = vmatmul.mubr.bf16.gmra.mrb[0].mxu0 %v1947
        %v2048 = vpop.f32.mrb[0].mxu0
        %v2049 = vadd.f32 0.0, %v2048
        %v2050 = vpop.f32.mrb[0].mxu0
        %v2051 = vpop.f32.mrb[0].mxu0
        %v2052 = vadd.f32 0.0, %v2051
        %v2053 = vpop.f32.mrb[0].mxu0
        %2054 = vmatprep.mubr.bf16.mxu0 0
        %2055 = vmatmul.mubr.bf16.gmra.mrb[0].mxu0 %v1950
        %v2056 = vpop.f32.mrb[0].mxu0
        %v2057 = vadd.f32 0.0, %v2056
        %v2058 = vpop.f32.mrb[0].mxu0
        %v2059 = vpop.f32.mrb[0].mxu0
        %v2060 = vadd.f32 0.0, %v2059
        %v2061 = vpop.f32.mrb[0].mxu0
        %2062 = vmatprep.mubr.bf16.mxu0 0
        %2063 = vmatmul.mubr.bf16.gmra.mrb[0].mxu0 %v1953
        %v2064 = vpop.f32.mrb[0].mxu0
        %v2065 = vadd.f32 0.0, %v2064
        %v2066 = vpop.f32.mrb[0].mxu0
        %v2067 = vpop.f32.mrb[0].mxu0
        %v2068 = vadd.f32 0.0, %v2067
        %v2069 = vpop.f32.mrb[0].mxu0
        %2070 = vmatprep.mubr.bf16.mxu0 0
        %2071 = vmatmul.mubr.bf16.gmra.mrb[0].mxu0 %v1956
        %v2072 = vpop.f32.mrb[0].mxu0
        %v2073 = vadd.f32 0.0, %v2072
        %v2074 = vpop.f32.mrb[0].mxu0
        %v2075 = vpop.f32.mrb[0].mxu0
        %v2076 = vadd.f32 0.0, %v2075
        %v2077 = vpop.f32.mrb[0].mxu0
        %2078 = vmatprep.mubr.bf16.mxu0 0
        %2079 = vmatmul.mubr.bf16.gmra.mrb[0].mxu0 %v1959
        %v2080 = vpop.f32.mrb[0].mxu0
        %v2081 = vadd.f32 0.0, %v2080
        %v2082 = vpop.f32.mrb[0].mxu0
        %v2083 = vpop.f32.mrb[0].mxu0
        %v2084 = vadd.f32 0.0, %v2083
        %v2085 = vpop.f32.mrb[0].mxu0
        %2086 = vmatprep.mubr.bf16.mxu0 0
        %2087 = vmatmul.mubr.bf16.gmra.mrb[0].mxu0 %v1962
        %v2088 = vpop.f32.mrb[0].mxu0
        %v2089 = vadd.f32 0.0, %v2088
        %v2090 = vpop.f32.mrb[0].mxu0
        %v2091 = vpop.f32.mrb[0].mxu0
        %v2092 = vadd.f32 0.0, %v2091
        %v2093 = vpop.f32.mrb[0].mxu0
        %2094 = vmatprep.mubr.bf16.mxu0 0
        %2095 = vmatmul.mubr.bf16.gmra.mrb[0].mxu0 %v1965
        %v2096 = vpop.f32.mrb[0].mxu0
        %v2097 = vadd.f32 0.0, %v2096
        %v2098 = vpop.f32.mrb[0].mxu0
        %v2099 = vpop.f32.mrb[0].mxu0
        %v2100 = vadd.f32 0.0, %v2099
        %v2101 = vpop.f32.mrb[0].mxu0
        %2102 = vmatprep.mubr.bf16.mxu0 0
        %2103 = vmatmul.mubr.bf16.gmra.mrb[0].mxu0 %v1968
        %v2104 = vpop.f32.mrb[0].mxu0
        %v2105 = vadd.f32 0.0, %v2104
        %v2106 = vpop.f32.mrb[0].mxu0
        %v2107 = vpop.f32.mrb[0].mxu0
        %v2108 = vadd.f32 0.0, %v2107
        %v2109 = vpop.f32.mrb[0].mxu0
        %2110 = vmatprep.mubr.bf16.mxu0 0
        %2111 = vmatmul.mubr.bf16.gmra.mrb[0].mxu0 %v1971
        %v2112 = vpop.f32.mrb[0].mxu0
        %v2113 = vadd.f32 0.0, %v2112
        %v2114 = vpop.f32.mrb[0].mxu0
        %v2115 = vpop.f32.mrb[0].mxu0
        %v2116 = vadd.f32 0.0, %v2115
        %v2117 = vpop.f32.mrb[0].mxu0
        %2118 = vmatprep.mubr.bf16.mxu0 0
        %2119 = vmatmul.mubr.bf16.gmra.mrb[0].mxu0 %v1974
        %v2120 = vpop.f32.mrb[0].mxu0
        %v2121 = vadd.f32 0.0, %v2120
        %v2122 = vpop.f32.mrb[0].mxu0
        %v2123 = vpop.f32.mrb[0].mxu0
        %v2124 = vadd.f32 0.0, %v2123
        %v2125 = vpop.f32.mrb[0].mxu0
        %2126 = vmatprep.mubr.bf16.mxu0 0
        %2127 = vmatmul.mubr.bf16.gmra.mrb[0].mxu0 %v1977
        %v2128 = vpop.f32.mrb[0].mxu0
        %v2129 = vadd.f32 0.0, %v2128
        %v2130 = vpop.f32.mrb[0].mxu0
        %v2131 = vpop.f32.mrb[0].mxu0
        %v2132 = vadd.f32 0.0, %v2131
        %v2133 = vpop.f32.mrb[0].mxu0
        %2134 = vmatprep.mubr.bf16.mxu0 0
        %2135 = vmatmul.mubr.bf16.gmra.mrb[0].mxu0 %v1980
        %v2136 = vpop.f32.mrb[0].mxu0
        %v2137 = vadd.f32 0.0, %v2136
        %v2138 = vpop.f32.mrb[0].mxu0
        %v2139 = vpop.f32.mrb[0].mxu0
        %v2140 = vadd.f32 0.0, %v2139
        %v2141 = vpop.f32.mrb[0].mxu0
        %2142 = vdwg.mxu0
        %v2143 = vadd.f32 %v1679, %v2017
        %v2144 = vadd.f32 %v1682, %v2020
        %v2145 = vadd.f32 %v1687, %v2025
        %v2146 = vadd.f32 %v1690, %v2028
        %v2147 = vadd.f32 %v1695, %v2033
        %v2148 = vadd.f32 %v1698, %v2036
        %v2149 = vadd.f32 %v1703, %v2041
        %v2150 = vadd.f32 %v1706, %v2044
        %v2151 = vadd.f32 %v1711, %v2049
        %v2152 = vadd.f32 %v1714, %v2052
        %v2153 = vadd.f32 %v1719, %v2057
        %v2154 = vadd.f32 %v1722, %v2060
        %v2155 = vadd.f32 %v1727, %v2065
        %v2156 = vadd.f32 %v1730, %v2068
        %v2157 = vadd.f32 %v1735, %v2073
        %v2158 = vadd.f32 %v1738, %v2076
        %v2159 = vadd.f32 %v1743, %v2081
        %v2160 = vadd.f32 %v1746, %v2084
        %v2161 = vadd.f32 %v1751, %v2089
        %v2162 = vadd.f32 %v1754, %v2092
        %v2163 = vadd.f32 %v1759, %v2097
        %v2164 = vadd.f32 %v1762, %v2100
        %v2165 = vadd.f32 %v1767, %v2105
        %v2166 = vadd.f32 %v1770, %v2108
        %v2167 = vadd.f32 %v1775, %v2113
        %v2168 = vadd.f32 %v1778, %v2116
        %v2169 = vadd.f32 %v1783, %v2121
        %v2170 = vadd.f32 %v1786, %v2124
        %v2171 = vadd.f32 %v1791, %v2129
        %v2172 = vadd.f32 %v1794, %v2132
        %v2173 = vadd.f32 %v1799, %v2137
        %v2174 = vadd.f32 %v1802, %v2140
        %v2175 = vmax.f32 %v2143, 0.0
        %v2176 = vmax.f32 %v2144, 0.0
        %v2177 = vmax.f32 %v2145, 0.0
        %v2178 = vmax.f32 %v2146, 0.0
        %v2179 = vmax.f32 %v2147, 0.0
        %v2180 = vmax.f32 %v2148, 0.0
        %v2181 = vmax.f32 %v2149, 0.0
        %v2182 = vmax.f32 %v2150, 0.0
        %v2183 = vmax.f32 %v2151, 0.0
        %v2184 = vmax.f32 %v2152, 0.0
        %v2185 = vmax.f32 %v2153, 0.0
        %v2186 = vmax.f32 %v2154, 0.0
        %v2187 = vmax.f32 %v2155, 0.0
        %v2188 = vmax.f32 %v2156, 0.0
        %v2189 = vmax.f32 %v2157, 0.0
        %v2190 = vmax.f32 %v2158, 0.0
        %v2191 = vmax.f32 %v2159, 0.0
        %v2192 = vmax.f32 %v2160, 0.0
        %v2193 = vmax.f32 %v2161, 0.0
        %v2194 = vmax.f32 %v2162, 0.0
        %v2195 = vmax.f32 %v2163, 0.0
        %v2196 = vmax.f32 %v2164, 0.0
        %v2197 = vmax.f32 %v2165, 0.0
        %v2198 = vmax.f32 %v2166, 0.0
        %v2199 = vmax.f32 %v2167, 0.0
        %v2200 = vmax.f32 %v2168, 0.0
        %v2201 = vmax.f32 %v2169, 0.0
        %v2202 = vmax.f32 %v2170, 0.0
        %v2203 = vmax.f32 %v2171, 0.0
        %v2204 = vmax.f32 %v2172, 0.0
        %v2205 = vmax.f32 %v2173, 0.0
        %v2206 = vmax.f32 %v2174, 0.0
        %v2207 = vpack.c.bf16 %v2176, %v2175
        %v2208 = vpack.c.bf16 %v2178, %v2177
        %v2209 = vpack.c.bf16 %v2180, %v2179
        %v2210 = vpack.c.bf16 %v2182, %v2181
        %v2211 = vpack.c.bf16 %v2184, %v2183
        %v2212 = vpack.c.bf16 %v2186, %v2185
        %v2213 = vpack.c.bf16 %v2188, %v2187
        %v2214 = vpack.c.bf16 %v2190, %v2189
        %v2215 = vpack.c.bf16 %v2192, %v2191
        %v2216 = vpack.c.bf16 %v2194, %v2193
        %v2217 = vpack.c.bf16 %v2196, %v2195
        %v2218 = vpack.c.bf16 %v2198, %v2197
        %v2219 = vpack.c.bf16 %v2200, %v2199
        %v2220 = vpack.c.bf16 %v2202, %v2201
        %v2221 = vpack.c.bf16 %v2204, %v2203
        %v2222 = vpack.c.bf16 %v2206, %v2205
        %v2223 = vld [vmem:[%s8] sm:$0xf]
        %v2224 = vld [vmem:[%s8 + $0x4] sm:$0xf]
        %v2225 = vld [vmem:[%s8 + $0x8] sm:$0xf]
        %v2226 = vld [vmem:[%s8 + $0xc] sm:$0xf]
        %v2227 = vld [vmem:[%s8 + $0x10] sm:$0xf]
        %v2228 = vld [vmem:[%s8 + $0x14] sm:$0xf]
        %v2229 = vld [vmem:[%s8 + $0x18] sm:$0xf]
        %v2230 = vld [vmem:[%s8 + $0x1c] sm:$0xf]
        %v2231 = vld [vmem:[%s8 + $0x20] sm:$0xf]
        %v2232 = vld [vmem:[%s8 + $0x24] sm:$0xf]
        %v2233 = vld [vmem:[%s8 + $0x28] sm:$0xf]
        %v2234 = vld [vmem:[%s8 + $0x2c] sm:$0xf]
        %v2235 = vld [vmem:[%s8 + $0x30] sm:$0xf]
        %v2236 = vld [vmem:[%s8 + $0x34] sm:$0xf]
        %v2237 = vld [vmem:[%s8 + $0x38] sm:$0xf]
        %v2238 = vld [vmem:[%s8 + $0x3c] sm:$0xf]
        %v2239 = vld [vmem:[%s9] sm:$0x1]
        %v2241 = vlaneseq
        %v2242 = vshrl.u32 %v2241, 7
        %v2243 = vsub.s32 0, %v2242
        %v2244 = vrot.slane %v2239, %v2243
        %v2262 = vunpack.c.l.b16 %v2223
        %v2263 = vunpack.c.l.b16 %v2224
        %v2264 = vunpack.c.l.b16 %v2225
        %v2265 = vunpack.c.l.b16 %v2226
        %v2266 = vunpack.c.l.b16 %v2227
        %v2267 = vunpack.c.l.b16 %v2228
        %v2268 = vunpack.c.l.b16 %v2229
        %v2269 = vunpack.c.l.b16 %v2230
        %v2270 = vunpack.c.l.b16 %v2231
        %v2271 = vunpack.c.l.b16 %v2232
        %v2272 = vunpack.c.l.b16 %v2233
        %v2273 = vunpack.c.l.b16 %v2234
        %v2274 = vunpack.c.l.b16 %v2235
        %v2275 = vunpack.c.l.b16 %v2236
        %v2276 = vunpack.c.l.b16 %v2237
        %v2277 = vunpack.c.l.b16 %v2238
        %v2278 = vpack.c.b16 %v2263, %v2262
        %v2279 = vpack.c.b16 %v2265, %v2264
        %v2280 = vpack.c.b16 %v2267, %v2266
        %v2281 = vpack.c.b16 %v2269, %v2268
        %v2282 = vpack.c.b16 %v2271, %v2270
        %v2283 = vpack.c.b16 %v2273, %v2272
        %v2284 = vpack.c.b16 %v2275, %v2274
        %v2285 = vpack.c.b16 %v2277, %v2276
        %2294 = vmatprep.subr.bf16.mxu0 0
        %2295 = vmatpush1.bf16.msra.mxu0 %v2278
        %2296 = vmatprep.subr.bf16.mxu0 0
        %2297 = vmatpush1.bf16.msra.mxu0 %v2279
        %2298 = vmatprep.subr.bf16.mxu0 0
        %2299 = vmatpush1.bf16.msra.mxu0 %v2280
        %2300 = vmatprep.subr.bf16.mxu0 0
        %2301 = vmatpush1.bf16.msra.mxu0 %v2281
        %2302 = vmatprep.subr.bf16.mxu0 0
        %2303 = vmatpush1.bf16.msra.mxu0 %v2282
        %2304 = vmatprep.subr.bf16.mxu0 0
        %2305 = vmatpush1.bf16.msra.mxu0 %v2283
        %2306 = vmatprep.subr.bf16.mxu0 0
        %2307 = vmatpush1.bf16.msra.mxu0 %v2284
        %2308 = vmatprep.subr.bf16.mxu0 0
        %2309 = vmatpush1.bf16.msra.mxu0 %v2285
        %2310 = vmatprep.subr.bf16.mxu0 0
        %2311 = vmatpush1.bf16.msra.mxu0 0
        %2312 = vmatprep.subr.bf16.mxu0 0
        %2313 = vmatpush1.bf16.msra.mxu0 0
        %2314 = vmatprep.subr.bf16.mxu0 0
        %2315 = vmatpush1.bf16.msra.mxu0 0
        %2316 = vmatprep.subr.bf16.mxu0 0
        %2317 = vmatpush1.bf16.msra.mxu0 0
        %2318 = vmatprep.subr.bf16.mxu0 0
        %2319 = vmatpush1.bf16.msra.mxu0 0
        %2320 = vmatprep.subr.bf16.mxu0 0
        %2321 = vmatpush1.bf16.msra.mxu0 0
        %2322 = vmatprep.subr.bf16.mxu0 0
        %2323 = vmatpush1.bf16.msra.mxu0 0
        %2324 = vmatprep.subr.bf16.mxu0 0
        %2325 = vmatpush1.bf16.msra.mxu0 0
        %2326 = vmatprep.mubr.bf16.mxu0 0
        %2327 = vmatmul.mubr.bf16.gmra.mrb[0].mxu0 %v2207
        %v2328 = vpop.f32.mrb[0].mxu0
        %v2329 = vadd.f32 %v2244, %v2328
        %v2330 = vpop.f32.mrb[0].mxu0
        %v2331 = vpop.f32.mrb[0].mxu0
        %v2332 = vadd.f32 %v2244, %v2331
        %v2333 = vpop.f32.mrb[0].mxu0
        %2334 = vmatprep.mubr.bf16.mxu0 0
        %2335 = vmatmul.mubr.bf16.gmra.mrb[0].mxu0 %v2208
        %v2336 = vpop.f32.mrb[0].mxu0
        %v2337 = vadd.f32 %v2244, %v2336
        %v2338 = vpop.f32.mrb[0].mxu0
        %v2339 = vpop.f32.mrb[0].mxu0
        %v2340 = vadd.f32 %v2244, %v2339
        %v2341 = vpop.f32.mrb[0].mxu0
        %2342 = vmatprep.mubr.bf16.mxu0 0
        %2343 = vmatmul.mubr.bf16.gmra.mrb[0].mxu0 %v2209
        %v2344 = vpop.f32.mrb[0].mxu0
        %v2345 = vadd.f32 %v2244, %v2344
        %v2346 = vpop.f32.mrb[0].mxu0
        %v2347 = vpop.f32.mrb[0].mxu0
        %v2348 = vadd.f32 %v2244, %v2347
        %v2349 = vpop.f32.mrb[0].mxu0
        %2350 = vmatprep.mubr.bf16.mxu0 0
        %2351 = vmatmul.mubr.bf16.gmra.mrb[0].mxu0 %v2210
        %v2352 = vpop.f32.mrb[0].mxu0
        %v2353 = vadd.f32 %v2244, %v2352
        %v2354 = vpop.f32.mrb[0].mxu0
        %v2355 = vpop.f32.mrb[0].mxu0
        %v2356 = vadd.f32 %v2244, %v2355
        %v2357 = vpop.f32.mrb[0].mxu0
        %2358 = vmatprep.mubr.bf16.mxu0 0
        %2359 = vmatmul.mubr.bf16.gmra.mrb[0].mxu0 %v2211
        %v2360 = vpop.f32.mrb[0].mxu0
        %v2361 = vadd.f32 %v2244, %v2360
        %v2362 = vpop.f32.mrb[0].mxu0
        %v2363 = vpop.f32.mrb[0].mxu0
        %v2364 = vadd.f32 %v2244, %v2363
        %v2365 = vpop.f32.mrb[0].mxu0
        %2366 = vmatprep.mubr.bf16.mxu0 0
        %2367 = vmatmul.mubr.bf16.gmra.mrb[0].mxu0 %v2212
        %v2368 = vpop.f32.mrb[0].mxu0
        %v2369 = vadd.f32 %v2244, %v2368
        %v2370 = vpop.f32.mrb[0].mxu0
        %v2371 = vpop.f32.mrb[0].mxu0
        %v2372 = vadd.f32 %v2244, %v2371
        %v2373 = vpop.f32.mrb[0].mxu0
        %2374 = vmatprep.mubr.bf16.mxu0 0
        %2375 = vmatmul.mubr.bf16.gmra.mrb[0].mxu0 %v2213
        %v2376 = vpop.f32.mrb[0].mxu0
        %v2377 = vadd.f32 %v2244, %v2376
        %v2378 = vpop.f32.mrb[0].mxu0
        %v2379 = vpop.f32.mrb[0].mxu0
        %v2380 = vadd.f32 %v2244, %v2379
        %v2381 = vpop.f32.mrb[0].mxu0
        %2382 = vmatprep.mubr.bf16.mxu0 0
        %2383 = vmatmul.mubr.bf16.gmra.mrb[0].mxu0 %v2214
        %v2384 = vpop.f32.mrb[0].mxu0
        %v2385 = vadd.f32 %v2244, %v2384
        %v2386 = vpop.f32.mrb[0].mxu0
        %v2387 = vpop.f32.mrb[0].mxu0
        %v2388 = vadd.f32 %v2244, %v2387
        %v2389 = vpop.f32.mrb[0].mxu0
        %2390 = vmatprep.mubr.bf16.mxu0 0
        %2391 = vmatmul.mubr.bf16.gmra.mrb[0].mxu0 %v2215
        %v2392 = vpop.f32.mrb[0].mxu0
        %v2393 = vadd.f32 %v2244, %v2392
        %v2394 = vpop.f32.mrb[0].mxu0
        %v2395 = vpop.f32.mrb[0].mxu0
        %v2396 = vadd.f32 %v2244, %v2395
        %v2397 = vpop.f32.mrb[0].mxu0
        %2398 = vmatprep.mubr.bf16.mxu0 0
        %2399 = vmatmul.mubr.bf16.gmra.mrb[0].mxu0 %v2216
        %v2400 = vpop.f32.mrb[0].mxu0
        %v2401 = vadd.f32 %v2244, %v2400
        %v2402 = vpop.f32.mrb[0].mxu0
        %v2403 = vpop.f32.mrb[0].mxu0
        %v2404 = vadd.f32 %v2244, %v2403
        %v2405 = vpop.f32.mrb[0].mxu0
        %2406 = vmatprep.mubr.bf16.mxu0 0
        %2407 = vmatmul.mubr.bf16.gmra.mrb[0].mxu0 %v2217
        %v2408 = vpop.f32.mrb[0].mxu0
        %v2409 = vadd.f32 %v2244, %v2408
        %v2410 = vpop.f32.mrb[0].mxu0
        %v2411 = vpop.f32.mrb[0].mxu0
        %v2412 = vadd.f32 %v2244, %v2411
        %v2413 = vpop.f32.mrb[0].mxu0
        %2414 = vmatprep.mubr.bf16.mxu0 0
        %2415 = vmatmul.mubr.bf16.gmra.mrb[0].mxu0 %v2218
        %v2416 = vpop.f32.mrb[0].mxu0
        %v2417 = vadd.f32 %v2244, %v2416
        %v2418 = vpop.f32.mrb[0].mxu0
        %v2419 = vpop.f32.mrb[0].mxu0
        %v2420 = vadd.f32 %v2244, %v2419
        %v2421 = vpop.f32.mrb[0].mxu0
        %2422 = vmatprep.mubr.bf16.mxu0 0
        %2423 = vmatmul.mubr.bf16.gmra.mrb[0].mxu0 %v2219
        %v2424 = vpop.f32.mrb[0].mxu0
        %v2425 = vadd.f32 %v2244, %v2424
        %v2426 = vpop.f32.mrb[0].mxu0
        %v2427 = vpop.f32.mrb[0].mxu0
        %v2428 = vadd.f32 %v2244, %v2427
        %v2429 = vpop.f32.mrb[0].mxu0
        %2430 = vmatprep.mubr.bf16.mxu0 0
        %2431 = vmatmul.mubr.bf16.gmra.mrb[0].mxu0 %v2220
        %v2432 = vpop.f32.mrb[0].mxu0
        %v2433 = vadd.f32 %v2244, %v2432
        %v2434 = vpop.f32.mrb[0].mxu0
        %v2435 = vpop.f32.mrb[0].mxu0
        %v2436 = vadd.f32 %v2244, %v2435
        %v2437 = vpop.f32.mrb[0].mxu0
        %2438 = vmatprep.mubr.bf16.mxu0 0
        %2439 = vmatmul.mubr.bf16.gmra.mrb[0].mxu0 %v2221
        %v2440 = vpop.f32.mrb[0].mxu0
        %v2441 = vadd.f32 %v2244, %v2440
        %v2442 = vpop.f32.mrb[0].mxu0
        %v2443 = vpop.f32.mrb[0].mxu0
        %v2444 = vadd.f32 %v2244, %v2443
        %v2445 = vpop.f32.mrb[0].mxu0
        %2446 = vmatprep.mubr.bf16.mxu0 0
        %2447 = vmatmul.mubr.bf16.gmra.mrb[0].mxu0 %v2222
        %v2448 = vpop.f32.mrb[0].mxu0
        %v2449 = vadd.f32 %v2244, %v2448
        %v2450 = vpop.f32.mrb[0].mxu0
        %v2451 = vpop.f32.mrb[0].mxu0
        %v2452 = vadd.f32 %v2244, %v2451
        %v2453 = vpop.f32.mrb[0].mxu0
        %2454 = vdwg.mxu0
        %v2455 = vmax.f32 %v2329, 0.0
        %v2456 = vmax.f32 %v2332, 0.0
        %v2457 = vmax.f32 %v2337, 0.0
        %v2458 = vmax.f32 %v2340, 0.0
        %v2459 = vmax.f32 %v2345, 0.0
        %v2460 = vmax.f32 %v2348, 0.0
        %v2461 = vmax.f32 %v2353, 0.0
        %v2462 = vmax.f32 %v2356, 0.0
        %v2463 = vmax.f32 %v2361, 0.0
        %v2464 = vmax.f32 %v2364, 0.0
        %v2465 = vmax.f32 %v2369, 0.0
        %v2466 = vmax.f32 %v2372, 0.0
        %v2467 = vmax.f32 %v2377, 0.0
        %v2468 = vmax.f32 %v2380, 0.0
        %v2469 = vmax.f32 %v2385, 0.0
        %v2470 = vmax.f32 %v2388, 0.0
        %v2471 = vmax.f32 %v2393, 0.0
        %v2472 = vmax.f32 %v2396, 0.0
        %v2473 = vmax.f32 %v2401, 0.0
        %v2474 = vmax.f32 %v2404, 0.0
        %v2475 = vmax.f32 %v2409, 0.0
        %v2476 = vmax.f32 %v2412, 0.0
        %v2477 = vmax.f32 %v2417, 0.0
        %v2478 = vmax.f32 %v2420, 0.0
        %v2479 = vmax.f32 %v2425, 0.0
        %v2480 = vmax.f32 %v2428, 0.0
        %v2481 = vmax.f32 %v2433, 0.0
        %v2482 = vmax.f32 %v2436, 0.0
        %v2483 = vmax.f32 %v2441, 0.0
        %v2484 = vmax.f32 %v2444, 0.0
        %v2485 = vmax.f32 %v2449, 0.0
        %v2486 = vmax.f32 %v2452, 0.0
        %v2487 = vpack.c.bf16 %v2456, %v2455
        %v2488 = vpack.c.bf16 %v2458, %v2457
        %v2489 = vpack.c.bf16 %v2460, %v2459
        %v2490 = vpack.c.bf16 %v2462, %v2461
        %v2491 = vpack.c.bf16 %v2464, %v2463
        %v2492 = vpack.c.bf16 %v2466, %v2465
        %v2493 = vpack.c.bf16 %v2468, %v2467
        %v2494 = vpack.c.bf16 %v2470, %v2469
        %v2495 = vpack.c.bf16 %v2472, %v2471
        %v2496 = vpack.c.bf16 %v2474, %v2473
        %v2497 = vpack.c.bf16 %v2476, %v2475
        %v2498 = vpack.c.bf16 %v2478, %v2477
        %v2499 = vpack.c.bf16 %v2480, %v2479
        %v2500 = vpack.c.bf16 %v2482, %v2481
        %v2501 = vpack.c.bf16 %v2484, %v2483
        %v2502 = vpack.c.bf16 %v2486, %v2485
        %v2503 = vld [vmem:[%s10] sm:$0xf]
        %v2504 = vld [vmem:[%s10 + $0x4] sm:$0xf]
        %v2505 = vld [vmem:[%s10 + $0x8] sm:$0xf]
        %v2506 = vld [vmem:[%s10 + $0xc] sm:$0xf]
        %v2507 = vld [vmem:[%s10 + $0x10] sm:$0xf]
        %v2508 = vld [vmem:[%s10 + $0x14] sm:$0xf]
        %v2509 = vld [vmem:[%s10 + $0x18] sm:$0xf]
        %v2510 = vld [vmem:[%s10 + $0x1c] sm:$0xf]
        %v2511 = vld [vmem:[%s10 + $0x20] sm:$0xf]
        %v2512 = vld [vmem:[%s10 + $0x24] sm:$0xf]
        %v2513 = vld [vmem:[%s10 + $0x28] sm:$0xf]
        %v2514 = vld [vmem:[%s10 + $0x2c] sm:$0xf]
        %v2515 = vld [vmem:[%s10 + $0x30] sm:$0xf]
        %v2516 = vld [vmem:[%s10 + $0x34] sm:$0xf]
        %v2517 = vld [vmem:[%s10 + $0x38] sm:$0xf]
        %v2518 = vld [vmem:[%s10 + $0x3c] sm:$0xf]
        %v2519 = vld [vmem:[%s11] sm:$0x1]
        %v2521 = vlaneseq
        %v2522 = vshrl.u32 %v2521, 7
        %v2523 = vsub.s32 0, %v2522
        %v2524 = vrot.slane %v2519, %v2523
        %v2542 = vunpack.c.l.b16 %v2503
        %v2543 = vunpack.c.l.b16 %v2504
        %v2544 = vunpack.c.l.b16 %v2505
        %v2545 = vunpack.c.l.b16 %v2506
        %v2546 = vunpack.c.l.b16 %v2507
        %v2547 = vunpack.c.l.b16 %v2508
        %v2548 = vunpack.c.l.b16 %v2509
        %v2549 = vunpack.c.l.b16 %v2510
        %v2550 = vunpack.c.l.b16 %v2511
        %v2551 = vunpack.c.l.b16 %v2512
        %v2552 = vunpack.c.l.b16 %v2513
        %v2553 = vunpack.c.l.b16 %v2514
        %v2554 = vunpack.c.l.b16 %v2515
        %v2555 = vunpack.c.l.b16 %v2516
        %v2556 = vunpack.c.l.b16 %v2517
        %v2557 = vunpack.c.l.b16 %v2518
        %v2558 = vpack.c.b16 %v2543, %v2542
        %v2559 = vpack.c.b16 %v2545, %v2544
        %v2560 = vpack.c.b16 %v2547, %v2546
        %v2561 = vpack.c.b16 %v2549, %v2548
        %v2562 = vpack.c.b16 %v2551, %v2550
        %v2563 = vpack.c.b16 %v2553, %v2552
        %v2564 = vpack.c.b16 %v2555, %v2554
        %v2565 = vpack.c.b16 %v2557, %v2556
        %2574 = vmatprep.subr.bf16.mxu0 0
        %2575 = vmatpush1.bf16.msra.mxu0 %v2558
        %2576 = vmatprep.subr.bf16.mxu0 0
        %2577 = vmatpush1.bf16.msra.mxu0 %v2559
        %2578 = vmatprep.subr.bf16.mxu0 0
        %2579 = vmatpush1.bf16.msra.mxu0 %v2560
        %2580 = vmatprep.subr.bf16.mxu0 0
        %2581 = vmatpush1.bf16.msra.mxu0 %v2561
        %2582 = vmatprep.subr.bf16.mxu0 0
        %2583 = vmatpush1.bf16.msra.mxu0 %v2562
        %2584 = vmatprep.subr.bf16.mxu0 0
        %2585 = vmatpush1.bf16.msra.mxu0 %v2563
        %2586 = vmatprep.subr.bf16.mxu0 0
        %2587 = vmatpush1.bf16.msra.mxu0 %v2564
        %2588 = vmatprep.subr.bf16.mxu0 0
        %2589 = vmatpush1.bf16.msra.mxu0 %v2565
        %2590 = vmatprep.subr.bf16.mxu0 0
        %2591 = vmatpush1.bf16.msra.mxu0 0
        %2592 = vmatprep.subr.bf16.mxu0 0
        %2593 = vmatpush1.bf16.msra.mxu0 0
        %2594 = vmatprep.subr.bf16.mxu0 0
        %2595 = vmatpush1.bf16.msra.mxu0 0
        %2596 = vmatprep.subr.bf16.mxu0 0
        %2597 = vmatpush1.bf16.msra.mxu0 0
        %2598 = vmatprep.subr.bf16.mxu0 0
        %2599 = vmatpush1.bf16.msra.mxu0 0
        %2600 = vmatprep.subr.bf16.mxu0 0
        %2601 = vmatpush1.bf16.msra.mxu0 0
        %2602 = vmatprep.subr.bf16.mxu0 0
        %2603 = vmatpush1.bf16.msra.mxu0 0
        %2604 = vmatprep.subr.bf16.mxu0 0
        %2605 = vmatpush1.bf16.msra.mxu0 0
        %2606 = vmatprep.mubr.bf16.mxu0 0
        %2607 = vmatmul.mubr.bf16.gmra.mrb[0].mxu0 %v2487
        %v2608 = vpop.f32.mrb[0].mxu0
        %v2609 = vadd.f32 %v2524, %v2608
        %v2610 = vpop.f32.mrb[0].mxu0
        %v2611 = vpop.f32.mrb[0].mxu0
        %v2612 = vadd.f32 %v2524, %v2611
        %v2613 = vpop.f32.mrb[0].mxu0
        %2614 = vmatprep.mubr.bf16.mxu0 0
        %2615 = vmatmul.mubr.bf16.gmra.mrb[0].mxu0 %v2488
        %v2616 = vpop.f32.mrb[0].mxu0
        %v2617 = vadd.f32 %v2524, %v2616
        %v2618 = vpop.f32.mrb[0].mxu0
        %v2619 = vpop.f32.mrb[0].mxu0
        %v2620 = vadd.f32 %v2524, %v2619
        %v2621 = vpop.f32.mrb[0].mxu0
        %2622 = vmatprep.mubr.bf16.mxu0 0
        %2623 = vmatmul.mubr.bf16.gmra.mrb[0].mxu0 %v2489
        %v2624 = vpop.f32.mrb[0].mxu0
        %v2625 = vadd.f32 %v2524, %v2624
        %v2626 = vpop.f32.mrb[0].mxu0
        %v2627 = vpop.f32.mrb[0].mxu0
        %v2628 = vadd.f32 %v2524, %v2627
        %v2629 = vpop.f32.mrb[0].mxu0
        %2630 = vmatprep.mubr.bf16.mxu0 0
        %2631 = vmatmul.mubr.bf16.gmra.mrb[0].mxu0 %v2490
        %v2632 = vpop.f32.mrb[0].mxu0
        %v2633 = vadd.f32 %v2524, %v2632
        %v2634 = vpop.f32.mrb[0].mxu0
        %v2635 = vpop.f32.mrb[0].mxu0
        %v2636 = vadd.f32 %v2524, %v2635
        %v2637 = vpop.f32.mrb[0].mxu0
        %2638 = vmatprep.mubr.bf16.mxu0 0
        %2639 = vmatmul.mubr.bf16.gmra.mrb[0].mxu0 %v2491
        %v2640 = vpop.f32.mrb[0].mxu0
        %v2641 = vadd.f32 %v2524, %v2640
        %v2642 = vpop.f32.mrb[0].mxu0
        %v2643 = vpop.f32.mrb[0].mxu0
        %v2644 = vadd.f32 %v2524, %v2643
        %v2645 = vpop.f32.mrb[0].mxu0
        %2646 = vmatprep.mubr.bf16.mxu0 0
        %2647 = vmatmul.mubr.bf16.gmra.mrb[0].mxu0 %v2492
        %v2648 = vpop.f32.mrb[0].mxu0
        %v2649 = vadd.f32 %v2524, %v2648
        %v2650 = vpop.f32.mrb[0].mxu0
        %v2651 = vpop.f32.mrb[0].mxu0
        %v2652 = vadd.f32 %v2524, %v2651
        %v2653 = vpop.f32.mrb[0].mxu0
        %2654 = vmatprep.mubr.bf16.mxu0 0
        %2655 = vmatmul.mubr.bf16.gmra.mrb[0].mxu0 %v2493
        %v2656 = vpop.f32.mrb[0].mxu0
        %v2657 = vadd.f32 %v2524, %v2656
        %v2658 = vpop.f32.mrb[0].mxu0
        %v2659 = vpop.f32.mrb[0].mxu0
        %v2660 = vadd.f32 %v2524, %v2659
        %v2661 = vpop.f32.mrb[0].mxu0
        %2662 = vmatprep.mubr.bf16.mxu0 0
        %2663 = vmatmul.mubr.bf16.gmra.mrb[0].mxu0 %v2494
        %v2664 = vpop.f32.mrb[0].mxu0
        %v2665 = vadd.f32 %v2524, %v2664
        %v2666 = vpop.f32.mrb[0].mxu0
        %v2667 = vpop.f32.mrb[0].mxu0
        %v2668 = vadd.f32 %v2524, %v2667
        %v2669 = vpop.f32.mrb[0].mxu0
        %2670 = vmatprep.mubr.bf16.mxu0 0
        %2671 = vmatmul.mubr.bf16.gmra.mrb[0].mxu0 %v2495
        %v2672 = vpop.f32.mrb[0].mxu0
        %v2673 = vadd.f32 %v2524, %v2672
        %v2674 = vpop.f32.mrb[0].mxu0
        %v2675 = vpop.f32.mrb[0].mxu0
        %v2676 = vadd.f32 %v2524, %v2675
        %v2677 = vpop.f32.mrb[0].mxu0
        %2678 = vmatprep.mubr.bf16.mxu0 0
        %2679 = vmatmul.mubr.bf16.gmra.mrb[0].mxu0 %v2496
        %v2680 = vpop.f32.mrb[0].mxu0
        %v2681 = vadd.f32 %v2524, %v2680
        %v2682 = vpop.f32.mrb[0].mxu0
        %v2683 = vpop.f32.mrb[0].mxu0
        %v2684 = vadd.f32 %v2524, %v2683
        %v2685 = vpop.f32.mrb[0].mxu0
        %2686 = vmatprep.mubr.bf16.mxu0 0
        %2687 = vmatmul.mubr.bf16.gmra.mrb[0].mxu0 %v2497
        %v2688 = vpop.f32.mrb[0].mxu0
        %v2689 = vadd.f32 %v2524, %v2688
        %v2690 = vpop.f32.mrb[0].mxu0
        %v2691 = vpop.f32.mrb[0].mxu0
        %v2692 = vadd.f32 %v2524, %v2691
        %v2693 = vpop.f32.mrb[0].mxu0
        %2694 = vmatprep.mubr.bf16.mxu0 0
        %2695 = vmatmul.mubr.bf16.gmra.mrb[0].mxu0 %v2498
        %v2696 = vpop.f32.mrb[0].mxu0
        %v2697 = vadd.f32 %v2524, %v2696
        %v2698 = vpop.f32.mrb[0].mxu0
        %v2699 = vpop.f32.mrb[0].mxu0
        %v2700 = vadd.f32 %v2524, %v2699
        %v2701 = vpop.f32.mrb[0].mxu0
        %2702 = vmatprep.mubr.bf16.mxu0 0
        %2703 = vmatmul.mubr.bf16.gmra.mrb[0].mxu0 %v2499
        %v2704 = vpop.f32.mrb[0].mxu0
        %v2705 = vadd.f32 %v2524, %v2704
        %v2706 = vpop.f32.mrb[0].mxu0
        %v2707 = vpop.f32.mrb[0].mxu0
        %v2708 = vadd.f32 %v2524, %v2707
        %v2709 = vpop.f32.mrb[0].mxu0
        %2710 = vmatprep.mubr.bf16.mxu0 0
        %2711 = vmatmul.mubr.bf16.gmra.mrb[0].mxu0 %v2500
        %v2712 = vpop.f32.mrb[0].mxu0
        %v2713 = vadd.f32 %v2524, %v2712
        %v2714 = vpop.f32.mrb[0].mxu0
        %v2715 = vpop.f32.mrb[0].mxu0
        %v2716 = vadd.f32 %v2524, %v2715
        %v2717 = vpop.f32.mrb[0].mxu0
        %2718 = vmatprep.mubr.bf16.mxu0 0
        %2719 = vmatmul.mubr.bf16.gmra.mrb[0].mxu0 %v2501
        %v2720 = vpop.f32.mrb[0].mxu0
        %v2721 = vadd.f32 %v2524, %v2720
        %v2722 = vpop.f32.mrb[0].mxu0
        %v2723 = vpop.f32.mrb[0].mxu0
        %v2724 = vadd.f32 %v2524, %v2723
        %v2725 = vpop.f32.mrb[0].mxu0
        %2726 = vmatprep.mubr.bf16.mxu0 0
        %2727 = vmatmul.mubr.bf16.gmra.mrb[0].mxu0 %v2502
        %v2728 = vpop.f32.mrb[0].mxu0
        %v2729 = vadd.f32 %v2524, %v2728
        %v2730 = vpop.f32.mrb[0].mxu0
        %v2731 = vpop.f32.mrb[0].mxu0
        %v2732 = vadd.f32 %v2524, %v2731
        %v2733 = vpop.f32.mrb[0].mxu0
        %2734 = vdwg.mxu0
        %v2735 = vmax.f32 %v2609, 0.0
        %v2736 = vmax.f32 %v2612, 0.0
        %v2737 = vmax.f32 %v2617, 0.0
        %v2738 = vmax.f32 %v2620, 0.0
        %v2739 = vmax.f32 %v2625, 0.0
        %v2740 = vmax.f32 %v2628, 0.0
        %v2741 = vmax.f32 %v2633, 0.0
        %v2742 = vmax.f32 %v2636, 0.0
        %v2743 = vmax.f32 %v2641, 0.0
        %v2744 = vmax.f32 %v2644, 0.0
        %v2745 = vmax.f32 %v2649, 0.0
        %v2746 = vmax.f32 %v2652, 0.0
        %v2747 = vmax.f32 %v2657, 0.0
        %v2748 = vmax.f32 %v2660, 0.0
        %v2749 = vmax.f32 %v2665, 0.0
        %v2750 = vmax.f32 %v2668, 0.0
        %v2751 = vmax.f32 %v2673, 0.0
        %v2752 = vmax.f32 %v2676, 0.0
        %v2753 = vmax.f32 %v2681, 0.0
        %v2754 = vmax.f32 %v2684, 0.0
        %v2755 = vmax.f32 %v2689, 0.0
        %v2756 = vmax.f32 %v2692, 0.0
        %v2757 = vmax.f32 %v2697, 0.0
        %v2758 = vmax.f32 %v2700, 0.0
        %v2759 = vmax.f32 %v2705, 0.0
        %v2760 = vmax.f32 %v2708, 0.0
        %v2761 = vmax.f32 %v2713, 0.0
        %v2762 = vmax.f32 %v2716, 0.0
        %v2763 = vmax.f32 %v2721, 0.0
        %v2764 = vmax.f32 %v2724, 0.0
        %v2765 = vmax.f32 %v2729, 0.0
        %v2766 = vmax.f32 %v2732, 0.0
        %v2767 = vpack.c.bf16 %v2736, %v2735
        %v2768 = vpack.c.bf16 %v2738, %v2737
        %v2769 = vpack.c.bf16 %v2740, %v2739
        %v2770 = vpack.c.bf16 %v2742, %v2741
        %v2771 = vpack.c.bf16 %v2744, %v2743
        %v2772 = vpack.c.bf16 %v2746, %v2745
        %v2773 = vpack.c.bf16 %v2748, %v2747
        %v2774 = vpack.c.bf16 %v2750, %v2749
        %v2775 = vpack.c.bf16 %v2752, %v2751
        %v2776 = vpack.c.bf16 %v2754, %v2753
        %v2777 = vpack.c.bf16 %v2756, %v2755
        %v2778 = vpack.c.bf16 %v2758, %v2757
        %v2779 = vpack.c.bf16 %v2760, %v2759
        %v2780 = vpack.c.bf16 %v2762, %v2761
        %v2781 = vpack.c.bf16 %v2764, %v2763
        %v2782 = vpack.c.bf16 %v2766, %v2765
        %v2783 = vld [vmem:[%s12] sm:$0xf]
        %v2784 = vld [vmem:[%s12 + $0x4] sm:$0xf]
        %v2785 = vld [vmem:[%s12 + $0x8] sm:$0xf]
        %v2786 = vld [vmem:[%s12 + $0xc] sm:$0xf]
        %v2787 = vld [vmem:[%s12 + $0x10] sm:$0xf]
        %v2788 = vld [vmem:[%s12 + $0x14] sm:$0xf]
        %v2789 = vld [vmem:[%s12 + $0x18] sm:$0xf]
        %v2790 = vld [vmem:[%s12 + $0x1c] sm:$0xf]
        %v2791 = vld [vmem:[%s12 + $0x20] sm:$0xf]
        %v2792 = vld [vmem:[%s12 + $0x24] sm:$0xf]
        %v2793 = vld [vmem:[%s12 + $0x28] sm:$0xf]
        %v2794 = vld [vmem:[%s12 + $0x2c] sm:$0xf]
        %v2795 = vld [vmem:[%s12 + $0x30] sm:$0xf]
        %v2796 = vld [vmem:[%s12 + $0x34] sm:$0xf]
        %v2797 = vld [vmem:[%s12 + $0x38] sm:$0xf]
        %v2798 = vld [vmem:[%s12 + $0x3c] sm:$0xf]
        %v2799 = vld [vmem:[%s13] sm:$0x1]
        %v2801 = vlaneseq
        %v2802 = vshrl.u32 %v2801, 7
        %v2803 = vsub.s32 0, %v2802
        %v2804 = vrot.slane %v2799, %v2803
        %v2822 = vunpack.c.l.b16 %v2783
        %v2823 = vunpack.c.l.b16 %v2784
        %v2824 = vunpack.c.l.b16 %v2785
        %v2825 = vunpack.c.l.b16 %v2786
        %v2826 = vunpack.c.l.b16 %v2787
        %v2827 = vunpack.c.l.b16 %v2788
        %v2828 = vunpack.c.l.b16 %v2789
        %v2829 = vunpack.c.l.b16 %v2790
        %v2830 = vunpack.c.l.b16 %v2791
        %v2831 = vunpack.c.l.b16 %v2792
        %v2832 = vunpack.c.l.b16 %v2793
        %v2833 = vunpack.c.l.b16 %v2794
        %v2834 = vunpack.c.l.b16 %v2795
        %v2835 = vunpack.c.l.b16 %v2796
        %v2836 = vunpack.c.l.b16 %v2797
        %v2837 = vunpack.c.l.b16 %v2798
        %v2838 = vpack.c.b16 %v2823, %v2822
        %v2839 = vpack.c.b16 %v2825, %v2824
        %v2840 = vpack.c.b16 %v2827, %v2826
        %v2841 = vpack.c.b16 %v2829, %v2828
        %v2842 = vpack.c.b16 %v2831, %v2830
        %v2843 = vpack.c.b16 %v2833, %v2832
        %v2844 = vpack.c.b16 %v2835, %v2834
        %v2845 = vpack.c.b16 %v2837, %v2836
        %2854 = vmatprep.subr.bf16.mxu0 0
        %2855 = vmatpush1.bf16.msra.mxu0 %v2838
        %2856 = vmatprep.subr.bf16.mxu0 0
        %2857 = vmatpush1.bf16.msra.mxu0 %v2839
        %2858 = vmatprep.subr.bf16.mxu0 0
        %2859 = vmatpush1.bf16.msra.mxu0 %v2840
        %2860 = vmatprep.subr.bf16.mxu0 0
        %2861 = vmatpush1.bf16.msra.mxu0 %v2841
        %2862 = vmatprep.subr.bf16.mxu0 0
        %2863 = vmatpush1.bf16.msra.mxu0 %v2842
        %2864 = vmatprep.subr.bf16.mxu0 0
        %2865 = vmatpush1.bf16.msra.mxu0 %v2843
        %2866 = vmatprep.subr.bf16.mxu0 0
        %2867 = vmatpush1.bf16.msra.mxu0 %v2844
        %2868 = vmatprep.subr.bf16.mxu0 0
        %2869 = vmatpush1.bf16.msra.mxu0 %v2845
        %2870 = vmatprep.subr.bf16.mxu0 0
        %2871 = vmatpush1.bf16.msra.mxu0 0
        %2872 = vmatprep.subr.bf16.mxu0 0
        %2873 = vmatpush1.bf16.msra.mxu0 0
        %2874 = vmatprep.subr.bf16.mxu0 0
        %2875 = vmatpush1.bf16.msra.mxu0 0
        %2876 = vmatprep.subr.bf16.mxu0 0
        %2877 = vmatpush1.bf16.msra.mxu0 0
        %2878 = vmatprep.subr.bf16.mxu0 0
        %2879 = vmatpush1.bf16.msra.mxu0 0
        %2880 = vmatprep.subr.bf16.mxu0 0
        %2881 = vmatpush1.bf16.msra.mxu0 0
        %2882 = vmatprep.subr.bf16.mxu0 0
        %2883 = vmatpush1.bf16.msra.mxu0 0
        %2884 = vmatprep.subr.bf16.mxu0 0
        %2885 = vmatpush1.bf16.msra.mxu0 0
        %2886 = vmatprep.mubr.bf16.mxu0 0
        %2887 = vmatmul.mubr.bf16.gmra.mrb[0].mxu0 %v2767
        %v2888 = vpop.f32.mrb[0].mxu0
        %v2889 = vadd.f32 %v2804, %v2888
        %v2890 = vpop.f32.mrb[0].mxu0
        %v2891 = vpop.f32.mrb[0].mxu0
        %v2892 = vadd.f32 %v2804, %v2891
        %v2893 = vpop.f32.mrb[0].mxu0
        %2894 = vmatprep.mubr.bf16.mxu0 0
        %2895 = vmatmul.mubr.bf16.gmra.mrb[0].mxu0 %v2768
        %v2896 = vpop.f32.mrb[0].mxu0
        %v2897 = vadd.f32 %v2804, %v2896
        %v2898 = vpop.f32.mrb[0].mxu0
        %v2899 = vpop.f32.mrb[0].mxu0
        %v2900 = vadd.f32 %v2804, %v2899
        %v2901 = vpop.f32.mrb[0].mxu0
        %2902 = vmatprep.mubr.bf16.mxu0 0
        %2903 = vmatmul.mubr.bf16.gmra.mrb[0].mxu0 %v2769
        %v2904 = vpop.f32.mrb[0].mxu0
        %v2905 = vadd.f32 %v2804, %v2904
        %v2906 = vpop.f32.mrb[0].mxu0
        %v2907 = vpop.f32.mrb[0].mxu0
        %v2908 = vadd.f32 %v2804, %v2907
        %v2909 = vpop.f32.mrb[0].mxu0
        %2910 = vmatprep.mubr.bf16.mxu0 0
        %2911 = vmatmul.mubr.bf16.gmra.mrb[0].mxu0 %v2770
        %v2912 = vpop.f32.mrb[0].mxu0
        %v2913 = vadd.f32 %v2804, %v2912
        %v2914 = vpop.f32.mrb[0].mxu0
        %v2915 = vpop.f32.mrb[0].mxu0
        %v2916 = vadd.f32 %v2804, %v2915
        %v2917 = vpop.f32.mrb[0].mxu0
        %2918 = vmatprep.mubr.bf16.mxu0 0
        %2919 = vmatmul.mubr.bf16.gmra.mrb[0].mxu0 %v2771
        %v2920 = vpop.f32.mrb[0].mxu0
        %v2921 = vadd.f32 %v2804, %v2920
        %v2922 = vpop.f32.mrb[0].mxu0
        %v2923 = vpop.f32.mrb[0].mxu0
        %v2924 = vadd.f32 %v2804, %v2923
        %v2925 = vpop.f32.mrb[0].mxu0
        %2926 = vmatprep.mubr.bf16.mxu0 0
        %2927 = vmatmul.mubr.bf16.gmra.mrb[0].mxu0 %v2772
        %v2928 = vpop.f32.mrb[0].mxu0
        %v2929 = vadd.f32 %v2804, %v2928
        %v2930 = vpop.f32.mrb[0].mxu0
        %v2931 = vpop.f32.mrb[0].mxu0
        %v2932 = vadd.f32 %v2804, %v2931
        %v2933 = vpop.f32.mrb[0].mxu0
        %2934 = vmatprep.mubr.bf16.mxu0 0
        %2935 = vmatmul.mubr.bf16.gmra.mrb[0].mxu0 %v2773
        %v2936 = vpop.f32.mrb[0].mxu0
        %v2937 = vadd.f32 %v2804, %v2936
        %v2938 = vpop.f32.mrb[0].mxu0
        %v2939 = vpop.f32.mrb[0].mxu0
        %v2940 = vadd.f32 %v2804, %v2939
        %v2941 = vpop.f32.mrb[0].mxu0
        %2942 = vmatprep.mubr.bf16.mxu0 0
        %2943 = vmatmul.mubr.bf16.gmra.mrb[0].mxu0 %v2774
        %v2944 = vpop.f32.mrb[0].mxu0
        %v2945 = vadd.f32 %v2804, %v2944
        %v2946 = vpop.f32.mrb[0].mxu0
        %v2947 = vpop.f32.mrb[0].mxu0
        %v2948 = vadd.f32 %v2804, %v2947
        %v2949 = vpop.f32.mrb[0].mxu0
        %2950 = vmatprep.mubr.bf16.mxu0 0
        %2951 = vmatmul.mubr.bf16.gmra.mrb[0].mxu0 %v2775
        %v2952 = vpop.f32.mrb[0].mxu0
        %v2953 = vadd.f32 %v2804, %v2952
        %v2954 = vpop.f32.mrb[0].mxu0
        %v2955 = vpop.f32.mrb[0].mxu0
        %v2956 = vadd.f32 %v2804, %v2955
        %v2957 = vpop.f32.mrb[0].mxu0
        %2958 = vmatprep.mubr.bf16.mxu0 0
        %2959 = vmatmul.mubr.bf16.gmra.mrb[0].mxu0 %v2776
        %v2960 = vpop.f32.mrb[0].mxu0
        %v2961 = vadd.f32 %v2804, %v2960
        %v2962 = vpop.f32.mrb[0].mxu0
        %v2963 = vpop.f32.mrb[0].mxu0
        %v2964 = vadd.f32 %v2804, %v2963
        %v2965 = vpop.f32.mrb[0].mxu0
        %2966 = vmatprep.mubr.bf16.mxu0 0
        %2967 = vmatmul.mubr.bf16.gmra.mrb[0].mxu0 %v2777
        %v2968 = vpop.f32.mrb[0].mxu0
        %v2969 = vadd.f32 %v2804, %v2968
        %v2970 = vpop.f32.mrb[0].mxu0
        %v2971 = vpop.f32.mrb[0].mxu0
        %v2972 = vadd.f32 %v2804, %v2971
        %v2973 = vpop.f32.mrb[0].mxu0
        %2974 = vmatprep.mubr.bf16.mxu0 0
        %2975 = vmatmul.mubr.bf16.gmra.mrb[0].mxu0 %v2778
        %v2976 = vpop.f32.mrb[0].mxu0
        %v2977 = vadd.f32 %v2804, %v2976
        %v2978 = vpop.f32.mrb[0].mxu0
        %v2979 = vpop.f32.mrb[0].mxu0
        %v2980 = vadd.f32 %v2804, %v2979
        %v2981 = vpop.f32.mrb[0].mxu0
        %2982 = vmatprep.mubr.bf16.mxu0 0
        %2983 = vmatmul.mubr.bf16.gmra.mrb[0].mxu0 %v2779
        %v2984 = vpop.f32.mrb[0].mxu0
        %v2985 = vadd.f32 %v2804, %v2984
        %v2986 = vpop.f32.mrb[0].mxu0
        %v2987 = vpop.f32.mrb[0].mxu0
        %v2988 = vadd.f32 %v2804, %v2987
        %v2989 = vpop.f32.mrb[0].mxu0
        %2990 = vmatprep.mubr.bf16.mxu0 0
        %2991 = vmatmul.mubr.bf16.gmra.mrb[0].mxu0 %v2780
        %v2992 = vpop.f32.mrb[0].mxu0
        %v2993 = vadd.f32 %v2804, %v2992
        %v2994 = vpop.f32.mrb[0].mxu0
        %v2995 = vpop.f32.mrb[0].mxu0
        %v2996 = vadd.f32 %v2804, %v2995
        %v2997 = vpop.f32.mrb[0].mxu0
        %2998 = vmatprep.mubr.bf16.mxu0 0
        %2999 = vmatmul.mubr.bf16.gmra.mrb[0].mxu0 %v2781
        %v3000 = vpop.f32.mrb[0].mxu0
        %v3001 = vadd.f32 %v2804, %v3000
        %v3002 = vpop.f32.mrb[0].mxu0
        %v3003 = vpop.f32.mrb[0].mxu0
        %v3004 = vadd.f32 %v2804, %v3003
        %v3005 = vpop.f32.mrb[0].mxu0
        %3006 = vmatprep.mubr.bf16.mxu0 0
        %3007 = vmatmul.mubr.bf16.gmra.mrb[0].mxu0 %v2782
        %v3008 = vpop.f32.mrb[0].mxu0
        %v3009 = vadd.f32 %v2804, %v3008
        %v3010 = vpop.f32.mrb[0].mxu0
        %v3011 = vpop.f32.mrb[0].mxu0
        %v3012 = vadd.f32 %v2804, %v3011
        %v3013 = vpop.f32.mrb[0].mxu0
        %3014 = vdwg.mxu0
        %v3015 = vlaneseq
        %v3016 = vand.u32 %v3015, 127
        %vm3017 = vcmp.lt.s32.totalorder %v3016, 2
        %v3018 = vsel %vm3017, %v2889, -1e+30
        %v3019 = vsel %vm3017, %v2892, -1e+30
        %v3020 = vsel %vm3017, %v2897, -1e+30
        %v3021 = vsel %vm3017, %v2900, -1e+30
        %v3022 = vsel %vm3017, %v2905, -1e+30
        %v3023 = vsel %vm3017, %v2908, -1e+30
        %v3024 = vsel %vm3017, %v2913, -1e+30
        %v3025 = vsel %vm3017, %v2916, -1e+30
        %v3026 = vsel %vm3017, %v2921, -1e+30
        %v3027 = vsel %vm3017, %v2924, -1e+30
        %v3028 = vsel %vm3017, %v2929, -1e+30
        %v3029 = vsel %vm3017, %v2932, -1e+30
        %v3030 = vsel %vm3017, %v2937, -1e+30
        %v3031 = vsel %vm3017, %v2940, -1e+30
        %v3032 = vsel %vm3017, %v2945, -1e+30
        %v3033 = vsel %vm3017, %v2948, -1e+30
        %v3034 = vsel %vm3017, %v2953, -1e+30
        %v3035 = vsel %vm3017, %v2956, -1e+30
        %v3036 = vsel %vm3017, %v2961, -1e+30
        %v3037 = vsel %vm3017, %v2964, -1e+30
        %v3038 = vsel %vm3017, %v2969, -1e+30
        %v3039 = vsel %vm3017, %v2972, -1e+30
        %v3040 = vsel %vm3017, %v2977, -1e+30
        %v3041 = vsel %vm3017, %v2980, -1e+30
        %v3042 = vsel %vm3017, %v2985, -1e+30
        %v3043 = vsel %vm3017, %v2988, -1e+30
        %v3044 = vsel %vm3017, %v2993, -1e+30
        %v3045 = vsel %vm3017, %v2996, -1e+30
        %v3046 = vsel %vm3017, %v3001, -1e+30
        %v3047 = vsel %vm3017, %v3004, -1e+30
        %v3048 = vsel %vm3017, %v3009, -1e+30
        %v3049 = vsel %vm3017, %v3012, -1e+30
        %3050 = vmax.xlane.f32.xlu0 %v3018
        %v3051 = vpop.xlane.xlu0 %3050
        %3052 = vmax.xlane.f32.xlu0 %v3019
        %v3053 = vpop.xlane.xlu0 %3052
        %3054 = vmax.xlane.f32.xlu0 %v3020
        %v3055 = vpop.xlane.xlu0 %3054
        %3056 = vmax.xlane.f32.xlu0 %v3021
        %v3057 = vpop.xlane.xlu0 %3056
        %3058 = vmax.xlane.f32.xlu0 %v3022
        %v3059 = vpop.xlane.xlu0 %3058
        %3060 = vmax.xlane.f32.xlu0 %v3023
        %v3061 = vpop.xlane.xlu0 %3060
        %3062 = vmax.xlane.f32.xlu0 %v3024
        %v3063 = vpop.xlane.xlu0 %3062
        %3064 = vmax.xlane.f32.xlu0 %v3025
        %v3065 = vpop.xlane.xlu0 %3064
        %3066 = vmax.xlane.f32.xlu0 %v3026
        %v3067 = vpop.xlane.xlu0 %3066
        %3068 = vmax.xlane.f32.xlu0 %v3027
        %v3069 = vpop.xlane.xlu0 %3068
        %3070 = vmax.xlane.f32.xlu0 %v3028
        %v3071 = vpop.xlane.xlu0 %3070
        %3072 = vmax.xlane.f32.xlu0 %v3029
        %v3073 = vpop.xlane.xlu0 %3072
        %3074 = vmax.xlane.f32.xlu0 %v3030
        %v3075 = vpop.xlane.xlu0 %3074
        %3076 = vmax.xlane.f32.xlu0 %v3031
        %v3077 = vpop.xlane.xlu0 %3076
        %3078 = vmax.xlane.f32.xlu0 %v3032
        %v3079 = vpop.xlane.xlu0 %3078
        %3080 = vmax.xlane.f32.xlu0 %v3033
        %v3081 = vpop.xlane.xlu0 %3080
        %3082 = vmax.xlane.f32.xlu0 %v3034
        %v3083 = vpop.xlane.xlu0 %3082
        %3084 = vmax.xlane.f32.xlu0 %v3035
        %v3085 = vpop.xlane.xlu0 %3084
        %3086 = vmax.xlane.f32.xlu0 %v3036
        %v3087 = vpop.xlane.xlu0 %3086
        %3088 = vmax.xlane.f32.xlu0 %v3037
        %v3089 = vpop.xlane.xlu0 %3088
        %3090 = vmax.xlane.f32.xlu0 %v3038
        %v3091 = vpop.xlane.xlu0 %3090
        %3092 = vmax.xlane.f32.xlu0 %v3039
        %v3093 = vpop.xlane.xlu0 %3092
        %3094 = vmax.xlane.f32.xlu0 %v3040
        %v3095 = vpop.xlane.xlu0 %3094
        %3096 = vmax.xlane.f32.xlu0 %v3041
        %v3097 = vpop.xlane.xlu0 %3096
        %3098 = vmax.xlane.f32.xlu0 %v3042
        %v3099 = vpop.xlane.xlu0 %3098
        %3100 = vmax.xlane.f32.xlu0 %v3043
        %v3101 = vpop.xlane.xlu0 %3100
        %3102 = vmax.xlane.f32.xlu0 %v3044
        %v3103 = vpop.xlane.xlu0 %3102
        %3104 = vmax.xlane.f32.xlu0 %v3045
        %v3105 = vpop.xlane.xlu0 %3104
        %3106 = vmax.xlane.f32.xlu0 %v3046
        %v3107 = vpop.xlane.xlu0 %3106
        %3108 = vmax.xlane.f32.xlu0 %v3047
        %v3109 = vpop.xlane.xlu0 %3108
        %3110 = vmax.xlane.f32.xlu0 %v3048
        %v3111 = vpop.xlane.xlu0 %3110
        %3112 = vmax.xlane.f32.xlu0 %v3049
        %v3113 = vpop.xlane.xlu0 %3112
        %v3114 = vsub.f32 %v3018, %v3051
        %v3115 = vsub.f32 %v3019, %v3053
        %v3116 = vsub.f32 %v3020, %v3055
        %v3117 = vsub.f32 %v3021, %v3057
        %v3118 = vsub.f32 %v3022, %v3059
        %v3119 = vsub.f32 %v3023, %v3061
        %v3120 = vsub.f32 %v3024, %v3063
        %v3121 = vsub.f32 %v3025, %v3065
        %v3122 = vsub.f32 %v3026, %v3067
        %v3123 = vsub.f32 %v3027, %v3069
        %v3124 = vsub.f32 %v3028, %v3071
        %v3125 = vsub.f32 %v3029, %v3073
        %v3126 = vsub.f32 %v3030, %v3075
        %v3127 = vsub.f32 %v3031, %v3077
        %v3128 = vsub.f32 %v3032, %v3079
        %v3129 = vsub.f32 %v3033, %v3081
        %v3130 = vsub.f32 %v3034, %v3083
        %v3131 = vsub.f32 %v3035, %v3085
        %v3132 = vsub.f32 %v3036, %v3087
        %v3133 = vsub.f32 %v3037, %v3089
        %v3134 = vsub.f32 %v3038, %v3091
        %v3135 = vsub.f32 %v3039, %v3093
        %v3136 = vsub.f32 %v3040, %v3095
        %v3137 = vsub.f32 %v3041, %v3097
        %v3138 = vsub.f32 %v3042, %v3099
        %v3139 = vsub.f32 %v3043, %v3101
        %v3140 = vsub.f32 %v3044, %v3103
        %v3141 = vsub.f32 %v3045, %v3105
        %v3142 = vsub.f32 %v3046, %v3107
        %v3143 = vsub.f32 %v3047, %v3109
        %v3144 = vsub.f32 %v3048, %v3111
        %v3145 = vsub.f32 %v3049, %v3113
        %v3146 = vmul.f32 %v3114, 1.442695
        %v3147 = vpow.pop %v3146
        %v3148 = vmul.f32 %v3115, 1.442695
        %v3149 = vpow.pop %v3148
        %v3150 = vmul.f32 %v3116, 1.442695
        %v3151 = vpow.pop %v3150
        %v3152 = vmul.f32 %v3117, 1.442695
        %v3153 = vpow.pop %v3152
        %v3154 = vmul.f32 %v3118, 1.442695
        %v3155 = vpow.pop %v3154
        %v3156 = vmul.f32 %v3119, 1.442695
        %v3157 = vpow.pop %v3156
        %v3158 = vmul.f32 %v3120, 1.442695
        %v3159 = vpow.pop %v3158
        %v3160 = vmul.f32 %v3121, 1.442695
        %v3161 = vpow.pop %v3160
        %v3162 = vmul.f32 %v3122, 1.442695
        %v3163 = vpow.pop %v3162
        %v3164 = vmul.f32 %v3123, 1.442695
        %v3165 = vpow.pop %v3164
        %v3166 = vmul.f32 %v3124, 1.442695
        %v3167 = vpow.pop %v3166
        %v3168 = vmul.f32 %v3125, 1.442695
        %v3169 = vpow.pop %v3168
        %v3170 = vmul.f32 %v3126, 1.442695
        %v3171 = vpow.pop %v3170
        %v3172 = vmul.f32 %v3127, 1.442695
        %v3173 = vpow.pop %v3172
        %v3174 = vmul.f32 %v3128, 1.442695
        %v3175 = vpow.pop %v3174
        %v3176 = vmul.f32 %v3129, 1.442695
        %v3177 = vpow.pop %v3176
        %v3178 = vmul.f32 %v3130, 1.442695
        %v3179 = vpow.pop %v3178
        %v3180 = vmul.f32 %v3131, 1.442695
        %v3181 = vpow.pop %v3180
        %v3182 = vmul.f32 %v3132, 1.442695
        %v3183 = vpow.pop %v3182
        %v3184 = vmul.f32 %v3133, 1.442695
        %v3185 = vpow.pop %v3184
        %v3186 = vmul.f32 %v3134, 1.442695
        %v3187 = vpow.pop %v3186
        %v3188 = vmul.f32 %v3135, 1.442695
        %v3189 = vpow.pop %v3188
        %v3190 = vmul.f32 %v3136, 1.442695
        %v3191 = vpow.pop %v3190
        %v3192 = vmul.f32 %v3137, 1.442695
        %v3193 = vpow.pop %v3192
        %v3194 = vmul.f32 %v3138, 1.442695
        %v3195 = vpow.pop %v3194
        %v3196 = vmul.f32 %v3139, 1.442695
        %v3197 = vpow.pop %v3196
        %v3198 = vmul.f32 %v3140, 1.442695
        %v3199 = vpow.pop %v3198
        %v3200 = vmul.f32 %v3141, 1.442695
        %v3201 = vpow.pop %v3200
        %v3202 = vmul.f32 %v3142, 1.442695
        %v3203 = vpow.pop %v3202
        %v3204 = vmul.f32 %v3143, 1.442695
        %v3205 = vpow.pop %v3204
        %v3206 = vmul.f32 %v3144, 1.442695
        %v3207 = vpow.pop %v3206
        %v3208 = vmul.f32 %v3145, 1.442695
        %v3209 = vpow.pop %v3208
        %v3210 = vsel %vm3017, %v3147, 0.0
        %v3211 = vsel %vm3017, %v3149, 0.0
        %v3212 = vsel %vm3017, %v3151, 0.0
        %v3213 = vsel %vm3017, %v3153, 0.0
        %v3214 = vsel %vm3017, %v3155, 0.0
        %v3215 = vsel %vm3017, %v3157, 0.0
        %v3216 = vsel %vm3017, %v3159, 0.0
        %v3217 = vsel %vm3017, %v3161, 0.0
        %v3218 = vsel %vm3017, %v3163, 0.0
        %v3219 = vsel %vm3017, %v3165, 0.0
        %v3220 = vsel %vm3017, %v3167, 0.0
        %v3221 = vsel %vm3017, %v3169, 0.0
        %v3222 = vsel %vm3017, %v3171, 0.0
        %v3223 = vsel %vm3017, %v3173, 0.0
        %v3224 = vsel %vm3017, %v3175, 0.0
        %v3225 = vsel %vm3017, %v3177, 0.0
        %v3226 = vsel %vm3017, %v3179, 0.0
        %v3227 = vsel %vm3017, %v3181, 0.0
        %v3228 = vsel %vm3017, %v3183, 0.0
        %v3229 = vsel %vm3017, %v3185, 0.0
        %v3230 = vsel %vm3017, %v3187, 0.0
        %v3231 = vsel %vm3017, %v3189, 0.0
        %v3232 = vsel %vm3017, %v3191, 0.0
        %v3233 = vsel %vm3017, %v3193, 0.0
        %v3234 = vsel %vm3017, %v3195, 0.0
        %v3235 = vsel %vm3017, %v3197, 0.0
        %v3236 = vsel %vm3017, %v3199, 0.0
        %v3237 = vsel %vm3017, %v3201, 0.0
        %v3238 = vsel %vm3017, %v3203, 0.0
        %v3239 = vsel %vm3017, %v3205, 0.0
        %v3240 = vsel %vm3017, %v3207, 0.0
        %v3241 = vsel %vm3017, %v3209, 0.0
        %3242 = vadd.xlane.f32.xlu0 %v3210
        %v3243 = vpop.xlane.xlu0 %3242
        %3244 = vadd.xlane.f32.xlu0 %v3211
        %v3245 = vpop.xlane.xlu0 %3244
        %3246 = vadd.xlane.f32.xlu0 %v3212
        %v3247 = vpop.xlane.xlu0 %3246
        %3248 = vadd.xlane.f32.xlu0 %v3213
        %v3249 = vpop.xlane.xlu0 %3248
        %3250 = vadd.xlane.f32.xlu0 %v3214
        %v3251 = vpop.xlane.xlu0 %3250
        %3252 = vadd.xlane.f32.xlu0 %v3215
        %v3253 = vpop.xlane.xlu0 %3252
        %3254 = vadd.xlane.f32.xlu0 %v3216
        %v3255 = vpop.xlane.xlu0 %3254
        %3256 = vadd.xlane.f32.xlu0 %v3217
        %v3257 = vpop.xlane.xlu0 %3256
        %3258 = vadd.xlane.f32.xlu0 %v3218
        %v3259 = vpop.xlane.xlu0 %3258
        %3260 = vadd.xlane.f32.xlu0 %v3219
        %v3261 = vpop.xlane.xlu0 %3260
        %3262 = vadd.xlane.f32.xlu0 %v3220
        %v3263 = vpop.xlane.xlu0 %3262
        %3264 = vadd.xlane.f32.xlu0 %v3221
        %v3265 = vpop.xlane.xlu0 %3264
        %3266 = vadd.xlane.f32.xlu0 %v3222
        %v3267 = vpop.xlane.xlu0 %3266
        %3268 = vadd.xlane.f32.xlu0 %v3223
        %v3269 = vpop.xlane.xlu0 %3268
        %3270 = vadd.xlane.f32.xlu0 %v3224
        %v3271 = vpop.xlane.xlu0 %3270
        %3272 = vadd.xlane.f32.xlu0 %v3225
        %v3273 = vpop.xlane.xlu0 %3272
        %3274 = vadd.xlane.f32.xlu0 %v3226
        %v3275 = vpop.xlane.xlu0 %3274
        %3276 = vadd.xlane.f32.xlu0 %v3227
        %v3277 = vpop.xlane.xlu0 %3276
        %3278 = vadd.xlane.f32.xlu0 %v3228
        %v3279 = vpop.xlane.xlu0 %3278
        %3280 = vadd.xlane.f32.xlu0 %v3229
        %v3281 = vpop.xlane.xlu0 %3280
        %3282 = vadd.xlane.f32.xlu0 %v3230
        %v3283 = vpop.xlane.xlu0 %3282
        %3284 = vadd.xlane.f32.xlu0 %v3231
        %v3285 = vpop.xlane.xlu0 %3284
        %3286 = vadd.xlane.f32.xlu0 %v3232
        %v3287 = vpop.xlane.xlu0 %3286
        %3288 = vadd.xlane.f32.xlu0 %v3233
        %v3289 = vpop.xlane.xlu0 %3288
        %3290 = vadd.xlane.f32.xlu0 %v3234
        %v3291 = vpop.xlane.xlu0 %3290
        %3292 = vadd.xlane.f32.xlu0 %v3235
        %v3293 = vpop.xlane.xlu0 %3292
        %3294 = vadd.xlane.f32.xlu0 %v3236
        %v3295 = vpop.xlane.xlu0 %3294
        %3296 = vadd.xlane.f32.xlu0 %v3237
        %v3297 = vpop.xlane.xlu0 %3296
        %3298 = vadd.xlane.f32.xlu0 %v3238
        %v3299 = vpop.xlane.xlu0 %3298
        %3300 = vadd.xlane.f32.xlu0 %v3239
        %v3301 = vpop.xlane.xlu0 %3300
        %3302 = vadd.xlane.f32.xlu0 %v3240
        %v3303 = vpop.xlane.xlu0 %3302
        %3304 = vadd.xlane.f32.xlu0 %v3241
        %v3305 = vpop.xlane.xlu0 %3304
        %v3306 = vlog2.pop %v3243
        %v3307 = vmul.f32 %v3306, 0.6931472
        %v3308 = vlog2.pop %v3245
        %v3309 = vmul.f32 %v3308, 0.6931472
        %v3310 = vlog2.pop %v3247
        %v3311 = vmul.f32 %v3310, 0.6931472
        %v3312 = vlog2.pop %v3249
        %v3313 = vmul.f32 %v3312, 0.6931472
        %v3314 = vlog2.pop %v3251
        %v3315 = vmul.f32 %v3314, 0.6931472
        %v3316 = vlog2.pop %v3253
        %v3317 = vmul.f32 %v3316, 0.6931472
        %v3318 = vlog2.pop %v3255
        %v3319 = vmul.f32 %v3318, 0.6931472
        %v3320 = vlog2.pop %v3257
        %v3321 = vmul.f32 %v3320, 0.6931472
        %v3322 = vlog2.pop %v3259
        %v3323 = vmul.f32 %v3322, 0.6931472
        %v3324 = vlog2.pop %v3261
        %v3325 = vmul.f32 %v3324, 0.6931472
        %v3326 = vlog2.pop %v3263
        %v3327 = vmul.f32 %v3326, 0.6931472
        %v3328 = vlog2.pop %v3265
        %v3329 = vmul.f32 %v3328, 0.6931472
        %v3330 = vlog2.pop %v3267
        %v3331 = vmul.f32 %v3330, 0.6931472
        %v3332 = vlog2.pop %v3269
        %v3333 = vmul.f32 %v3332, 0.6931472
        %v3334 = vlog2.pop %v3271
        %v3335 = vmul.f32 %v3334, 0.6931472
        %v3336 = vlog2.pop %v3273
        %v3337 = vmul.f32 %v3336, 0.6931472
        %v3338 = vlog2.pop %v3275
        %v3339 = vmul.f32 %v3338, 0.6931472
        %v3340 = vlog2.pop %v3277
        %v3341 = vmul.f32 %v3340, 0.6931472
        %v3342 = vlog2.pop %v3279
        %v3343 = vmul.f32 %v3342, 0.6931472
        %v3344 = vlog2.pop %v3281
        %v3345 = vmul.f32 %v3344, 0.6931472
        %v3346 = vlog2.pop %v3283
        %v3347 = vmul.f32 %v3346, 0.6931472
        %v3348 = vlog2.pop %v3285
        %v3349 = vmul.f32 %v3348, 0.6931472
        %v3350 = vlog2.pop %v3287
        %v3351 = vmul.f32 %v3350, 0.6931472
        %v3352 = vlog2.pop %v3289
        %v3353 = vmul.f32 %v3352, 0.6931472
        %v3354 = vlog2.pop %v3291
        %v3355 = vmul.f32 %v3354, 0.6931472
        %v3356 = vlog2.pop %v3293
        %v3357 = vmul.f32 %v3356, 0.6931472
        %v3358 = vlog2.pop %v3295
        %v3359 = vmul.f32 %v3358, 0.6931472
        %v3360 = vlog2.pop %v3297
        %v3361 = vmul.f32 %v3360, 0.6931472
        %v3362 = vlog2.pop %v3299
        %v3363 = vmul.f32 %v3362, 0.6931472
        %v3364 = vlog2.pop %v3301
        %v3365 = vmul.f32 %v3364, 0.6931472
        %v3366 = vlog2.pop %v3303
        %v3367 = vmul.f32 %v3366, 0.6931472
        %v3368 = vlog2.pop %v3305
        %v3369 = vmul.f32 %v3368, 0.6931472
        %v3370 = vadd.f32 %v3051, %v3307
        %v3371 = vadd.f32 %v3053, %v3309
        %v3372 = vadd.f32 %v3055, %v3311
        %v3373 = vadd.f32 %v3057, %v3313
        %v3374 = vadd.f32 %v3059, %v3315
        %v3375 = vadd.f32 %v3061, %v3317
        %v3376 = vadd.f32 %v3063, %v3319
        %v3377 = vadd.f32 %v3065, %v3321
        %v3378 = vadd.f32 %v3067, %v3323
        %v3379 = vadd.f32 %v3069, %v3325
        %v3380 = vadd.f32 %v3071, %v3327
        %v3381 = vadd.f32 %v3073, %v3329
        %v3382 = vadd.f32 %v3075, %v3331
        %v3383 = vadd.f32 %v3077, %v3333
        %v3384 = vadd.f32 %v3079, %v3335
        %v3385 = vadd.f32 %v3081, %v3337
        %v3386 = vadd.f32 %v3083, %v3339
        %v3387 = vadd.f32 %v3085, %v3341
        %v3388 = vadd.f32 %v3087, %v3343
        %v3389 = vadd.f32 %v3089, %v3345
        %v3390 = vadd.f32 %v3091, %v3347
        %v3391 = vadd.f32 %v3093, %v3349
        %v3392 = vadd.f32 %v3095, %v3351
        %v3393 = vadd.f32 %v3097, %v3353
        %v3394 = vadd.f32 %v3099, %v3355
        %v3395 = vadd.f32 %v3101, %v3357
        %v3396 = vadd.f32 %v3103, %v3359
        %v3397 = vadd.f32 %v3105, %v3361
        %v3398 = vadd.f32 %v3107, %v3363
        %v3399 = vadd.f32 %v3109, %v3365
        %v3400 = vadd.f32 %v3111, %v3367
        %v3401 = vadd.f32 %v3113, %v3369
        %v3402 = vsub.f32 %v3018, %v3370
        %v3403 = vsub.f32 %v3019, %v3371
        %v3404 = vsub.f32 %v3020, %v3372
        %v3405 = vsub.f32 %v3021, %v3373
        %v3406 = vsub.f32 %v3022, %v3374
        %v3407 = vsub.f32 %v3023, %v3375
        %v3408 = vsub.f32 %v3024, %v3376
        %v3409 = vsub.f32 %v3025, %v3377
        %v3410 = vsub.f32 %v3026, %v3378
        %v3411 = vsub.f32 %v3027, %v3379
        %v3412 = vsub.f32 %v3028, %v3380
        %v3413 = vsub.f32 %v3029, %v3381
        %v3414 = vsub.f32 %v3030, %v3382
        %v3415 = vsub.f32 %v3031, %v3383
        %v3416 = vsub.f32 %v3032, %v3384
        %v3417 = vsub.f32 %v3033, %v3385
        %v3418 = vsub.f32 %v3034, %v3386
        %v3419 = vsub.f32 %v3035, %v3387
        %v3420 = vsub.f32 %v3036, %v3388
        %v3421 = vsub.f32 %v3037, %v3389
        %v3422 = vsub.f32 %v3038, %v3390
        %v3423 = vsub.f32 %v3039, %v3391
        %v3424 = vsub.f32 %v3040, %v3392
        %v3425 = vsub.f32 %v3041, %v3393
        %v3426 = vsub.f32 %v3042, %v3394
        %v3427 = vsub.f32 %v3043, %v3395
        %v3428 = vsub.f32 %v3044, %v3396
        %v3429 = vsub.f32 %v3045, %v3397
        %v3430 = vsub.f32 %v3046, %v3398
        %v3431 = vsub.f32 %v3047, %v3399
        %v3432 = vsub.f32 %v3048, %v3400
        %v3433 = vsub.f32 %v3049, %v3401
        %vm3434 = vcmask 15360
        %3435 = vst.msk [vmem:[%s522] sm:$0xff] %vm3434, %v3402
        %3436 = vst.msk [vmem:[%s522 + $0x8] sm:$0xff] %vm3434, %v3403
        %3437 = vst.msk [vmem:[%s522 + $0x10] sm:$0xff] %vm3434, %v3404
        %3438 = vst.msk [vmem:[%s522 + $0x18] sm:$0xff] %vm3434, %v3405
        %3439 = vst.msk [vmem:[%s522 + $0x20] sm:$0xff] %vm3434, %v3406
        %3440 = vst.msk [vmem:[%s522 + $0x28] sm:$0xff] %vm3434, %v3407
        %3441 = vst.msk [vmem:[%s522 + $0x30] sm:$0xff] %vm3434, %v3408
        %3442 = vst.msk [vmem:[%s522 + $0x38] sm:$0xff] %vm3434, %v3409
        %3443 = vst.msk [vmem:[%s522 + $0x40] sm:$0xff] %vm3434, %v3410
        %3444 = vst.msk [vmem:[%s522 + $0x48] sm:$0xff] %vm3434, %v3411
        %3445 = vst.msk [vmem:[%s522 + $0x50] sm:$0xff] %vm3434, %v3412
        %3446 = vst.msk [vmem:[%s522 + $0x58] sm:$0xff] %vm3434, %v3413
        %3447 = vst.msk [vmem:[%s522 + $0x60] sm:$0xff] %vm3434, %v3414
        %3448 = vst.msk [vmem:[%s522 + $0x68] sm:$0xff] %vm3434, %v3415
        %3449 = vst.msk [vmem:[%s522 + $0x70] sm:$0xff] %vm3434, %v3416
        %3450 = vst.msk [vmem:[%s522 + $0x78] sm:$0xff] %vm3434, %v3417
        %3451 = vst.msk [vmem:[%s522 + $0x80] sm:$0xff] %vm3434, %v3418
        %3452 = vst.msk [vmem:[%s522 + $0x88] sm:$0xff] %vm3434, %v3419
        %3453 = vst.msk [vmem:[%s522 + $0x90] sm:$0xff] %vm3434, %v3420
        %3454 = vst.msk [vmem:[%s522 + $0x98] sm:$0xff] %vm3434, %v3421
        %3455 = vst.msk [vmem:[%s522 + $0xa0] sm:$0xff] %vm3434, %v3422
        %3456 = vst.msk [vmem:[%s522 + $0xa8] sm:$0xff] %vm3434, %v3423
        %3457 = vst.msk [vmem:[%s522 + $0xb0] sm:$0xff] %vm3434, %v3424
        %3458 = vst.msk [vmem:[%s522 + $0xb8] sm:$0xff] %vm3434, %v3425
        %3459 = vst.msk [vmem:[%s522 + $0xc0] sm:$0xff] %vm3434, %v3426
        %3460 = vst.msk [vmem:[%s522 + $0xc8] sm:$0xff] %vm3434, %v3427
        %3461 = vst.msk [vmem:[%s522 + $0xd0] sm:$0xff] %vm3434, %v3428
        %3462 = vst.msk [vmem:[%s522 + $0xd8] sm:$0xff] %vm3434, %v3429
        %3463 = vst.msk [vmem:[%s522 + $0xe0] sm:$0xff] %vm3434, %v3430
        %3464 = vst.msk [vmem:[%s522 + $0xe8] sm:$0xff] %vm3434, %v3431
        %3465 = vst.msk [vmem:[%s522 + $0xf0] sm:$0xff] %vm3434, %v3432
        %3466 = vst.msk [vmem:[%s522 + $0xf8] sm:$0xff] %vm3434, %v3433
      $region80: #{tpu_custom_call.1} parent=67 // pred_fallthru
        _
      %s3467 = smul.u32 32, %s39
      %p3468 = scmp.lt.s32.totalorder %s3467, 63
      %s3469 = scalar_select %p3468, %s3467, 63
      %s3470 = smul.addr %s3469, 8
      %s3471 = scalar_lea.vmem %s14, %s3470
      // Predicated region
      $region81: #{tpu_custom_call.1} parent=67 // pred_check
        %p3472 = pneg %p344
      $region82: #{tpu_custom_call.1} parent=67 // pred_check_branch
        %3474 = sbr.rel (%p3472) target = $region84
      $region83: #{tpu_custom_call.1} parent=67 // pred_region
        %s3475 = smul.u32 32, %s39
      $region84: #{tpu_custom_call.1} parent=67 // pred_fallthru
        _
    $region68: #{tpu_custom_call.1} parent=5 // pred_fallthru
      _
    %p3476 = scmp.le.s32.totalorder 2, %s30
    // Predicated region
    $region85: #{tpu_custom_call.1} parent=5 // pred_check
      %p3477 = pneg %p3476
    $region86: #{tpu_custom_call.1} parent=5 // pred_check_branch
      %3479 = sbr.rel (%p3477) target = $region88
    $region87: #{tpu_custom_call.1} parent=5 // pred_region
      %s3480 = ssub.s32 %s30, 2
      // Predicated region
      $region89: #{tpu_custom_call.1} parent=87 // pred_check
        %p3481 = pneg %p350
      $region90: #{tpu_custom_call.1} parent=87 // pred_check_branch
        %3483 = sbr.rel (%p3481) target = $region92
      $region91: #{tpu_custom_call.1} parent=87 // pred_region
        %s3484 = smul.u32 32, %s41
        %p3485 = scmp.lt.s32.totalorder %s3484, 63
        %s3486 = scalar_select %p3485, %s3484, 63
        %s3487 = smul.addr %s3486, 8
        %s3488 = scalar_lea.vmem %s14, %s3487
      $region92: #{tpu_custom_call.1} parent=87 // pred_fallthru
        _
    $region88: #{tpu_custom_call.1} parent=5 // pred_fallthru
      _
  $region6: #{tpu_custom_call.1} parent=0 // loop_footer
    %s34 = sadd.s32 1, %s30
  $region7: #{tpu_custom_call.1} parent=0 // loop_footer_branch
    %29 = sbr.rel target = $region3
  $region8: #{tpu_custom_call.1} parent=0 // loop_exit
    _

</llo_original>
